<compile_context>
chip_gen: v7x
topology: tpu7x:2x2x1
jax: 0.10.0
libtpu: 0.0.40
codegen_flags: <defaults>
</compile_context>

<pallas_src>
import functools
import math

import jax
import jax.numpy as jnp
from jax import lax
from jax.experimental import pallas as pl
from jax.experimental.pallas import tpu as pltpu


# ----------------------------------------------------------------------------
# Kernels
# ----------------------------------------------------------------------------
def _embed_kernel_resident(idx_ref, table_ref, o_ref, *, scale, fold_scale):
    """One grid step embeds TM tokens against the full VMEM-resident table.

    idx_ref   : (TM, 1) int32   token ids for this tile
    table_ref : (V, D)  float   full embedding table (resident, single-buffered)
    o_ref     : (TM, D) float   scaled embeddings
    """
    idx = idx_ref[...]                                        # (TM, 1) int32
    tm = idx.shape[0]
    vocab = table_ref.shape[0]

    col = lax.broadcasted_iota(jnp.int32, (tm, vocab), 1)
    hit = col == idx                                          # (TM, V) bool

    if fold_scale:
        # f32 table: sqrt(D) folded into the one-hot weight (exact in f32),
        # no epilogue multiply needed.
        one_hot = jnp.where(hit, jnp.float32(scale), jnp.float32(0.0))
    else:
        one_hot = hit.astype(table_ref.dtype)

    out = jnp.dot(one_hot, table_ref[...],
                  preferred_element_type=jnp.float32,
                  precision=lax.Precision.HIGHEST)            # (TM, D) f32
    if not fold_scale:
        out = out * jnp.float32(scale)
    o_ref[...] = out.astype(o_ref.dtype)


def _embed_kernel_vtiled(idx_ref, table_ref, o_ref, acc_ref, *,
                         scale, fold_scale, tv):
    """Large-vocab variant: the table is streamed in (TV, D) tiles along an
    'arbitrary' reduction axis; partial one-hot matmuls accumulate in f32."""
    vj = pl.program_id(1)

    @pl.when(vj == 0)
    def _():
        acc_ref[...] = jnp.zeros_like(acc_ref)

    idx = idx_ref[...]                                        # (TM, 1) int32
    tm = idx.shape[0]
    col = lax.broadcasted_iota(jnp.int32, (tm, tv), 1) + vj * tv
    hit = col == idx                                          # (TM, TV) bool

    if fold_scale:
        one_hot = jnp.where(hit, jnp.float32(scale), jnp.float32(0.0))
    else:
        one_hot = hit.astype(table_ref.dtype)

    acc_ref[...] += jnp.dot(one_hot, table_ref[...],
                            preferred_element_type=jnp.float32,
                            precision=lax.Precision.HIGHEST)

    @pl.when(vj == pl.num_programs(1) - 1)
    def _():
        out = acc_ref[...]
        if not fold_scale:
            out = out * jnp.float32(scale)
        o_ref[...] = out.astype(o_ref.dtype)


# ----------------------------------------------------------------------------
# Wrapper
# ----------------------------------------------------------------------------
def _round_up(x, m):
    return ((x + m - 1) // m) * m


def _vmem_capacity_bytes():
    try:
        cap = getattr(pltpu.get_tpu_info(), "vmem_capacity_bytes", None)
        if cap:
            return int(cap)
    except Exception:
        pass
    return 64 * 1024 * 1024   # conservative default: v7x per-TC physical VMEM


def strain_embedding(x_idx, table, *, tile_m=512, tile_v=None,
                     out_dtype=None, max_table_vmem_bytes=None):
    """x_idx: (B, S) int  ->  (B, S, D) = table[x_idx] * sqrt(D)."""
    B, S = x_idx.shape
    V, D = table.shape
    M = B * S

    tab_dtype = jnp.dtype(table.dtype)
    out_dtype = tab_dtype if out_dtype is None else jnp.dtype(out_dtype)
    dt_tab = tab_dtype.itemsize
    dt_out = out_dtype.itemsize

    scale = math.sqrt(float(D))
    fold_scale = tab_dtype == jnp.dtype(jnp.float32)   # exact only in f32

    # --- VMEM budget (v7x: 64 MiB physical; v5e/v6e: 128 MiB) ---------------
    vmem_cap = _vmem_capacity_bytes()
    vmem_limit = int(0.90 * vmem_cap)    # scoped limit handed to Mosaic
    block_budget = int(0.70 * vmem_cap)  # what our blocks may use (headroom)

    # --- row tile: big (HBM-writeback bound), but keep >= 2 grid steps so
    # both v7x TensorCores get work, and multiple-of-8 sublanes when tiled.
    tm_cap = M if M <= 8 else max(8, _round_up(pl.cdiv(M, 2), 8))
    tm = min(tile_m, tm_cap, M)
    if tm < M:
        tm = max(8, (tm // 8) * 8)

    idx2d = x_idx.reshape(M, 1).astype(jnp.int32)
    table_bytes = V * D * dt_tab
    if max_table_vmem_bytes is None:
        max_table_vmem_bytes = block_budget // 2
    resident = table_bytes <= max_table_vmem_bytes

    cost = pl.CostEstimate(
        flops=2 * M * V * D,
        transcendentals=0,
        bytes_accessed=4 * M + V * D * dt_tab + M * D * dt_out,
    )

    if resident:
        # ---------------- resident-table path --------------------------------
        def fits(t):
            return (table_bytes                        # table, single-buffered
                    + 2 * t * D * dt_out               # double-buffered output
                    + t * D * 4                        # f32 matmul result
                    + t * _round_up(V, 128) * dt_tab   # one-hot temporary
                    + 2 * t * 128 * 4                  # idx buffers (lane-padded)
                    ) <= block_budget

        while tm > 8 and not fits(tm):
            tm = max(8, ((tm // 2) // 8) * 8)

        grid = (pl.cdiv(M, tm),)

        def build(single_buffer_table):
            tab_kwargs = ({"pipeline_mode": pl.Buffered(1)}
                          if single_buffer_table else {})
            return pl.pallas_call(
                functools.partial(_embed_kernel_resident,
                                  scale=scale, fold_scale=fold_scale),
                out_shape=jax.ShapeDtypeStruct((M, D), out_dtype),
                grid=grid,
                in_specs=[
                    pl.BlockSpec((tm, 1), lambda i: (i, 0)),
                    # constant index_map -> loaded once, stays VMEM-resident
                    pl.BlockSpec((V, D), lambda i: (0, 0), **tab_kwargs),
                ],
                out_specs=pl.BlockSpec((tm, D), lambda i: (i, 0)),
                compiler_params=pltpu.CompilerParams(
                    dimension_semantics=("parallel",),
                    vmem_limit_bytes=vmem_limit,
                ),
                cost_estimate=cost,
            )

        try:
            out2d = jax.block_until_ready(build(True)(idx2d, table))
        except Exception:
            # pl.Buffered(1) not accepted on this jax version -> default buffers
            out2d = jax.block_until_ready(build(False)(idx2d, table))
    else:
        # ---------------- streamed-table (V-tiled) path -----------------------
        tv = V if (tile_v is None and V <= 512) else min(tile_v or 512, V)
        if tv < V:
            tv = max(8, (tv // 8) * 8)

        def fits(t, tv_):
            return (2 * tv_ * D * dt_tab               # double-buffered table tile
                    + 2 * t * D * dt_out               # double-buffered output
                    + t * D * 4                        # f32 accumulator scratch
                    + t * _round_up(tv_, 128) * dt_tab # one-hot temporary
                    + 2 * t * 128 * 4) <= block_budget

        while tm > 8 and not fits(tm, tv):
            tm = max(8, ((tm // 2) // 8) * 8)
        while tv > 8 and not fits(tm, tv):
            tv = max(8, ((tv // 2) // 8) * 8)

        # Zero-pad the table tail so padded rows are finite (never selected:
        # token ids are < V, and 0-weight * garbage would otherwise NaN).
        v_pad = _round_up(V, tv)
        table_in = table if v_pad == V else jnp.pad(table, ((0, v_pad - V), (0, 0)))

        grid = (pl.cdiv(M, tm), v_pad // tv)
        out2d = pl.pallas_call(
            functools.partial(_embed_kernel_vtiled,
                              scale=scale, fold_scale=fold_scale, tv=tv),
            out_shape=jax.ShapeDtypeStruct((M, D), out_dtype),
            grid=grid,
            in_specs=[
                pl.BlockSpec((tm, 1), lambda i, j: (i, 0)),
                pl.BlockSpec((tv, D), lambda i, j: (j, 0)),
            ],
            out_specs=pl.BlockSpec((tm, D), lambda i, j: (i, 0)),
            scratch_shapes=[pltpu.VMEM((tm, D), jnp.float32)],
            compiler_params=pltpu.CompilerParams(
                dimension_semantics=("parallel", "arbitrary"),
                vmem_limit_bytes=vmem_limit,
            ),
            cost_estimate=cost,
        )(idx2d, table_in)

    return out2d.reshape(B, S, D)


# ----------------------------------------------------------------------------
if __name__ == "__main__":
    # Small shapes consistent with the module: x is (batch, seq) integer ids.
    B, S = 2, 128
    n_strain, dim_model = 128, 128

    key = jax.random.PRNGKey(0)
    k_idx, k_tab = jax.random.split(key)

    x = jax.random.randint(k_idx, (B, S), 0, n_strain, dtype=jnp.int32)
    embed_table = jax.random.normal(k_tab, (n_strain, dim_model), jnp.float32)

    ref = jnp.take(embed_table, x, axis=0) * math.sqrt(float(dim_model))

    # 1) default path: resident single-buffered table, folded sqrt(D) scale.
    out = jax.block_until_ready(strain_embedding(x, embed_table))
    assert out.shape == (B, S, dim_model)
    assert bool(jnp.all(jnp.isfinite(out)))
    assert bool(jnp.allclose(out, ref, atol=1e-4, rtol=1e-4))

    # 2) forced large-vocab crossover: streamed V-tiled table + f32 accumulator.
    out_t = jax.block_until_ready(
        strain_embedding(x, embed_table, max_table_vmem_bytes=0, tile_v=32))
    assert bool(jnp.allclose(out_t, ref, atol=1e-4, rtol=1e-4))

    # 3) ragged token count (M % TM != 0): padded tail rows are discarded.
    S2 = 100
    x2 = jax.random.randint(k_idx, (B, S2), 0, n_strain, dtype=jnp.int32)
    ref2 = jnp.take(embed_table, x2, axis=0) * math.sqrt(float(dim_model))
    out2 = jax.block_until_ready(strain_embedding(x2, embed_table))
    assert bool(jnp.allclose(out2, ref2, atol=1e-4, rtol=1e-4))

    print("KERNEL_OK")
</pallas_src>

<mosaic_0001>
module attributes {stable_mosaic.version = 11 : i64} {
  func.func @_embed_kernel_resident(%arg0: i32, %arg1: memref<128x1xi32, #tpu.memory_space<vmem>>, %arg2: memref<128x128xf32, #tpu.memory_space<vmem>>, %arg3: memref<128x128xf32, #tpu.memory_space<vmem>>) attributes {dimension_semantics = [#tpu.dimension_semantics<parallel>], iteration_bounds = array<i64: 2>, scalar_prefetch = 0 : i64, scratch_operands = 0 : i64, tpu.core_type = #tpu.core_type<tc>, window_params = [{transform_indices = @transform_0, window_bounds = array<i64: 128, 1>}, {pipeline_mode = #tpu.pipeline_mode<synchronous>, transform_indices = @transform_1, window_bounds = array<i64: 128, 128>}, {transform_indices = @transform_2, window_bounds = array<i64: 128, 128>}]} {
    %c0 = arith.constant 0 : index
    %c0_0 = arith.constant 0 : index
    %0 = vector.load %arg1[%c0, %c0_0] : memref<128x1xi32, #tpu.memory_space<vmem>>, vector<128x1xi32>
    %1 = tpu.iota {dimensions = array<i32: 1>} : vector<128x128xi32>
    %2 = vector.broadcast %0 : vector<128x1xi32> to vector<128x128xi32>
    %3 = arith.cmpi eq, %1, %2 : vector<128x128xi32>
    %cst = arith.constant 11.3137083 : f32
    %cst_1 = arith.constant 0.000000e+00 : f32
    %4 = vector.broadcast %cst : f32 to vector<128x128xf32>
    %5 = vector.broadcast %cst_1 : f32 to vector<128x128xf32>
    %6 = arith.select %3, %4, %5 : vector<128x128xi1>, vector<128x128xf32>
    %c0_2 = arith.constant 0 : index
    %c0_3 = arith.constant 0 : index
    %7 = vector.load %arg2[%c0_2, %c0_3] : memref<128x128xf32, #tpu.memory_space<vmem>>, vector<128x128xf32>
    %cst_4 = arith.constant dense<0.000000e+00> : vector<128x128xf32>
    %8 = tpu.matmul %6, %7, %cst_4 {dimension_numbers = #tpu.dot_dimension_numbers<[1], [0], [0], [1], [0, 0, 1, 1], [], []>, precision = #tpu.contract_precision<fp32>} : vector<128x128xf32>, vector<128x128xf32>, vector<128x128xf32> -> vector<128x128xf32>
    %c0_5 = arith.constant 0 : index
    %c0_6 = arith.constant 0 : index
    %9 = vector.load %arg3[%c0_5, %c0_6] : memref<128x128xf32, #tpu.memory_space<vmem>>, vector<128x128xf32>
    tpu.vector_store %arg3[%c0_5, %c0_6], %8 {strides = array<i32>} : memref<128x128xf32, #tpu.memory_space<vmem>>, vector<128x128xf32>,
    return
  }
  func.func @transform_0(%arg0: i32) -> (i32, i32) {
    %c0_i32 = arith.constant 0 : i32
    %c0_i32_0 = arith.constant 0 : i32
    return %arg0, %c0_i32 : i32, i32
  }
  func.func @transform_1(%arg0: i32) -> (i32, i32) {
    %c0_i32 = arith.constant 0 : i32
    %c0_i32_0 = arith.constant 0 : i32
    %c0_i32_1 = arith.constant 0 : i32
    return %c0_i32, %c0_i32_0 : i32, i32
  }
  func.func @transform_2(%arg0: i32) -> (i32, i32) {
    %c0_i32 = arith.constant 0 : i32
    %c0_i32_0 = arith.constant 0 : i32
    return %arg0, %c0_i32 : i32, i32
  }
}

module attributes {stable_mosaic.version = 11 : i64} {
  func.func @_embed_kernel_resident(%arg0: i32, %arg1: memref<128x1xi32, #tpu.memory_space<vmem>>, %arg2: memref<128x128xf32, #tpu.memory_space<vmem>>, %arg3: memref<128x128xf32, #tpu.memory_space<vmem>>) attributes {dimension_semantics = [#tpu.dimension_semantics<parallel>], iteration_bounds = array<i64: 2>, scalar_prefetch = 0 : i64, scratch_operands = 0 : i64, tpu.core_type = #tpu.core_type<tc>, window_params = [{transform_indices = @transform_0, window_bounds = array<i64: 128, 1>}, {pipeline_mode = #tpu.pipeline_mode<synchronous>, transform_indices = @transform_1, window_bounds = array<i64: 128, 128>}, {transform_indices = @transform_2, window_bounds = array<i64: 128, 128>}]} {
    %c0 = arith.constant 0 : index
    %c0_0 = arith.constant 0 : index
    %0 = vector.load %arg1[%c0, %c0_0] : memref<128x1xi32, #tpu.memory_space<vmem>>, vector<128x1xi32>
    %1 = tpu.iota {dimensions = array<i32: 1>} : vector<128x128xi32>
    %2 = vector.broadcast %0 : vector<128x1xi32> to vector<128x128xi32>
    %3 = arith.cmpi eq, %1, %2 : vector<128x128xi32>
    %cst = arith.constant 11.3137083 : f32
    %cst_1 = arith.constant 0.000000e+00 : f32
    %4 = vector.broadcast %cst : f32 to vector<128x128xf32>
    %5 = vector.broadcast %cst_1 : f32 to vector<128x128xf32>
    %6 = arith.select %3, %4, %5 : vector<128x128xi1>, vector<128x128xf32>
    %c0_2 = arith.constant 0 : index
    %c0_3 = arith.constant 0 : index
    %7 = vector.load %arg2[%c0_2, %c0_3] : memref<128x128xf32, #tpu.memory_space<vmem>>, vector<128x128xf32>
    %cst_4 = arith.constant dense<0.000000e+00> : vector<128x128xf32>
    %8 = tpu.matmul %6, %7, %cst_4 {dimension_numbers = #tpu.dot_dimension_numbers<[1], [0], [0], [1], [0, 0, 1, 1], [], []>, precision = #tpu.contract_precision<fp32>} : vector<128x128xf32>, vector<128x128xf32>, vector<128x128xf32> -> vector<128x128xf32>
    %c0_5 = arith.constant 0 : index
    %c0_6 = arith.constant 0 : index
    %9 = vector.load %arg3[%c0_5, %c0_6] : memref<128x128xf32, #tpu.memory_space<vmem>>, vector<128x128xf32>
    tpu.vector_store %arg3[%c0_5, %c0_6], %8 {strides = array<i32>} : memref<128x128xf32, #tpu.memory_space<vmem>>, vector<128x128xf32>,
    return
  }
  func.func @transform_0(%arg0: i32) -> (i32, i32) {
    %c0_i32 = arith.constant 0 : i32
    %c0_i32_0 = arith.constant 0 : i32
    return %arg0, %c0_i32 : i32, i32
  }
  func.func @transform_1(%arg0: i32) -> (i32, i32) {
    %c0_i32 = arith.constant 0 : i32
    %c0_i32_0 = arith.constant 0 : i32
    %c0_i32_1 = arith.constant 0 : i32
    return %c0_i32, %c0_i32_0 : i32, i32
  }
  func.func @transform_2(%arg0: i32) -> (i32, i32) {
    %c0_i32 = arith.constant 0 : i32
    %c0_i32_0 = arith.constant 0 : i32
    return %arg0, %c0_i32 : i32, i32
  }
}

</mosaic_0001>

<llo_original>
// kernel: tpu_custom_call.1
$region0: #{tpu_custom_call.1}
  #allocation0 [shape = 'u32[]', space=smem, size = 0x4, offset = 0x4, fixed_abs, tag = 'smem constant byte address 0x4 - core index']
  #allocation1 [shape = 'u32[144,128]{1,0:T(1,128)}', space=vmem, size = 0x12000, scoped, tag = 'internal scratch']
  %s0 = inlined_call_operand.vmem [shape: s32[256,1], index: 0, kind: input, shape index: {}]
  %s1 = inlined_call_operand.vmem [shape: f32[128,128], index: 1, kind: input, shape index: {}]
  %s2 = inlined_call_operand.hbm [shape: f32[256,128], index: 2, kind: output, shape index: {}]
  %s3 = sld [smem:[#allocation0]]
  $region41: #{tpu_custom_call.1} parent=0
    _
  %s5 = ssub.s32 1, %s3
  %s6 = scalar_select 0, %s5, %s3
  $region1: #{tpu_custom_call.1} parent=0
    #allocation2 [shape = 'u8[131072]{0}', space=vmem, size = 0x20000, scoped, tag = 'output window, operand 0']
    #allocation3 [shape = 's32[2]{0}', space=sflag, size = 0x8, scoped, tag = 'scoped memory for tpu_custom_call.1']
    %7 = vsyncpa [#allocation3], 0
    %s8 = scalar_lea.sflag [#allocation3], 1
    %9 = vsyncpa %s8, 0
    loop: start=0, step=1, limit=4
    $region2: #{tpu_custom_call.1} parent=1 // loop_pre_header
      _
    $region3: #{tpu_custom_call.1} parent=1 // loop_header
      %s11 = sphi 0, %s15
      %p12 = scmp.ge.s32.totalorder %s11, 4
      %s21 = sphi 0, %s23
      %s24 = sphi 0, %s21
      %s25 = sphi 0, %s24
      %s41 = sphi 0, %s25
      %s45 = sphi 0, %s45
      %s47 = sphi 0, %s45
      %s48 = sphi 0, %s47
      %s62 = sphi 0, %s48
      %s68 = sphi 0, %s70
      %s71 = sphi 0, %s68
      %s72 = sphi 0, %s71
      %s88 = sphi 0, %s72
    $region4: #{tpu_custom_call.1} parent=1 // loop_header_branch
      %14 = sbr.rel (%p12) target = $region8
    $region5: #{tpu_custom_call.1} parent=1 // loop_body
      %s16 = ssub.s32 %s11, 1
      %s17 = ssub.s32 %s11, 2
      %s18 = sadd.s32 %s11, 1
      %s19 = ssub.s32 %s11, %s18
      %p20 = scmp.eq.s32.totalorder %s19, 0
      %s22 = sadd.s32 %s21, 1
      %s23 = scalar_select %p20, %s21, %s22
      %p26 = pneg %p20
      %p27 = scmp.eq.s32.totalorder %s11, 1
      %p28 = por %p26, %p27
      %p29 = scmp.ne.s32.totalorder %s21, %s24
      %p30 = scmp.eq.s32.totalorder %s11, 0
      %p31 = por %p29, %p30
      %p32 = scmp.ne.s32.totalorder %s21, %s24
      %p33 = scmp.eq.s32.totalorder %s16, 1
      %p34 = por %p32, %p33
      %p35 = scmp.ne.s32.totalorder %s24, %s25
      %p36 = scmp.eq.s32.totalorder %s16, 0
      %p37 = por %p35, %p36
      %p38 = scmp.ne.s32.totalorder %s24, %s25
      %p39 = scmp.eq.s32.totalorder %s17, 1
      %p40 = por %p38, %p39
      %p42 = scmp.ne.s32.totalorder %s25, %s41
      %p43 = scmp.eq.s32.totalorder %s17, 0
      %p44 = por %p42, %p43
      %s46 = sadd.s32 %s45, 1
      %p49 = scmp.eq.s32.totalorder %s11, 1
      %p50 = scmp.ne.s32.totalorder %s45, %s47
      %p51 = scmp.eq.s32.totalorder %s11, 0
      %p52 = por %p50, %p51
      %p53 = scmp.ne.s32.totalorder %s45, %s47
      %p54 = scmp.eq.s32.totalorder %s16, 1
      %p55 = por %p53, %p54
      %p56 = scmp.ne.s32.totalorder %s47, %s48
      %p57 = scmp.eq.s32.totalorder %s16, 0
      %p58 = por %p56, %p57
      %p59 = scmp.ne.s32.totalorder %s47, %s48
      %p60 = scmp.eq.s32.totalorder %s17, 1
      %p61 = por %p59, %p60
      %p63 = scmp.ne.s32.totalorder %s48, %s62
      %p64 = scmp.eq.s32.totalorder %s17, 0
      %p65 = por %p63, %p64
      %s66 = ssub.s32 %s11, %s18
      %p67 = scmp.eq.s32.totalorder %s66, 0
      %s69 = sadd.s32 %s68, 1
      %s70 = scalar_select %p67, %s68, %s69
      %p73 = pneg %p67
      %p74 = scmp.eq.s32.totalorder %s11, 1
      %p75 = por %p73, %p74
      %p76 = scmp.ne.s32.totalorder %s68, %s71
      %p77 = scmp.eq.s32.totalorder %s11, 0
      %p78 = por %p76, %p77
      %p79 = scmp.ne.s32.totalorder %s68, %s71
      %p80 = scmp.eq.s32.totalorder %s16, 1
      %p81 = por %p79, %p80
      %p82 = scmp.ne.s32.totalorder %s71, %s72
      %p83 = scmp.eq.s32.totalorder %s16, 0
      %p84 = por %p82, %p83
      %p85 = scmp.ne.s32.totalorder %s71, %s72
      %p86 = scmp.eq.s32.totalorder %s17, 1
      %p87 = por %p85, %p86
      %p89 = scmp.ne.s32.totalorder %s72, %s88
      %p90 = scmp.eq.s32.totalorder %s17, 0
      %p91 = por %p89, %p90
      %p92 = scmp.le.s32.totalorder 1, %s11
      %p93 = scmp.lt.s32.totalorder %s11, 3
      %p94 = pnand %p92, %p93
      %p95 = pneg %p94
      // Predicated region
      $region9: #{tpu_custom_call.1} parent=5 // pred_check
        _
      $region10: #{tpu_custom_call.1} parent=5 // pred_check_branch
        %97 = sbr.rel (%p94) target = $region12
      $region11: #{tpu_custom_call.1} parent=5 // pred_region
        %s98 = ssub.s32 %s11, 1
        // Predicated region
        $region13: #{tpu_custom_call.1} parent=11 // pred_check
          %p99 = pneg %p58
        $region14: #{tpu_custom_call.1} parent=11 // pred_check_branch
          %101 = sbr.rel (%p99) target = $region16
        $region15: #{tpu_custom_call.1} parent=11 // pred_region
          _
        $region16: #{tpu_custom_call.1} parent=11 // pred_fallthru
          _
      $region12: #{tpu_custom_call.1} parent=5 // pred_fallthru
        _
      %p102 = scmp.lt.s32.totalorder %s11, 2
      // Predicated region
      $region17: #{tpu_custom_call.1} parent=5 // pred_check
        %p103 = pneg %p102
      $region18: #{tpu_custom_call.1} parent=5 // pred_check_branch
        %105 = sbr.rel (%p103) target = $region20
      $region19: #{tpu_custom_call.1} parent=5 // pred_region
        // Predicated region
        $region21: #{tpu_custom_call.1} parent=19 // pred_check
          %p106 = pneg %p31
        $region22: #{tpu_custom_call.1} parent=19 // pred_check_branch
          %108 = sbr.rel (%p106) target = $region24
        $region23: #{tpu_custom_call.1} parent=19 // pred_region
          %s109 = smul.u32 16, %s11
          %p110 = scmp.lt.s32.totalorder %s109, 31
          %s111 = scalar_select %p110, %s109, 31
          %s112 = smul.addr %s111, 8
          %s113 = scalar_lea.vmem %s0, %s112
          %s114 = smul.u32 16, %s11
        $region24: #{tpu_custom_call.1} parent=19 // pred_fallthru
          _
      $region20: #{tpu_custom_call.1} parent=5 // pred_fallthru
        _
      %p115 = scmp.le.s32.totalorder 1, %s11
      %p116 = scmp.lt.s32.totalorder %s11, 3
      %p117 = pnand %p115, %p116
      %p118 = pneg %p117
      // Predicated region
      $region25: #{tpu_custom_call.1} parent=5 // pred_check
        _
      $region26: #{tpu_custom_call.1} parent=5 // pred_check_branch
        %120 = sbr.rel (%p117) target = $region28
      $region27: #{tpu_custom_call.1} parent=5 // pred_region
        %s121 = ssub.s32 %s11, 1
        %s122 = smul.u32 16, %s16
        %p123 = scmp.lt.s32.totalorder %s122, 31
        %s124 = scalar_select %p123, %s122, 31
        %s125 = smul.addr %s124, 8
        %s126 = scalar_lea.vmem %s0, %s125
        %p127 = pneg %p37
        %p128 = pneg %p34
        %p129 = pneg %p58
        %p130 = pneg %p55
        %p131 = pneg %p84
        %p132 = pneg %p81
        %s133 = sand.u32 %s71, 1
        %s134 = scalar_lea.sflag [#allocation3], %s133
        %s135 = sand.u32 %s71, 1
        %s136 = smul.addr %s135, 128
        %s137 = scalar_lea.vmem [#allocation2], %s136
        %s138 = smul.u32 16, %s16
        %p139 = scmp.lt.s32.totalorder %s138, 31
        %s140 = scalar_select %p139, %s138, 31
        %s141 = smul.addr %s140, 8
        %s142 = scalar_lea.vmem %s0, %s141
        %s143 = smul.u32 16, %s16
        %s144 = smul.u32 16, %s16
        %v145 = vld [vmem:[%s142] sm:$0xff]
        %v146 = vld [vmem:[%s142 + $0x8] sm:$0xff]
        %v147 = vld [vmem:[%s142 + $0x10] sm:$0xff]
        %v148 = vld [vmem:[%s142 + $0x18] sm:$0xff]
        %v149 = vld [vmem:[%s142 + $0x20] sm:$0xff]
        %v150 = vld [vmem:[%s142 + $0x28] sm:$0xff]
        %v151 = vld [vmem:[%s142 + $0x30] sm:$0xff]
        %v152 = vld [vmem:[%s142 + $0x38] sm:$0xff]
        %v153 = vld [vmem:[%s142 + $0x40] sm:$0xff]
        %v154 = vld [vmem:[%s142 + $0x48] sm:$0xff]
        %v155 = vld [vmem:[%s142 + $0x50] sm:$0xff]
        %v156 = vld [vmem:[%s142 + $0x58] sm:$0xff]
        %v157 = vld [vmem:[%s142 + $0x60] sm:$0xff]
        %v158 = vld [vmem:[%s142 + $0x68] sm:$0xff]
        %v159 = vld [vmem:[%s142 + $0x70] sm:$0xff]
        %v160 = vld [vmem:[%s142 + $0x78] sm:$0xff]
        %v161 = vlaneseq
        %v162 = vand.u32 %v161, 127
        %163 = vset.pattern.permute.xlu0 0
        %164 = vperm.xlu0 %163, %v145
        %v165 = vpop.permute.xlu0 %164
        %166 = vset.pattern.permute.xlu0 0
        %167 = vperm.xlu0 %166, %v146
        %v168 = vpop.permute.xlu0 %167
        %169 = vset.pattern.permute.xlu0 0
        %170 = vperm.xlu0 %169, %v147
        %v171 = vpop.permute.xlu0 %170
        %172 = vset.pattern.permute.xlu0 0
        %173 = vperm.xlu0 %172, %v148
        %v174 = vpop.permute.xlu0 %173
        %175 = vset.pattern.permute.xlu0 0
        %176 = vperm.xlu0 %175, %v149
        %v177 = vpop.permute.xlu0 %176
        %178 = vset.pattern.permute.xlu0 0
        %179 = vperm.xlu0 %178, %v150
        %v180 = vpop.permute.xlu0 %179
        %181 = vset.pattern.permute.xlu0 0
        %182 = vperm.xlu0 %181, %v151
        %v183 = vpop.permute.xlu0 %182
        %184 = vset.pattern.permute.xlu0 0
        %185 = vperm.xlu0 %184, %v152
        %v186 = vpop.permute.xlu0 %185
        %187 = vset.pattern.permute.xlu0 0
        %188 = vperm.xlu0 %187, %v153
        %v189 = vpop.permute.xlu0 %188
        %190 = vset.pattern.permute.xlu0 0
        %191 = vperm.xlu0 %190, %v154
        %v192 = vpop.permute.xlu0 %191
        %193 = vset.pattern.permute.xlu0 0
        %194 = vperm.xlu0 %193, %v155
        %v195 = vpop.permute.xlu0 %194
        %196 = vset.pattern.permute.xlu0 0
        %197 = vperm.xlu0 %196, %v156
        %v198 = vpop.permute.xlu0 %197
        %199 = vset.pattern.permute.xlu0 0
        %200 = vperm.xlu0 %199, %v157
        %v201 = vpop.permute.xlu0 %200
        %202 = vset.pattern.permute.xlu0 0
        %203 = vperm.xlu0 %202, %v158
        %v204 = vpop.permute.xlu0 %203
        %205 = vset.pattern.permute.xlu0 0
        %206 = vperm.xlu0 %205, %v159
        %v207 = vpop.permute.xlu0 %206
        %208 = vset.pattern.permute.xlu0 0
        %209 = vperm.xlu0 %208, %v160
        %v210 = vpop.permute.xlu0 %209
        %vm211 = vcmp.eq.s32.totalorder %v162, %v165
        %vm212 = vcmp.eq.s32.totalorder %v162, %v168
        %vm213 = vcmp.eq.s32.totalorder %v162, %v171
        %vm214 = vcmp.eq.s32.totalorder %v162, %v174
        %vm215 = vcmp.eq.s32.totalorder %v162, %v177
        %vm216 = vcmp.eq.s32.totalorder %v162, %v180
        %vm217 = vcmp.eq.s32.totalorder %v162, %v183
        %vm218 = vcmp.eq.s32.totalorder %v162, %v186
        %vm219 = vcmp.eq.s32.totalorder %v162, %v189
        %vm220 = vcmp.eq.s32.totalorder %v162, %v192
        %vm221 = vcmp.eq.s32.totalorder %v162, %v195
        %vm222 = vcmp.eq.s32.totalorder %v162, %v198
        %vm223 = vcmp.eq.s32.totalorder %v162, %v201
        %vm224 = vcmp.eq.s32.totalorder %v162, %v204
        %vm225 = vcmp.eq.s32.totalorder %v162, %v207
        %vm226 = vcmp.eq.s32.totalorder %v162, %v210
        %v227 = vsel %vm211, 11.313708, 0.0
        %v228 = vsel %vm212, 11.313708, 0.0
        %v229 = vsel %vm213, 11.313708, 0.0
        %v230 = vsel %vm214, 11.313708, 0.0
        %v231 = vsel %vm215, 11.313708, 0.0
        %v232 = vsel %vm216, 11.313708, 0.0
        %v233 = vsel %vm217, 11.313708, 0.0
        %v234 = vsel %vm218, 11.313708, 0.0
        %v235 = vsel %vm219, 11.313708, 0.0
        %v236 = vsel %vm220, 11.313708, 0.0
        %v237 = vsel %vm221, 11.313708, 0.0
        %v238 = vsel %vm222, 11.313708, 0.0
        %v239 = vsel %vm223, 11.313708, 0.0
        %v240 = vsel %vm224, 11.313708, 0.0
        %v241 = vsel %vm225, 11.313708, 0.0
        %v242 = vsel %vm226, 11.313708, 0.0
        %v243 = vld [vmem:[%s1] sm:$0xff]
        %v244 = vld [vmem:[%s1 + $0x8] sm:$0xff]
        %v245 = vld [vmem:[%s1 + $0x10] sm:$0xff]
        %v246 = vld [vmem:[%s1 + $0x18] sm:$0xff]
        %v247 = vld [vmem:[%s1 + $0x20] sm:$0xff]
        %v248 = vld [vmem:[%s1 + $0x28] sm:$0xff]
        %v249 = vld [vmem:[%s1 + $0x30] sm:$0xff]
        %v250 = vld [vmem:[%s1 + $0x38] sm:$0xff]
        %v251 = vld [vmem:[%s1 + $0x40] sm:$0xff]
        %v252 = vld [vmem:[%s1 + $0x48] sm:$0xff]
        %v253 = vld [vmem:[%s1 + $0x50] sm:$0xff]
        %v254 = vld [vmem:[%s1 + $0x58] sm:$0xff]
        %v255 = vld [vmem:[%s1 + $0x60] sm:$0xff]
        %v256 = vld [vmem:[%s1 + $0x68] sm:$0xff]
        %v257 = vld [vmem:[%s1 + $0x70] sm:$0xff]
        %v258 = vld [vmem:[%s1 + $0x78] sm:$0xff]
        %259 = vmatprep.subr.mxu0 0.0
        %v260 = vand.u32 %v243, 4294901760
        %261 = vmatpush1.msra.mxu0 %v260
        %262 = vmatprep.subr.mxu0 0.0
        %v263 = vand.u32 %v244, 4294901760
        %264 = vmatpush1.msra.mxu0 %v263
        %265 = vmatprep.subr.mxu0 0.0
        %v266 = vand.u32 %v245, 4294901760
        %267 = vmatpush1.msra.mxu0 %v266
        %268 = vmatprep.subr.mxu0 0.0
        %v269 = vand.u32 %v246, 4294901760
        %270 = vmatpush1.msra.mxu0 %v269
        %271 = vmatprep.subr.mxu0 0.0
        %v272 = vand.u32 %v247, 4294901760
        %273 = vmatpush1.msra.mxu0 %v272
        %274 = vmatprep.subr.mxu0 0.0
        %v275 = vand.u32 %v248, 4294901760
        %276 = vmatpush1.msra.mxu0 %v275
        %277 = vmatprep.subr.mxu0 0.0
        %v278 = vand.u32 %v249, 4294901760
        %279 = vmatpush1.msra.mxu0 %v278
        %280 = vmatprep.subr.mxu0 0.0
        %v281 = vand.u32 %v250, 4294901760
        %282 = vmatpush1.msra.mxu0 %v281
        %283 = vmatprep.subr.mxu0 0.0
        %v284 = vand.u32 %v251, 4294901760
        %285 = vmatpush1.msra.mxu0 %v284
        %286 = vmatprep.subr.mxu0 0.0
        %v287 = vand.u32 %v252, 4294901760
        %288 = vmatpush1.msra.mxu0 %v287
        %289 = vmatprep.subr.mxu0 0.0
        %v290 = vand.u32 %v253, 4294901760
        %291 = vmatpush1.msra.mxu0 %v290
        %292 = vmatprep.subr.mxu0 0.0
        %v293 = vand.u32 %v254, 4294901760
        %294 = vmatpush1.msra.mxu0 %v293
        %295 = vmatprep.subr.mxu0 0.0
        %v296 = vand.u32 %v255, 4294901760
        %297 = vmatpush1.msra.mxu0 %v296
        %298 = vmatprep.subr.mxu0 0.0
        %v299 = vand.u32 %v256, 4294901760
        %300 = vmatpush1.msra.mxu0 %v299
        %301 = vmatprep.subr.mxu0 0.0
        %v302 = vand.u32 %v257, 4294901760
        %303 = vmatpush1.msra.mxu0 %v302
        %304 = vmatprep.subr.mxu0 0.0
        %v305 = vand.u32 %v258, 4294901760
        %306 = vmatpush1.msra.mxu0 %v305
        %307 = vmatprep.subr.mxu0 0.0
        %308 = vmatpush1.msra.mxu0 0.0
        %309 = vmatprep.subr.mxu0 0.0
        %310 = vmatpush1.msra.mxu0 0.0
        %311 = vmatprep.subr.mxu0 0.0
        %312 = vmatpush1.msra.mxu0 0.0
        %313 = vmatprep.subr.mxu0 0.0
        %314 = vmatpush1.msra.mxu0 0.0
        %315 = vmatprep.subr.mxu0 0.0
        %316 = vmatpush1.msra.mxu0 0.0
        %317 = vmatprep.subr.mxu0 0.0
        %318 = vmatpush1.msra.mxu0 0.0
        %319 = vmatprep.subr.mxu0 0.0
        %320 = vmatpush1.msra.mxu0 0.0
        %321 = vmatprep.subr.mxu0 0.0
        %322 = vmatpush1.msra.mxu0 0.0
        %323 = vmatprep.subr.mxu0 0.0
        %324 = vmatpush1.msra.mxu0 0.0
        %325 = vmatprep.subr.mxu0 0.0
        %326 = vmatpush1.msra.mxu0 0.0
        %327 = vmatprep.subr.mxu0 0.0
        %328 = vmatpush1.msra.mxu0 0.0
        %329 = vmatprep.subr.mxu0 0.0
        %330 = vmatpush1.msra.mxu0 0.0
        %331 = vmatprep.subr.mxu0 0.0
        %332 = vmatpush1.msra.mxu0 0.0
        %333 = vmatprep.subr.mxu0 0.0
        %334 = vmatpush1.msra.mxu0 0.0
        %335 = vmatprep.subr.mxu0 0.0
        %336 = vmatpush1.msra.mxu0 0.0
        %337 = vmatprep.subr.mxu0 0.0
        %338 = vmatpush1.msra.mxu0 0.0
        %339 = vmatprep.mubr.f32.mxu0 0.0
        %v340 = vand.u32 %v227, 4294901760
        %v341 = vsub.f32 %v227, %v340
        %v342 = vand.u32 %v341, 4294901760
        %v343 = vsub.f32 %v341, %v342
        %v344 = vand.u32 %v343, 4294901760
        %345 = vmatmul.mubr.f32.gmra.mrb[0].mxu0 %v344
        %v346 = vpop.f32.mrb[0].mxu0
        %v347 = vadd.f32 0.0, %v346
        %v348 = vpop.f32.mrb[0].mxu0
        %349 = vmatprep.mubr.f32.mxu0 0.0
        %v350 = vand.u32 %v228, 4294901760
        %v351 = vsub.f32 %v228, %v350
        %v352 = vand.u32 %v351, 4294901760
        %v353 = vsub.f32 %v351, %v352
        %v354 = vand.u32 %v353, 4294901760
        %355 = vmatmul.mubr.f32.gmra.mrb[0].mxu0 %v354
        %v356 = vpop.f32.mrb[0].mxu0
        %v357 = vadd.f32 0.0, %v356
        %v358 = vpop.f32.mrb[0].mxu0
        %359 = vmatprep.mubr.f32.mxu0 0.0
        %v360 = vand.u32 %v229, 4294901760
        %v361 = vsub.f32 %v229, %v360
        %v362 = vand.u32 %v361, 4294901760
        %v363 = vsub.f32 %v361, %v362
        %v364 = vand.u32 %v363, 4294901760
        %365 = vmatmul.mubr.f32.gmra.mrb[0].mxu0 %v364
        %v366 = vpop.f32.mrb[0].mxu0
        %v367 = vadd.f32 0.0, %v366
        %v368 = vpop.f32.mrb[0].mxu0
        %369 = vmatprep.mubr.f32.mxu0 0.0
        %v370 = vand.u32 %v230, 4294901760
        %v371 = vsub.f32 %v230, %v370
        %v372 = vand.u32 %v371, 4294901760
        %v373 = vsub.f32 %v371, %v372
        %v374 = vand.u32 %v373, 4294901760
        %375 = vmatmul.mubr.f32.gmra.mrb[0].mxu0 %v374
        %v376 = vpop.f32.mrb[0].mxu0
        %v377 = vadd.f32 0.0, %v376
        %v378 = vpop.f32.mrb[0].mxu0
        %379 = vmatprep.mubr.f32.mxu0 0.0
        %v380 = vand.u32 %v231, 4294901760
        %v381 = vsub.f32 %v231, %v380
        %v382 = vand.u32 %v381, 4294901760
        %v383 = vsub.f32 %v381, %v382
        %v384 = vand.u32 %v383, 4294901760
        %385 = vmatmul.mubr.f32.gmra.mrb[0].mxu0 %v384
        %v386 = vpop.f32.mrb[0].mxu0
        %v387 = vadd.f32 0.0, %v386
        %v388 = vpop.f32.mrb[0].mxu0
        %389 = vmatprep.mubr.f32.mxu0 0.0
        %v390 = vand.u32 %v232, 4294901760
        %v391 = vsub.f32 %v232, %v390
        %v392 = vand.u32 %v391, 4294901760
        %v393 = vsub.f32 %v391, %v392
        %v394 = vand.u32 %v393, 4294901760
        %395 = vmatmul.mubr.f32.gmra.mrb[0].mxu0 %v394
        %v396 = vpop.f32.mrb[0].mxu0
        %v397 = vadd.f32 0.0, %v396
        %v398 = vpop.f32.mrb[0].mxu0
        %399 = vmatprep.mubr.f32.mxu0 0.0
        %v400 = vand.u32 %v233, 4294901760
        %v401 = vsub.f32 %v233, %v400
        %v402 = vand.u32 %v401, 4294901760
        %v403 = vsub.f32 %v401, %v402
        %v404 = vand.u32 %v403, 4294901760
        %405 = vmatmul.mubr.f32.gmra.mrb[0].mxu0 %v404
        %v406 = vpop.f32.mrb[0].mxu0
        %v407 = vadd.f32 0.0, %v406
        %v408 = vpop.f32.mrb[0].mxu0
        %409 = vmatprep.mubr.f32.mxu0 0.0
        %v410 = vand.u32 %v234, 4294901760
        %v411 = vsub.f32 %v234, %v410
        %v412 = vand.u32 %v411, 4294901760
        %v413 = vsub.f32 %v411, %v412
        %v414 = vand.u32 %v413, 4294901760
        %415 = vmatmul.mubr.f32.gmra.mrb[0].mxu0 %v414
        %v416 = vpop.f32.mrb[0].mxu0
        %v417 = vadd.f32 0.0, %v416
        %v418 = vpop.f32.mrb[0].mxu0
        %419 = vmatprep.mubr.f32.mxu0 0.0
        %v420 = vand.u32 %v235, 4294901760
        %v421 = vsub.f32 %v235, %v420
        %v422 = vand.u32 %v421, 4294901760
        %v423 = vsub.f32 %v421, %v422
        %v424 = vand.u32 %v423, 4294901760
        %425 = vmatmul.mubr.f32.gmra.mrb[0].mxu0 %v424
        %v426 = vpop.f32.mrb[0].mxu0
        %v427 = vadd.f32 0.0, %v426
        %v428 = vpop.f32.mrb[0].mxu0
        %429 = vmatprep.mubr.f32.mxu0 0.0
        %v430 = vand.u32 %v236, 4294901760
        %v431 = vsub.f32 %v236, %v430
        %v432 = vand.u32 %v431, 4294901760
        %v433 = vsub.f32 %v431, %v432
        %v434 = vand.u32 %v433, 4294901760
        %435 = vmatmul.mubr.f32.gmra.mrb[0].mxu0 %v434
        %v436 = vpop.f32.mrb[0].mxu0
        %v437 = vadd.f32 0.0, %v436
        %v438 = vpop.f32.mrb[0].mxu0
        %439 = vmatprep.mubr.f32.mxu0 0.0
        %v440 = vand.u32 %v237, 4294901760
        %v441 = vsub.f32 %v237, %v440
        %v442 = vand.u32 %v441, 4294901760
        %v443 = vsub.f32 %v441, %v442
        %v444 = vand.u32 %v443, 4294901760
        %445 = vmatmul.mubr.f32.gmra.mrb[0].mxu0 %v444
        %v446 = vpop.f32.mrb[0].mxu0
        %v447 = vadd.f32 0.0, %v446
        %v448 = vpop.f32.mrb[0].mxu0
        %449 = vmatprep.mubr.f32.mxu0 0.0
        %v450 = vand.u32 %v238, 4294901760
        %v451 = vsub.f32 %v238, %v450
        %v452 = vand.u32 %v451, 4294901760
        %v453 = vsub.f32 %v451, %v452
        %v454 = vand.u32 %v453, 4294901760
        %455 = vmatmul.mubr.f32.gmra.mrb[0].mxu0 %v454
        %v456 = vpop.f32.mrb[0].mxu0
        %v457 = vadd.f32 0.0, %v456
        %v458 = vpop.f32.mrb[0].mxu0
        %459 = vmatprep.mubr.f32.mxu0 0.0
        %v460 = vand.u32 %v239, 4294901760
        %v461 = vsub.f32 %v239, %v460
        %v462 = vand.u32 %v461, 4294901760
        %v463 = vsub.f32 %v461, %v462
        %v464 = vand.u32 %v463, 4294901760
        %465 = vmatmul.mubr.f32.gmra.mrb[0].mxu0 %v464
        %v466 = vpop.f32.mrb[0].mxu0
        %v467 = vadd.f32 0.0, %v466
        %v468 = vpop.f32.mrb[0].mxu0
        %469 = vmatprep.mubr.f32.mxu0 0.0
        %v470 = vand.u32 %v240, 4294901760
        %v471 = vsub.f32 %v240, %v470
        %v472 = vand.u32 %v471, 4294901760
        %v473 = vsub.f32 %v471, %v472
        %v474 = vand.u32 %v473, 4294901760
        %475 = vmatmul.mubr.f32.gmra.mrb[0].mxu0 %v474
        %v476 = vpop.f32.mrb[0].mxu0
        %v477 = vadd.f32 0.0, %v476
        %v478 = vpop.f32.mrb[0].mxu0
        %479 = vmatprep.mubr.f32.mxu0 0.0
        %v480 = vand.u32 %v241, 4294901760
        %v481 = vsub.f32 %v241, %v480
        %v482 = vand.u32 %v481, 4294901760
        %v483 = vsub.f32 %v481, %v482
        %v484 = vand.u32 %v483, 4294901760
        %485 = vmatmul.mubr.f32.gmra.mrb[0].mxu0 %v484
        %v486 = vpop.f32.mrb[0].mxu0
        %v487 = vadd.f32 0.0, %v486
        %v488 = vpop.f32.mrb[0].mxu0
        %489 = vmatprep.mubr.f32.mxu0 0.0
        %v490 = vand.u32 %v242, 4294901760
        %v491 = vsub.f32 %v242, %v490
        %v492 = vand.u32 %v491, 4294901760
        %v493 = vsub.f32 %v491, %v492
        %v494 = vand.u32 %v493, 4294901760
        %495 = vmatmul.mubr.f32.gmra.mrb[0].mxu0 %v494
        %v496 = vpop.f32.mrb[0].mxu0
        %v497 = vadd.f32 0.0, %v496
        %v498 = vpop.f32.mrb[0].mxu0
        %499 = vdwg.mxu0
        %500 = vmatprep.subr.mxu0 0.0
        %v501 = vand.u32 %v243, 4294901760
        %v502 = vsub.f32 %v243, %v501
        %v503 = vand.u32 %v502, 4294901760
        %v504 = vsub.f32 %v502, %v503
        %v505 = vand.u32 %v504, 4294901760
        %506 = vmatpush1.msra.mxu0 %v505
        %507 = vmatprep.subr.mxu0 0.0
        %v508 = vand.u32 %v244, 4294901760
        %v509 = vsub.f32 %v244, %v508
        %v510 = vand.u32 %v509, 4294901760
        %v511 = vsub.f32 %v509, %v510
        %v512 = vand.u32 %v511, 4294901760
        %513 = vmatpush1.msra.mxu0 %v512
        %514 = vmatprep.subr.mxu0 0.0
        %v515 = vand.u32 %v245, 4294901760
        %v516 = vsub.f32 %v245, %v515
        %v517 = vand.u32 %v516, 4294901760
        %v518 = vsub.f32 %v516, %v517
        %v519 = vand.u32 %v518, 4294901760
        %520 = vmatpush1.msra.mxu0 %v519
        %521 = vmatprep.subr.mxu0 0.0
        %v522 = vand.u32 %v246, 4294901760
        %v523 = vsub.f32 %v246, %v522
        %v524 = vand.u32 %v523, 4294901760
        %v525 = vsub.f32 %v523, %v524
        %v526 = vand.u32 %v525, 4294901760
        %527 = vmatpush1.msra.mxu0 %v526
        %528 = vmatprep.subr.mxu0 0.0
        %v529 = vand.u32 %v247, 4294901760
        %v530 = vsub.f32 %v247, %v529
        %v531 = vand.u32 %v530, 4294901760
        %v532 = vsub.f32 %v530, %v531
        %v533 = vand.u32 %v532, 4294901760
        %534 = vmatpush1.msra.mxu0 %v533
        %535 = vmatprep.subr.mxu0 0.0
        %v536 = vand.u32 %v248, 4294901760
        %v537 = vsub.f32 %v248, %v536
        %v538 = vand.u32 %v537, 4294901760
        %v539 = vsub.f32 %v537, %v538
        %v540 = vand.u32 %v539, 4294901760
        %541 = vmatpush1.msra.mxu0 %v540
        %542 = vmatprep.subr.mxu0 0.0
        %v543 = vand.u32 %v249, 4294901760
        %v544 = vsub.f32 %v249, %v543
        %v545 = vand.u32 %v544, 4294901760
        %v546 = vsub.f32 %v544, %v545
        %v547 = vand.u32 %v546, 4294901760
        %548 = vmatpush1.msra.mxu0 %v547
        %549 = vmatprep.subr.mxu0 0.0
        %v550 = vand.u32 %v250, 4294901760
        %v551 = vsub.f32 %v250, %v550
        %v552 = vand.u32 %v551, 4294901760
        %v553 = vsub.f32 %v551, %v552
        %v554 = vand.u32 %v553, 4294901760
        %555 = vmatpush1.msra.mxu0 %v554
        %556 = vmatprep.subr.mxu0 0.0
        %v557 = vand.u32 %v251, 4294901760
        %v558 = vsub.f32 %v251, %v557
        %v559 = vand.u32 %v558, 4294901760
        %v560 = vsub.f32 %v558, %v559
        %v561 = vand.u32 %v560, 4294901760
        %562 = vmatpush1.msra.mxu0 %v561
        %563 = vmatprep.subr.mxu0 0.0
        %v564 = vand.u32 %v252, 4294901760
        %v565 = vsub.f32 %v252, %v564
        %v566 = vand.u32 %v565, 4294901760
        %v567 = vsub.f32 %v565, %v566
        %v568 = vand.u32 %v567, 4294901760
        %569 = vmatpush1.msra.mxu0 %v568
        %570 = vmatprep.subr.mxu0 0.0
        %v571 = vand.u32 %v253, 4294901760
        %v572 = vsub.f32 %v253, %v571
        %v573 = vand.u32 %v572, 4294901760
        %v574 = vsub.f32 %v572, %v573
        %v575 = vand.u32 %v574, 4294901760
        %576 = vmatpush1.msra.mxu0 %v575
        %577 = vmatprep.subr.mxu0 0.0
        %v578 = vand.u32 %v254, 4294901760
        %v579 = vsub.f32 %v254, %v578
        %v580 = vand.u32 %v579, 4294901760
        %v581 = vsub.f32 %v579, %v580
        %v582 = vand.u32 %v581, 4294901760
        %583 = vmatpush1.msra.mxu0 %v582
        %584 = vmatprep.subr.mxu0 0.0
        %v585 = vand.u32 %v255, 4294901760
        %v586 = vsub.f32 %v255, %v585
        %v587 = vand.u32 %v586, 4294901760
        %v588 = vsub.f32 %v586, %v587
        %v589 = vand.u32 %v588, 4294901760
        %590 = vmatpush1.msra.mxu0 %v589
        %591 = vmatprep.subr.mxu0 0.0
        %v592 = vand.u32 %v256, 4294901760
        %v593 = vsub.f32 %v256, %v592
        %v594 = vand.u32 %v593, 4294901760
        %v595 = vsub.f32 %v593, %v594
        %v596 = vand.u32 %v595, 4294901760
        %597 = vmatpush1.msra.mxu0 %v596
        %598 = vmatprep.subr.mxu0 0.0
        %v599 = vand.u32 %v257, 4294901760
        %v600 = vsub.f32 %v257, %v599
        %v601 = vand.u32 %v600, 4294901760
        %v602 = vsub.f32 %v600, %v601
        %v603 = vand.u32 %v602, 4294901760
        %604 = vmatpush1.msra.mxu0 %v603
        %605 = vmatprep.subr.mxu0 0.0
        %v606 = vand.u32 %v258, 4294901760
        %v607 = vsub.f32 %v258, %v606
        %v608 = vand.u32 %v607, 4294901760
        %v609 = vsub.f32 %v607, %v608
        %v610 = vand.u32 %v609, 4294901760
        %611 = vmatpush1.msra.mxu0 %v610
        %612 = vmatprep.subr.mxu0 0.0
        %613 = vmatpush1.msra.mxu0 0.0
        %614 = vmatprep.subr.mxu0 0.0
        %615 = vmatpush1.msra.mxu0 0.0
        %616 = vmatprep.subr.mxu0 0.0
        %617 = vmatpush1.msra.mxu0 0.0
        %618 = vmatprep.subr.mxu0 0.0
        %619 = vmatpush1.msra.mxu0 0.0
        %620 = vmatprep.subr.mxu0 0.0
        %621 = vmatpush1.msra.mxu0 0.0
        %622 = vmatprep.subr.mxu0 0.0
        %623 = vmatpush1.msra.mxu0 0.0
        %624 = vmatprep.subr.mxu0 0.0
        %625 = vmatpush1.msra.mxu0 0.0
        %626 = vmatprep.subr.mxu0 0.0
        %627 = vmatpush1.msra.mxu0 0.0
        %628 = vmatprep.subr.mxu0 0.0
        %629 = vmatpush1.msra.mxu0 0.0
        %630 = vmatprep.subr.mxu0 0.0
        %631 = vmatpush1.msra.mxu0 0.0
        %632 = vmatprep.subr.mxu0 0.0
        %633 = vmatpush1.msra.mxu0 0.0
        %634 = vmatprep.subr.mxu0 0.0
        %635 = vmatpush1.msra.mxu0 0.0
        %636 = vmatprep.subr.mxu0 0.0
        %637 = vmatpush1.msra.mxu0 0.0
        %638 = vmatprep.subr.mxu0 0.0
        %639 = vmatpush1.msra.mxu0 0.0
        %640 = vmatprep.subr.mxu0 0.0
        %641 = vmatpush1.msra.mxu0 0.0
        %642 = vmatprep.subr.mxu0 0.0
        %643 = vmatpush1.msra.mxu0 0.0
        %644 = vmatprep.mubr.f32.mxu0 0.0
        %v645 = vand.u32 %v227, 4294901760
        %646 = vmatmul.mubr.f32.gmra.mrb[0].mxu0 %v645
        %v647 = vpop.f32.mrb[0].mxu0
        %v648 = vadd.f32 %v347, %v647
        %v649 = vpop.f32.mrb[0].mxu0
        %650 = vmatprep.mubr.f32.mxu0 0.0
        %v651 = vand.u32 %v228, 4294901760
        %652 = vmatmul.mubr.f32.gmra.mrb[0].mxu0 %v651
        %v653 = vpop.f32.mrb[0].mxu0
        %v654 = vadd.f32 %v357, %v653
        %v655 = vpop.f32.mrb[0].mxu0
        %656 = vmatprep.mubr.f32.mxu0 0.0
        %v657 = vand.u32 %v229, 4294901760
        %658 = vmatmul.mubr.f32.gmra.mrb[0].mxu0 %v657
        %v659 = vpop.f32.mrb[0].mxu0
        %v660 = vadd.f32 %v367, %v659
        %v661 = vpop.f32.mrb[0].mxu0
        %662 = vmatprep.mubr.f32.mxu0 0.0
        %v663 = vand.u32 %v230, 4294901760
        %664 = vmatmul.mubr.f32.gmra.mrb[0].mxu0 %v663
        %v665 = vpop.f32.mrb[0].mxu0
        %v666 = vadd.f32 %v377, %v665
        %v667 = vpop.f32.mrb[0].mxu0
        %668 = vmatprep.mubr.f32.mxu0 0.0
        %v669 = vand.u32 %v231, 4294901760
        %670 = vmatmul.mubr.f32.gmra.mrb[0].mxu0 %v669
        %v671 = vpop.f32.mrb[0].mxu0
        %v672 = vadd.f32 %v387, %v671
        %v673 = vpop.f32.mrb[0].mxu0
        %674 = vmatprep.mubr.f32.mxu0 0.0
        %v675 = vand.u32 %v232, 4294901760
        %676 = vmatmul.mubr.f32.gmra.mrb[0].mxu0 %v675
        %v677 = vpop.f32.mrb[0].mxu0
        %v678 = vadd.f32 %v397, %v677
        %v679 = vpop.f32.mrb[0].mxu0
        %680 = vmatprep.mubr.f32.mxu0 0.0
        %v681 = vand.u32 %v233, 4294901760
        %682 = vmatmul.mubr.f32.gmra.mrb[0].mxu0 %v681
        %v683 = vpop.f32.mrb[0].mxu0
        %v684 = vadd.f32 %v407, %v683
        %v685 = vpop.f32.mrb[0].mxu0
        %686 = vmatprep.mubr.f32.mxu0 0.0
        %v687 = vand.u32 %v234, 4294901760
        %688 = vmatmul.mubr.f32.gmra.mrb[0].mxu0 %v687
        %v689 = vpop.f32.mrb[0].mxu0
        %v690 = vadd.f32 %v417, %v689
        %v691 = vpop.f32.mrb[0].mxu0
        %692 = vmatprep.mubr.f32.mxu0 0.0
        %v693 = vand.u32 %v235, 4294901760
        %694 = vmatmul.mubr.f32.gmra.mrb[0].mxu0 %v693
        %v695 = vpop.f32.mrb[0].mxu0
        %v696 = vadd.f32 %v427, %v695
        %v697 = vpop.f32.mrb[0].mxu0
        %698 = vmatprep.mubr.f32.mxu0 0.0
        %v699 = vand.u32 %v236, 4294901760
        %700 = vmatmul.mubr.f32.gmra.mrb[0].mxu0 %v699
        %v701 = vpop.f32.mrb[0].mxu0
        %v702 = vadd.f32 %v437, %v701
        %v703 = vpop.f32.mrb[0].mxu0
        %704 = vmatprep.mubr.f32.mxu0 0.0
        %v705 = vand.u32 %v237, 4294901760
        %706 = vmatmul.mubr.f32.gmra.mrb[0].mxu0 %v705
        %v707 = vpop.f32.mrb[0].mxu0
        %v708 = vadd.f32 %v447, %v707
        %v709 = vpop.f32.mrb[0].mxu0
        %710 = vmatprep.mubr.f32.mxu0 0.0
        %v711 = vand.u32 %v238, 4294901760
        %712 = vmatmul.mubr.f32.gmra.mrb[0].mxu0 %v711
        %v713 = vpop.f32.mrb[0].mxu0
        %v714 = vadd.f32 %v457, %v713
        %v715 = vpop.f32.mrb[0].mxu0
        %716 = vmatprep.mubr.f32.mxu0 0.0
        %v717 = vand.u32 %v239, 4294901760
        %718 = vmatmul.mubr.f32.gmra.mrb[0].mxu0 %v717
        %v719 = vpop.f32.mrb[0].mxu0
        %v720 = vadd.f32 %v467, %v719
        %v721 = vpop.f32.mrb[0].mxu0
        %722 = vmatprep.mubr.f32.mxu0 0.0
        %v723 = vand.u32 %v240, 4294901760
        %724 = vmatmul.mubr.f32.gmra.mrb[0].mxu0 %v723
        %v725 = vpop.f32.mrb[0].mxu0
        %v726 = vadd.f32 %v477, %v725
        %v727 = vpop.f32.mrb[0].mxu0
        %728 = vmatprep.mubr.f32.mxu0 0.0
        %v729 = vand.u32 %v241, 4294901760
        %730 = vmatmul.mubr.f32.gmra.mrb[0].mxu0 %v729
        %v731 = vpop.f32.mrb[0].mxu0
        %v732 = vadd.f32 %v487, %v731
        %v733 = vpop.f32.mrb[0].mxu0
        %734 = vmatprep.mubr.f32.mxu0 0.0
        %v735 = vand.u32 %v242, 4294901760
        %736 = vmatmul.mubr.f32.gmra.mrb[0].mxu0 %v735
        %v737 = vpop.f32.mrb[0].mxu0
        %v738 = vadd.f32 %v497, %v737
        %v739 = vpop.f32.mrb[0].mxu0
        %740 = vdwg.mxu0
        %741 = vmatprep.subr.mxu0 0.0
        %v742 = vand.u32 %v243, 4294901760
        %v743 = vsub.f32 %v243, %v742
        %744 = vmatpush1.msra.mxu0 %v743
        %745 = vmatprep.subr.mxu0 0.0
        %v746 = vand.u32 %v244, 4294901760
        %v747 = vsub.f32 %v244, %v746
        %748 = vmatpush1.msra.mxu0 %v747
        %749 = vmatprep.subr.mxu0 0.0
        %v750 = vand.u32 %v245, 4294901760
        %v751 = vsub.f32 %v245, %v750
        %752 = vmatpush1.msra.mxu0 %v751
        %753 = vmatprep.subr.mxu0 0.0
        %v754 = vand.u32 %v246, 4294901760
        %v755 = vsub.f32 %v246, %v754
        %756 = vmatpush1.msra.mxu0 %v755
        %757 = vmatprep.subr.mxu0 0.0
        %v758 = vand.u32 %v247, 4294901760
        %v759 = vsub.f32 %v247, %v758
        %760 = vmatpush1.msra.mxu0 %v759
        %761 = vmatprep.subr.mxu0 0.0
        %v762 = vand.u32 %v248, 4294901760
        %v763 = vsub.f32 %v248, %v762
        %764 = vmatpush1.msra.mxu0 %v763
        %765 = vmatprep.subr.mxu0 0.0
        %v766 = vand.u32 %v249, 4294901760
        %v767 = vsub.f32 %v249, %v766
        %768 = vmatpush1.msra.mxu0 %v767
        %769 = vmatprep.subr.mxu0 0.0
        %v770 = vand.u32 %v250, 4294901760
        %v771 = vsub.f32 %v250, %v770
        %772 = vmatpush1.msra.mxu0 %v771
        %773 = vmatprep.subr.mxu0 0.0
        %v774 = vand.u32 %v251, 4294901760
        %v775 = vsub.f32 %v251, %v774
        %776 = vmatpush1.msra.mxu0 %v775
        %777 = vmatprep.subr.mxu0 0.0
        %v778 = vand.u32 %v252, 4294901760
        %v779 = vsub.f32 %v252, %v778
        %780 = vmatpush1.msra.mxu0 %v779
        %781 = vmatprep.subr.mxu0 0.0
        %v782 = vand.u32 %v253, 4294901760
        %v783 = vsub.f32 %v253, %v782
        %784 = vmatpush1.msra.mxu0 %v783
        %785 = vmatprep.subr.mxu0 0.0
        %v786 = vand.u32 %v254, 4294901760
        %v787 = vsub.f32 %v254, %v786
        %788 = vmatpush1.msra.mxu0 %v787
        %789 = vmatprep.subr.mxu0 0.0
        %v790 = vand.u32 %v255, 4294901760
        %v791 = vsub.f32 %v255, %v790
        %792 = vmatpush1.msra.mxu0 %v791
        %793 = vmatprep.subr.mxu0 0.0
        %v794 = vand.u32 %v256, 4294901760
        %v795 = vsub.f32 %v256, %v794
        %796 = vmatpush1.msra.mxu0 %v795
        %797 = vmatprep.subr.mxu0 0.0
        %v798 = vand.u32 %v257, 4294901760
        %v799 = vsub.f32 %v257, %v798
        %800 = vmatpush1.msra.mxu0 %v799
        %801 = vmatprep.subr.mxu0 0.0
        %v802 = vand.u32 %v258, 4294901760
        %v803 = vsub.f32 %v258, %v802
        %804 = vmatpush1.msra.mxu0 %v803
        %805 = vmatprep.subr.mxu0 0.0
        %806 = vmatpush1.msra.mxu0 0.0
        %807 = vmatprep.subr.mxu0 0.0
        %808 = vmatpush1.msra.mxu0 0.0
        %809 = vmatprep.subr.mxu0 0.0
        %810 = vmatpush1.msra.mxu0 0.0
        %811 = vmatprep.subr.mxu0 0.0
        %812 = vmatpush1.msra.mxu0 0.0
        %813 = vmatprep.subr.mxu0 0.0
        %814 = vmatpush1.msra.mxu0 0.0
        %815 = vmatprep.subr.mxu0 0.0
        %816 = vmatpush1.msra.mxu0 0.0
        %817 = vmatprep.subr.mxu0 0.0
        %818 = vmatpush1.msra.mxu0 0.0
        %819 = vmatprep.subr.mxu0 0.0
        %820 = vmatpush1.msra.mxu0 0.0
        %821 = vmatprep.subr.mxu0 0.0
        %822 = vmatpush1.msra.mxu0 0.0
        %823 = vmatprep.subr.mxu0 0.0
        %824 = vmatpush1.msra.mxu0 0.0
        %825 = vmatprep.subr.mxu0 0.0
        %826 = vmatpush1.msra.mxu0 0.0
        %827 = vmatprep.subr.mxu0 0.0
        %828 = vmatpush1.msra.mxu0 0.0
        %829 = vmatprep.subr.mxu0 0.0
        %830 = vmatpush1.msra.mxu0 0.0
        %831 = vmatprep.subr.mxu0 0.0
        %832 = vmatpush1.msra.mxu0 0.0
        %833 = vmatprep.subr.mxu0 0.0
        %834 = vmatpush1.msra.mxu0 0.0
        %835 = vmatprep.subr.mxu0 0.0
        %836 = vmatpush1.msra.mxu0 0.0
        %837 = vmatprep.mubr.f32.mxu0 0.0
        %v838 = vand.u32 %v227, 4294901760
        %v839 = vsub.f32 %v227, %v838
        %840 = vmatmul.mubr.f32.gmra.mrb[0].mxu0 %v839
        %v841 = vpop.f32.mrb[0].mxu0
        %v842 = vadd.f32 %v648, %v841
        %v843 = vpop.f32.mrb[0].mxu0
        %844 = vmatprep.mubr.f32.mxu0 0.0
        %v845 = vand.u32 %v228, 4294901760
        %v846 = vsub.f32 %v228, %v845
        %847 = vmatmul.mubr.f32.gmra.mrb[0].mxu0 %v846
        %v848 = vpop.f32.mrb[0].mxu0
        %v849 = vadd.f32 %v654, %v848
        %v850 = vpop.f32.mrb[0].mxu0
        %851 = vmatprep.mubr.f32.mxu0 0.0
        %v852 = vand.u32 %v229, 4294901760
        %v853 = vsub.f32 %v229, %v852
        %854 = vmatmul.mubr.f32.gmra.mrb[0].mxu0 %v853
        %v855 = vpop.f32.mrb[0].mxu0
        %v856 = vadd.f32 %v660, %v855
        %v857 = vpop.f32.mrb[0].mxu0
        %858 = vmatprep.mubr.f32.mxu0 0.0
        %v859 = vand.u32 %v230, 4294901760
        %v860 = vsub.f32 %v230, %v859
        %861 = vmatmul.mubr.f32.gmra.mrb[0].mxu0 %v860
        %v862 = vpop.f32.mrb[0].mxu0
        %v863 = vadd.f32 %v666, %v862
        %v864 = vpop.f32.mrb[0].mxu0
        %865 = vmatprep.mubr.f32.mxu0 0.0
        %v866 = vand.u32 %v231, 4294901760
        %v867 = vsub.f32 %v231, %v866
        %868 = vmatmul.mubr.f32.gmra.mrb[0].mxu0 %v867
        %v869 = vpop.f32.mrb[0].mxu0
        %v870 = vadd.f32 %v672, %v869
        %v871 = vpop.f32.mrb[0].mxu0
        %872 = vmatprep.mubr.f32.mxu0 0.0
        %v873 = vand.u32 %v232, 4294901760
        %v874 = vsub.f32 %v232, %v873
        %875 = vmatmul.mubr.f32.gmra.mrb[0].mxu0 %v874
        %v876 = vpop.f32.mrb[0].mxu0
        %v877 = vadd.f32 %v678, %v876
        %v878 = vpop.f32.mrb[0].mxu0
        %879 = vmatprep.mubr.f32.mxu0 0.0
        %v880 = vand.u32 %v233, 4294901760
        %v881 = vsub.f32 %v233, %v880
        %882 = vmatmul.mubr.f32.gmra.mrb[0].mxu0 %v881
        %v883 = vpop.f32.mrb[0].mxu0
        %v884 = vadd.f32 %v684, %v883
        %v885 = vpop.f32.mrb[0].mxu0
        %886 = vmatprep.mubr.f32.mxu0 0.0
        %v887 = vand.u32 %v234, 4294901760
        %v888 = vsub.f32 %v234, %v887
        %889 = vmatmul.mubr.f32.gmra.mrb[0].mxu0 %v888
        %v890 = vpop.f32.mrb[0].mxu0
        %v891 = vadd.f32 %v690, %v890
        %v892 = vpop.f32.mrb[0].mxu0
        %893 = vmatprep.mubr.f32.mxu0 0.0
        %v894 = vand.u32 %v235, 4294901760
        %v895 = vsub.f32 %v235, %v894
        %896 = vmatmul.mubr.f32.gmra.mrb[0].mxu0 %v895
        %v897 = vpop.f32.mrb[0].mxu0
        %v898 = vadd.f32 %v696, %v897
        %v899 = vpop.f32.mrb[0].mxu0
        %900 = vmatprep.mubr.f32.mxu0 0.0
        %v901 = vand.u32 %v236, 4294901760
        %v902 = vsub.f32 %v236, %v901
        %903 = vmatmul.mubr.f32.gmra.mrb[0].mxu0 %v902
        %v904 = vpop.f32.mrb[0].mxu0
        %v905 = vadd.f32 %v702, %v904
        %v906 = vpop.f32.mrb[0].mxu0
        %907 = vmatprep.mubr.f32.mxu0 0.0
        %v908 = vand.u32 %v237, 4294901760
        %v909 = vsub.f32 %v237, %v908
        %910 = vmatmul.mubr.f32.gmra.mrb[0].mxu0 %v909
        %v911 = vpop.f32.mrb[0].mxu0
        %v912 = vadd.f32 %v708, %v911
        %v913 = vpop.f32.mrb[0].mxu0
        %914 = vmatprep.mubr.f32.mxu0 0.0
        %v915 = vand.u32 %v238, 4294901760
        %v916 = vsub.f32 %v238, %v915
        %917 = vmatmul.mubr.f32.gmra.mrb[0].mxu0 %v916
        %v918 = vpop.f32.mrb[0].mxu0
        %v919 = vadd.f32 %v714, %v918
        %v920 = vpop.f32.mrb[0].mxu0
        %921 = vmatprep.mubr.f32.mxu0 0.0
        %v922 = vand.u32 %v239, 4294901760
        %v923 = vsub.f32 %v239, %v922
        %924 = vmatmul.mubr.f32.gmra.mrb[0].mxu0 %v923
        %v925 = vpop.f32.mrb[0].mxu0
        %v926 = vadd.f32 %v720, %v925
        %v927 = vpop.f32.mrb[0].mxu0
        %928 = vmatprep.mubr.f32.mxu0 0.0
        %v929 = vand.u32 %v240, 4294901760
        %v930 = vsub.f32 %v240, %v929
        %931 = vmatmul.mubr.f32.gmra.mrb[0].mxu0 %v930
        %v932 = vpop.f32.mrb[0].mxu0
        %v933 = vadd.f32 %v726, %v932
        %v934 = vpop.f32.mrb[0].mxu0
        %935 = vmatprep.mubr.f32.mxu0 0.0
        %v936 = vand.u32 %v241, 4294901760
        %v937 = vsub.f32 %v241, %v936
        %938 = vmatmul.mubr.f32.gmra.mrb[0].mxu0 %v937
        %v939 = vpop.f32.mrb[0].mxu0
        %v940 = vadd.f32 %v732, %v939
        %v941 = vpop.f32.mrb[0].mxu0
        %942 = vmatprep.mubr.f32.mxu0 0.0
        %v943 = vand.u32 %v242, 4294901760
        %v944 = vsub.f32 %v242, %v943
        %945 = vmatmul.mubr.f32.gmra.mrb[0].mxu0 %v944
        %v946 = vpop.f32.mrb[0].mxu0
        %v947 = vadd.f32 %v738, %v946
        %v948 = vpop.f32.mrb[0].mxu0
        %949 = vdwg.mxu0
        %950 = vmatprep.subr.mxu0 0.0
        %v951 = vand.u32 %v243, 4294901760
        %952 = vmatpush1.msra.mxu0 %v951
        %953 = vmatprep.subr.mxu0 0.0
        %v954 = vand.u32 %v244, 4294901760
        %955 = vmatpush1.msra.mxu0 %v954
        %956 = vmatprep.subr.mxu0 0.0
        %v957 = vand.u32 %v245, 4294901760
        %958 = vmatpush1.msra.mxu0 %v957
        %959 = vmatprep.subr.mxu0 0.0
        %v960 = vand.u32 %v246, 4294901760
        %961 = vmatpush1.msra.mxu0 %v960
        %962 = vmatprep.subr.mxu0 0.0
        %v963 = vand.u32 %v247, 4294901760
        %964 = vmatpush1.msra.mxu0 %v963
        %965 = vmatprep.subr.mxu0 0.0
        %v966 = vand.u32 %v248, 4294901760
        %967 = vmatpush1.msra.mxu0 %v966
        %968 = vmatprep.subr.mxu0 0.0
        %v969 = vand.u32 %v249, 4294901760
        %970 = vmatpush1.msra.mxu0 %v969
        %971 = vmatprep.subr.mxu0 0.0
        %v972 = vand.u32 %v250, 4294901760
        %973 = vmatpush1.msra.mxu0 %v972
        %974 = vmatprep.subr.mxu0 0.0
        %v975 = vand.u32 %v251, 4294901760
        %976 = vmatpush1.msra.mxu0 %v975
        %977 = vmatprep.subr.mxu0 0.0
        %v978 = vand.u32 %v252, 4294901760
        %979 = vmatpush1.msra.mxu0 %v978
        %980 = vmatprep.subr.mxu0 0.0
        %v981 = vand.u32 %v253, 4294901760
        %982 = vmatpush1.msra.mxu0 %v981
        %983 = vmatprep.subr.mxu0 0.0
        %v984 = vand.u32 %v254, 4294901760
        %985 = vmatpush1.msra.mxu0 %v984
        %986 = vmatprep.subr.mxu0 0.0
        %v987 = vand.u32 %v255, 4294901760
        %988 = vmatpush1.msra.mxu0 %v987
        %989 = vmatprep.subr.mxu0 0.0
        %v990 = vand.u32 %v256, 4294901760
        %991 = vmatpush1.msra.mxu0 %v990
        %992 = vmatprep.subr.mxu0 0.0
        %v993 = vand.u32 %v257, 4294901760
        %994 = vmatpush1.msra.mxu0 %v993
        %995 = vmatprep.subr.mxu0 0.0
        %v996 = vand.u32 %v258, 4294901760
        %997 = vmatpush1.msra.mxu0 %v996
        %998 = vmatprep.subr.mxu0 0.0
        %999 = vmatpush1.msra.mxu0 0.0
        %1000 = vmatprep.subr.mxu0 0.0
        %1001 = vmatpush1.msra.mxu0 0.0
        %1002 = vmatprep.subr.mxu0 0.0
        %1003 = vmatpush1.msra.mxu0 0.0
        %1004 = vmatprep.subr.mxu0 0.0
        %1005 = vmatpush1.msra.mxu0 0.0
        %1006 = vmatprep.subr.mxu0 0.0
        %1007 = vmatpush1.msra.mxu0 0.0
        %1008 = vmatprep.subr.mxu0 0.0
        %1009 = vmatpush1.msra.mxu0 0.0
        %1010 = vmatprep.subr.mxu0 0.0
        %1011 = vmatpush1.msra.mxu0 0.0
        %1012 = vmatprep.subr.mxu0 0.0
        %1013 = vmatpush1.msra.mxu0 0.0
        %1014 = vmatprep.subr.mxu0 0.0
        %1015 = vmatpush1.msra.mxu0 0.0
        %1016 = vmatprep.subr.mxu0 0.0
        %1017 = vmatpush1.msra.mxu0 0.0
        %1018 = vmatprep.subr.mxu0 0.0
        %1019 = vmatpush1.msra.mxu0 0.0
        %1020 = vmatprep.subr.mxu0 0.0
        %1021 = vmatpush1.msra.mxu0 0.0
        %1022 = vmatprep.subr.mxu0 0.0
        %1023 = vmatpush1.msra.mxu0 0.0
        %1024 = vmatprep.subr.mxu0 0.0
        %1025 = vmatpush1.msra.mxu0 0.0
        %1026 = vmatprep.subr.mxu0 0.0
        %1027 = vmatpush1.msra.mxu0 0.0
        %1028 = vmatprep.subr.mxu0 0.0
        %1029 = vmatpush1.msra.mxu0 0.0
        %1030 = vmatprep.mubr.f32.mxu0 0.0
        %v1031 = vand.u32 %v227, 4294901760
        %v1032 = vsub.f32 %v227, %v1031
        %v1033 = vand.u32 %v1032, 4294901760
        %1034 = vmatmul.mubr.f32.gmra.mrb[0].mxu0 %v1033
        %v1035 = vpop.f32.mrb[0].mxu0
        %v1036 = vadd.f32 %v842, %v1035
        %v1037 = vpop.f32.mrb[0].mxu0
        %1038 = vmatprep.mubr.f32.mxu0 0.0
        %v1039 = vand.u32 %v228, 4294901760
        %v1040 = vsub.f32 %v228, %v1039
        %v1041 = vand.u32 %v1040, 4294901760
        %1042 = vmatmul.mubr.f32.gmra.mrb[0].mxu0 %v1041
        %v1043 = vpop.f32.mrb[0].mxu0
        %v1044 = vadd.f32 %v849, %v1043
        %v1045 = vpop.f32.mrb[0].mxu0
        %1046 = vmatprep.mubr.f32.mxu0 0.0
        %v1047 = vand.u32 %v229, 4294901760
        %v1048 = vsub.f32 %v229, %v1047
        %v1049 = vand.u32 %v1048, 4294901760
        %1050 = vmatmul.mubr.f32.gmra.mrb[0].mxu0 %v1049
        %v1051 = vpop.f32.mrb[0].mxu0
        %v1052 = vadd.f32 %v856, %v1051
        %v1053 = vpop.f32.mrb[0].mxu0
        %1054 = vmatprep.mubr.f32.mxu0 0.0
        %v1055 = vand.u32 %v230, 4294901760
        %v1056 = vsub.f32 %v230, %v1055
        %v1057 = vand.u32 %v1056, 4294901760
        %1058 = vmatmul.mubr.f32.gmra.mrb[0].mxu0 %v1057
        %v1059 = vpop.f32.mrb[0].mxu0
        %v1060 = vadd.f32 %v863, %v1059
        %v1061 = vpop.f32.mrb[0].mxu0
        %1062 = vmatprep.mubr.f32.mxu0 0.0
        %v1063 = vand.u32 %v231, 4294901760
        %v1064 = vsub.f32 %v231, %v1063
        %v1065 = vand.u32 %v1064, 4294901760
        %1066 = vmatmul.mubr.f32.gmra.mrb[0].mxu0 %v1065
        %v1067 = vpop.f32.mrb[0].mxu0
        %v1068 = vadd.f32 %v870, %v1067
        %v1069 = vpop.f32.mrb[0].mxu0
        %1070 = vmatprep.mubr.f32.mxu0 0.0
        %v1071 = vand.u32 %v232, 4294901760
        %v1072 = vsub.f32 %v232, %v1071
        %v1073 = vand.u32 %v1072, 4294901760
        %1074 = vmatmul.mubr.f32.gmra.mrb[0].mxu0 %v1073
        %v1075 = vpop.f32.mrb[0].mxu0
        %v1076 = vadd.f32 %v877, %v1075
        %v1077 = vpop.f32.mrb[0].mxu0
        %1078 = vmatprep.mubr.f32.mxu0 0.0
        %v1079 = vand.u32 %v233, 4294901760
        %v1080 = vsub.f32 %v233, %v1079
        %v1081 = vand.u32 %v1080, 4294901760
        %1082 = vmatmul.mubr.f32.gmra.mrb[0].mxu0 %v1081
        %v1083 = vpop.f32.mrb[0].mxu0
        %v1084 = vadd.f32 %v884, %v1083
        %v1085 = vpop.f32.mrb[0].mxu0
        %1086 = vmatprep.mubr.f32.mxu0 0.0
        %v1087 = vand.u32 %v234, 4294901760
        %v1088 = vsub.f32 %v234, %v1087
        %v1089 = vand.u32 %v1088, 4294901760
        %1090 = vmatmul.mubr.f32.gmra.mrb[0].mxu0 %v1089
        %v1091 = vpop.f32.mrb[0].mxu0
        %v1092 = vadd.f32 %v891, %v1091
        %v1093 = vpop.f32.mrb[0].mxu0
        %1094 = vmatprep.mubr.f32.mxu0 0.0
        %v1095 = vand.u32 %v235, 4294901760
        %v1096 = vsub.f32 %v235, %v1095
        %v1097 = vand.u32 %v1096, 4294901760
        %1098 = vmatmul.mubr.f32.gmra.mrb[0].mxu0 %v1097
        %v1099 = vpop.f32.mrb[0].mxu0
        %v1100 = vadd.f32 %v898, %v1099
        %v1101 = vpop.f32.mrb[0].mxu0
        %1102 = vmatprep.mubr.f32.mxu0 0.0
        %v1103 = vand.u32 %v236, 4294901760
        %v1104 = vsub.f32 %v236, %v1103
        %v1105 = vand.u32 %v1104, 4294901760
        %1106 = vmatmul.mubr.f32.gmra.mrb[0].mxu0 %v1105
        %v1107 = vpop.f32.mrb[0].mxu0
        %v1108 = vadd.f32 %v905, %v1107
        %v1109 = vpop.f32.mrb[0].mxu0
        %1110 = vmatprep.mubr.f32.mxu0 0.0
        %v1111 = vand.u32 %v237, 4294901760
        %v1112 = vsub.f32 %v237, %v1111
        %v1113 = vand.u32 %v1112, 4294901760
        %1114 = vmatmul.mubr.f32.gmra.mrb[0].mxu0 %v1113
        %v1115 = vpop.f32.mrb[0].mxu0
        %v1116 = vadd.f32 %v912, %v1115
        %v1117 = vpop.f32.mrb[0].mxu0
        %1118 = vmatprep.mubr.f32.mxu0 0.0
        %v1119 = vand.u32 %v238, 4294901760
        %v1120 = vsub.f32 %v238, %v1119
        %v1121 = vand.u32 %v1120, 4294901760
        %1122 = vmatmul.mubr.f32.gmra.mrb[0].mxu0 %v1121
        %v1123 = vpop.f32.mrb[0].mxu0
        %v1124 = vadd.f32 %v919, %v1123
        %v1125 = vpop.f32.mrb[0].mxu0
        %1126 = vmatprep.mubr.f32.mxu0 0.0
        %v1127 = vand.u32 %v239, 4294901760
        %v1128 = vsub.f32 %v239, %v1127
        %v1129 = vand.u32 %v1128, 4294901760
        %1130 = vmatmul.mubr.f32.gmra.mrb[0].mxu0 %v1129
        %v1131 = vpop.f32.mrb[0].mxu0
        %v1132 = vadd.f32 %v926, %v1131
        %v1133 = vpop.f32.mrb[0].mxu0
        %1134 = vmatprep.mubr.f32.mxu0 0.0
        %v1135 = vand.u32 %v240, 4294901760
        %v1136 = vsub.f32 %v240, %v1135
        %v1137 = vand.u32 %v1136, 4294901760
        %1138 = vmatmul.mubr.f32.gmra.mrb[0].mxu0 %v1137
        %v1139 = vpop.f32.mrb[0].mxu0
        %v1140 = vadd.f32 %v933, %v1139
        %v1141 = vpop.f32.mrb[0].mxu0
        %1142 = vmatprep.mubr.f32.mxu0 0.0
        %v1143 = vand.u32 %v241, 4294901760
        %v1144 = vsub.f32 %v241, %v1143
        %v1145 = vand.u32 %v1144, 4294901760
        %1146 = vmatmul.mubr.f32.gmra.mrb[0].mxu0 %v1145
        %v1147 = vpop.f32.mrb[0].mxu0
        %v1148 = vadd.f32 %v940, %v1147
        %v1149 = vpop.f32.mrb[0].mxu0
        %1150 = vmatprep.mubr.f32.mxu0 0.0
        %v1151 = vand.u32 %v242, 4294901760
        %v1152 = vsub.f32 %v242, %v1151
        %v1153 = vand.u32 %v1152, 4294901760
        %1154 = vmatmul.mubr.f32.gmra.mrb[0].mxu0 %v1153
        %v1155 = vpop.f32.mrb[0].mxu0
        %v1156 = vadd.f32 %v947, %v1155
        %v1157 = vpop.f32.mrb[0].mxu0
        %1158 = vdwg.mxu0
        %1159 = vmatprep.subr.mxu0 0.0
        %v1160 = vand.u32 %v243, 4294901760
        %v1161 = vsub.f32 %v243, %v1160
        %v1162 = vand.u32 %v1161, 4294901760
        %1163 = vmatpush1.msra.mxu0 %v1162
        %1164 = vmatprep.subr.mxu0 0.0
        %v1165 = vand.u32 %v244, 4294901760
        %v1166 = vsub.f32 %v244, %v1165
        %v1167 = vand.u32 %v1166, 4294901760
        %1168 = vmatpush1.msra.mxu0 %v1167
        %1169 = vmatprep.subr.mxu0 0.0
        %v1170 = vand.u32 %v245, 4294901760
        %v1171 = vsub.f32 %v245, %v1170
        %v1172 = vand.u32 %v1171, 4294901760
        %1173 = vmatpush1.msra.mxu0 %v1172
        %1174 = vmatprep.subr.mxu0 0.0
        %v1175 = vand.u32 %v246, 4294901760
        %v1176 = vsub.f32 %v246, %v1175
        %v1177 = vand.u32 %v1176, 4294901760
        %1178 = vmatpush1.msra.mxu0 %v1177
        %1179 = vmatprep.subr.mxu0 0.0
        %v1180 = vand.u32 %v247, 4294901760
        %v1181 = vsub.f32 %v247, %v1180
        %v1182 = vand.u32 %v1181, 4294901760
        %1183 = vmatpush1.msra.mxu0 %v1182
        %1184 = vmatprep.subr.mxu0 0.0
        %v1185 = vand.u32 %v248, 4294901760
        %v1186 = vsub.f32 %v248, %v1185
        %v1187 = vand.u32 %v1186, 4294901760
        %1188 = vmatpush1.msra.mxu0 %v1187
        %1189 = vmatprep.subr.mxu0 0.0
        %v1190 = vand.u32 %v249, 4294901760
        %v1191 = vsub.f32 %v249, %v1190
        %v1192 = vand.u32 %v1191, 4294901760
        %1193 = vmatpush1.msra.mxu0 %v1192
        %1194 = vmatprep.subr.mxu0 0.0
        %v1195 = vand.u32 %v250, 4294901760
        %v1196 = vsub.f32 %v250, %v1195
        %v1197 = vand.u32 %v1196, 4294901760
        %1198 = vmatpush1.msra.mxu0 %v1197
        %1199 = vmatprep.subr.mxu0 0.0
        %v1200 = vand.u32 %v251, 4294901760
        %v1201 = vsub.f32 %v251, %v1200
        %v1202 = vand.u32 %v1201, 4294901760
        %1203 = vmatpush1.msra.mxu0 %v1202
        %1204 = vmatprep.subr.mxu0 0.0
        %v1205 = vand.u32 %v252, 4294901760
        %v1206 = vsub.f32 %v252, %v1205
        %v1207 = vand.u32 %v1206, 4294901760
        %1208 = vmatpush1.msra.mxu0 %v1207
        %1209 = vmatprep.subr.mxu0 0.0
        %v1210 = vand.u32 %v253, 4294901760
        %v1211 = vsub.f32 %v253, %v1210
        %v1212 = vand.u32 %v1211, 4294901760
        %1213 = vmatpush1.msra.mxu0 %v1212
        %1214 = vmatprep.subr.mxu0 0.0
        %v1215 = vand.u32 %v254, 4294901760
        %v1216 = vsub.f32 %v254, %v1215
        %v1217 = vand.u32 %v1216, 4294901760
        %1218 = vmatpush1.msra.mxu0 %v1217
        %1219 = vmatprep.subr.mxu0 0.0
        %v1220 = vand.u32 %v255, 4294901760
        %v1221 = vsub.f32 %v255, %v1220
        %v1222 = vand.u32 %v1221, 4294901760
        %1223 = vmatpush1.msra.mxu0 %v1222
        %1224 = vmatprep.subr.mxu0 0.0
        %v1225 = vand.u32 %v256, 4294901760
        %v1226 = vsub.f32 %v256, %v1225
        %v1227 = vand.u32 %v1226, 4294901760
        %1228 = vmatpush1.msra.mxu0 %v1227
        %1229 = vmatprep.subr.mxu0 0.0
        %v1230 = vand.u32 %v257, 4294901760
        %v1231 = vsub.f32 %v257, %v1230
        %v1232 = vand.u32 %v1231, 4294901760
        %1233 = vmatpush1.msra.mxu0 %v1232
        %1234 = vmatprep.subr.mxu0 0.0
        %v1235 = vand.u32 %v258, 4294901760
        %v1236 = vsub.f32 %v258, %v1235
        %v1237 = vand.u32 %v1236, 4294901760
        %1238 = vmatpush1.msra.mxu0 %v1237
        %1239 = vmatprep.subr.mxu0 0.0
        %1240 = vmatpush1.msra.mxu0 0.0
        %1241 = vmatprep.subr.mxu0 0.0
        %1242 = vmatpush1.msra.mxu0 0.0
        %1243 = vmatprep.subr.mxu0 0.0
        %1244 = vmatpush1.msra.mxu0 0.0
        %1245 = vmatprep.subr.mxu0 0.0
        %1246 = vmatpush1.msra.mxu0 0.0
        %1247 = vmatprep.subr.mxu0 0.0
        %1248 = vmatpush1.msra.mxu0 0.0
        %1249 = vmatprep.subr.mxu0 0.0
        %1250 = vmatpush1.msra.mxu0 0.0
        %1251 = vmatprep.subr.mxu0 0.0
        %1252 = vmatpush1.msra.mxu0 0.0
        %1253 = vmatprep.subr.mxu0 0.0
        %1254 = vmatpush1.msra.mxu0 0.0
        %1255 = vmatprep.subr.mxu0 0.0
        %1256 = vmatpush1.msra.mxu0 0.0
        %1257 = vmatprep.subr.mxu0 0.0
        %1258 = vmatpush1.msra.mxu0 0.0
        %1259 = vmatprep.subr.mxu0 0.0
        %1260 = vmatpush1.msra.mxu0 0.0
        %1261 = vmatprep.subr.mxu0 0.0
        %1262 = vmatpush1.msra.mxu0 0.0
        %1263 = vmatprep.subr.mxu0 0.0
        %1264 = vmatpush1.msra.mxu0 0.0
        %1265 = vmatprep.subr.mxu0 0.0
        %1266 = vmatpush1.msra.mxu0 0.0
        %1267 = vmatprep.subr.mxu0 0.0
        %1268 = vmatpush1.msra.mxu0 0.0
        %1269 = vmatprep.subr.mxu0 0.0
        %1270 = vmatpush1.msra.mxu0 0.0
        %1271 = vmatprep.mubr.f32.mxu0 0.0
        %v1272 = vand.u32 %v227, 4294901760
        %1273 = vmatmul.mubr.f32.gmra.mrb[0].mxu0 %v1272
        %v1274 = vpop.f32.mrb[0].mxu0
        %v1275 = vadd.f32 %v1036, %v1274
        %v1276 = vpop.f32.mrb[0].mxu0
        %1277 = vmatprep.mubr.f32.mxu0 0.0
        %v1278 = vand.u32 %v228, 4294901760
        %1279 = vmatmul.mubr.f32.gmra.mrb[0].mxu0 %v1278
        %v1280 = vpop.f32.mrb[0].mxu0
        %v1281 = vadd.f32 %v1044, %v1280
        %v1282 = vpop.f32.mrb[0].mxu0
        %1283 = vmatprep.mubr.f32.mxu0 0.0
        %v1284 = vand.u32 %v229, 4294901760
        %1285 = vmatmul.mubr.f32.gmra.mrb[0].mxu0 %v1284
        %v1286 = vpop.f32.mrb[0].mxu0
        %v1287 = vadd.f32 %v1052, %v1286
        %v1288 = vpop.f32.mrb[0].mxu0
        %1289 = vmatprep.mubr.f32.mxu0 0.0
        %v1290 = vand.u32 %v230, 4294901760
        %1291 = vmatmul.mubr.f32.gmra.mrb[0].mxu0 %v1290
        %v1292 = vpop.f32.mrb[0].mxu0
        %v1293 = vadd.f32 %v1060, %v1292
        %v1294 = vpop.f32.mrb[0].mxu0
        %1295 = vmatprep.mubr.f32.mxu0 0.0
        %v1296 = vand.u32 %v231, 4294901760
        %1297 = vmatmul.mubr.f32.gmra.mrb[0].mxu0 %v1296
        %v1298 = vpop.f32.mrb[0].mxu0
        %v1299 = vadd.f32 %v1068, %v1298
        %v1300 = vpop.f32.mrb[0].mxu0
        %1301 = vmatprep.mubr.f32.mxu0 0.0
        %v1302 = vand.u32 %v232, 4294901760
        %1303 = vmatmul.mubr.f32.gmra.mrb[0].mxu0 %v1302
        %v1304 = vpop.f32.mrb[0].mxu0
        %v1305 = vadd.f32 %v1076, %v1304
        %v1306 = vpop.f32.mrb[0].mxu0
        %1307 = vmatprep.mubr.f32.mxu0 0.0
        %v1308 = vand.u32 %v233, 4294901760
        %1309 = vmatmul.mubr.f32.gmra.mrb[0].mxu0 %v1308
        %v1310 = vpop.f32.mrb[0].mxu0
        %v1311 = vadd.f32 %v1084, %v1310
        %v1312 = vpop.f32.mrb[0].mxu0
        %1313 = vmatprep.mubr.f32.mxu0 0.0
        %v1314 = vand.u32 %v234, 4294901760
        %1315 = vmatmul.mubr.f32.gmra.mrb[0].mxu0 %v1314
        %v1316 = vpop.f32.mrb[0].mxu0
        %v1317 = vadd.f32 %v1092, %v1316
        %v1318 = vpop.f32.mrb[0].mxu0
        %1319 = vmatprep.mubr.f32.mxu0 0.0
        %v1320 = vand.u32 %v235, 4294901760
        %1321 = vmatmul.mubr.f32.gmra.mrb[0].mxu0 %v1320
        %v1322 = vpop.f32.mrb[0].mxu0
        %v1323 = vadd.f32 %v1100, %v1322
        %v1324 = vpop.f32.mrb[0].mxu0
        %1325 = vmatprep.mubr.f32.mxu0 0.0
        %v1326 = vand.u32 %v236, 4294901760
        %1327 = vmatmul.mubr.f32.gmra.mrb[0].mxu0 %v1326
        %v1328 = vpop.f32.mrb[0].mxu0
        %v1329 = vadd.f32 %v1108, %v1328
        %v1330 = vpop.f32.mrb[0].mxu0
        %1331 = vmatprep.mubr.f32.mxu0 0.0
        %v1332 = vand.u32 %v237, 4294901760
        %1333 = vmatmul.mubr.f32.gmra.mrb[0].mxu0 %v1332
        %v1334 = vpop.f32.mrb[0].mxu0
        %v1335 = vadd.f32 %v1116, %v1334
        %v1336 = vpop.f32.mrb[0].mxu0
        %1337 = vmatprep.mubr.f32.mxu0 0.0
        %v1338 = vand.u32 %v238, 4294901760
        %1339 = vmatmul.mubr.f32.gmra.mrb[0].mxu0 %v1338
        %v1340 = vpop.f32.mrb[0].mxu0
        %v1341 = vadd.f32 %v1124, %v1340
        %v1342 = vpop.f32.mrb[0].mxu0
        %1343 = vmatprep.mubr.f32.mxu0 0.0
        %v1344 = vand.u32 %v239, 4294901760
        %1345 = vmatmul.mubr.f32.gmra.mrb[0].mxu0 %v1344
        %v1346 = vpop.f32.mrb[0].mxu0
        %v1347 = vadd.f32 %v1132, %v1346
        %v1348 = vpop.f32.mrb[0].mxu0
        %1349 = vmatprep.mubr.f32.mxu0 0.0
        %v1350 = vand.u32 %v240, 4294901760
        %1351 = vmatmul.mubr.f32.gmra.mrb[0].mxu0 %v1350
        %v1352 = vpop.f32.mrb[0].mxu0
        %v1353 = vadd.f32 %v1140, %v1352
        %v1354 = vpop.f32.mrb[0].mxu0
        %1355 = vmatprep.mubr.f32.mxu0 0.0
        %v1356 = vand.u32 %v241, 4294901760
        %1357 = vmatmul.mubr.f32.gmra.mrb[0].mxu0 %v1356
        %v1358 = vpop.f32.mrb[0].mxu0
        %v1359 = vadd.f32 %v1148, %v1358
        %v1360 = vpop.f32.mrb[0].mxu0
        %1361 = vmatprep.mubr.f32.mxu0 0.0
        %v1362 = vand.u32 %v242, 4294901760
        %1363 = vmatmul.mubr.f32.gmra.mrb[0].mxu0 %v1362
        %v1364 = vpop.f32.mrb[0].mxu0
        %v1365 = vadd.f32 %v1156, %v1364
        %v1366 = vpop.f32.mrb[0].mxu0
        %1367 = vdwg.mxu0
        %1368 = vmatprep.subr.mxu0 0.0
        %v1369 = vand.u32 %v243, 4294901760
        %1370 = vmatpush1.msra.mxu0 %v1369
        %1371 = vmatprep.subr.mxu0 0.0
        %v1372 = vand.u32 %v244, 4294901760
        %1373 = vmatpush1.msra.mxu0 %v1372
        %1374 = vmatprep.subr.mxu0 0.0
        %v1375 = vand.u32 %v245, 4294901760
        %1376 = vmatpush1.msra.mxu0 %v1375
        %1377 = vmatprep.subr.mxu0 0.0
        %v1378 = vand.u32 %v246, 4294901760
        %1379 = vmatpush1.msra.mxu0 %v1378
        %1380 = vmatprep.subr.mxu0 0.0
        %v1381 = vand.u32 %v247, 4294901760
        %1382 = vmatpush1.msra.mxu0 %v1381
        %1383 = vmatprep.subr.mxu0 0.0
        %v1384 = vand.u32 %v248, 4294901760
        %1385 = vmatpush1.msra.mxu0 %v1384
        %1386 = vmatprep.subr.mxu0 0.0
        %v1387 = vand.u32 %v249, 4294901760
        %1388 = vmatpush1.msra.mxu0 %v1387
        %1389 = vmatprep.subr.mxu0 0.0
        %v1390 = vand.u32 %v250, 4294901760
        %1391 = vmatpush1.msra.mxu0 %v1390
        %1392 = vmatprep.subr.mxu0 0.0
        %v1393 = vand.u32 %v251, 4294901760
        %1394 = vmatpush1.msra.mxu0 %v1393
        %1395 = vmatprep.subr.mxu0 0.0
        %v1396 = vand.u32 %v252, 4294901760
        %1397 = vmatpush1.msra.mxu0 %v1396
        %1398 = vmatprep.subr.mxu0 0.0
        %v1399 = vand.u32 %v253, 4294901760
        %1400 = vmatpush1.msra.mxu0 %v1399
        %1401 = vmatprep.subr.mxu0 0.0
        %v1402 = vand.u32 %v254, 4294901760
        %1403 = vmatpush1.msra.mxu0 %v1402
        %1404 = vmatprep.subr.mxu0 0.0
        %v1405 = vand.u32 %v255, 4294901760
        %1406 = vmatpush1.msra.mxu0 %v1405
        %1407 = vmatprep.subr.mxu0 0.0
        %v1408 = vand.u32 %v256, 4294901760
        %1409 = vmatpush1.msra.mxu0 %v1408
        %1410 = vmatprep.subr.mxu0 0.0
        %v1411 = vand.u32 %v257, 4294901760
        %1412 = vmatpush1.msra.mxu0 %v1411
        %1413 = vmatprep.subr.mxu0 0.0
        %v1414 = vand.u32 %v258, 4294901760
        %1415 = vmatpush1.msra.mxu0 %v1414
        %1416 = vmatprep.subr.mxu0 0.0
        %1417 = vmatpush1.msra.mxu0 0.0
        %1418 = vmatprep.subr.mxu0 0.0
        %1419 = vmatpush1.msra.mxu0 0.0
        %1420 = vmatprep.subr.mxu0 0.0
        %1421 = vmatpush1.msra.mxu0 0.0
        %1422 = vmatprep.subr.mxu0 0.0
        %1423 = vmatpush1.msra.mxu0 0.0
        %1424 = vmatprep.subr.mxu0 0.0
        %1425 = vmatpush1.msra.mxu0 0.0
        %1426 = vmatprep.subr.mxu0 0.0
        %1427 = vmatpush1.msra.mxu0 0.0
        %1428 = vmatprep.subr.mxu0 0.0
        %1429 = vmatpush1.msra.mxu0 0.0
        %1430 = vmatprep.subr.mxu0 0.0
        %1431 = vmatpush1.msra.mxu0 0.0
        %1432 = vmatprep.subr.mxu0 0.0
        %1433 = vmatpush1.msra.mxu0 0.0
        %1434 = vmatprep.subr.mxu0 0.0
        %1435 = vmatpush1.msra.mxu0 0.0
        %1436 = vmatprep.subr.mxu0 0.0
        %1437 = vmatpush1.msra.mxu0 0.0
        %1438 = vmatprep.subr.mxu0 0.0
        %1439 = vmatpush1.msra.mxu0 0.0
        %1440 = vmatprep.subr.mxu0 0.0
        %1441 = vmatpush1.msra.mxu0 0.0
        %1442 = vmatprep.subr.mxu0 0.0
        %1443 = vmatpush1.msra.mxu0 0.0
        %1444 = vmatprep.subr.mxu0 0.0
        %1445 = vmatpush1.msra.mxu0 0.0
        %1446 = vmatprep.subr.mxu0 0.0
        %1447 = vmatpush1.msra.mxu0 0.0
        %1448 = vmatprep.mubr.f32.mxu0 0.0
        %v1449 = vand.u32 %v227, 4294901760
        %1450 = vmatmul.mubr.f32.gmra.mrb[0].mxu0 %v1449
        %v1451 = vpop.f32.mrb[0].mxu0
        %v1452 = vadd.f32 %v1275, %v1451
        %v1453 = vpop.f32.mrb[0].mxu0
        %1454 = vmatprep.mubr.f32.mxu0 0.0
        %v1455 = vand.u32 %v228, 4294901760
        %1456 = vmatmul.mubr.f32.gmra.mrb[0].mxu0 %v1455
        %v1457 = vpop.f32.mrb[0].mxu0
        %v1458 = vadd.f32 %v1281, %v1457
        %v1459 = vpop.f32.mrb[0].mxu0
        %1460 = vmatprep.mubr.f32.mxu0 0.0
        %v1461 = vand.u32 %v229, 4294901760
        %1462 = vmatmul.mubr.f32.gmra.mrb[0].mxu0 %v1461
        %v1463 = vpop.f32.mrb[0].mxu0
        %v1464 = vadd.f32 %v1287, %v1463
        %v1465 = vpop.f32.mrb[0].mxu0
        %1466 = vmatprep.mubr.f32.mxu0 0.0
        %v1467 = vand.u32 %v230, 4294901760
        %1468 = vmatmul.mubr.f32.gmra.mrb[0].mxu0 %v1467
        %v1469 = vpop.f32.mrb[0].mxu0
        %v1470 = vadd.f32 %v1293, %v1469
        %v1471 = vpop.f32.mrb[0].mxu0
        %1472 = vmatprep.mubr.f32.mxu0 0.0
        %v1473 = vand.u32 %v231, 4294901760
        %1474 = vmatmul.mubr.f32.gmra.mrb[0].mxu0 %v1473
        %v1475 = vpop.f32.mrb[0].mxu0
        %v1476 = vadd.f32 %v1299, %v1475
        %v1477 = vpop.f32.mrb[0].mxu0
        %1478 = vmatprep.mubr.f32.mxu0 0.0
        %v1479 = vand.u32 %v232, 4294901760
        %1480 = vmatmul.mubr.f32.gmra.mrb[0].mxu0 %v1479
        %v1481 = vpop.f32.mrb[0].mxu0
        %v1482 = vadd.f32 %v1305, %v1481
        %v1483 = vpop.f32.mrb[0].mxu0
        %1484 = vmatprep.mubr.f32.mxu0 0.0
        %v1485 = vand.u32 %v233, 4294901760
        %1486 = vmatmul.mubr.f32.gmra.mrb[0].mxu0 %v1485
        %v1487 = vpop.f32.mrb[0].mxu0
        %v1488 = vadd.f32 %v1311, %v1487
        %v1489 = vpop.f32.mrb[0].mxu0
        %1490 = vmatprep.mubr.f32.mxu0 0.0
        %v1491 = vand.u32 %v234, 4294901760
        %1492 = vmatmul.mubr.f32.gmra.mrb[0].mxu0 %v1491
        %v1493 = vpop.f32.mrb[0].mxu0
        %v1494 = vadd.f32 %v1317, %v1493
        %v1495 = vpop.f32.mrb[0].mxu0
        %1496 = vmatprep.mubr.f32.mxu0 0.0
        %v1497 = vand.u32 %v235, 4294901760
        %1498 = vmatmul.mubr.f32.gmra.mrb[0].mxu0 %v1497
        %v1499 = vpop.f32.mrb[0].mxu0
        %v1500 = vadd.f32 %v1323, %v1499
        %v1501 = vpop.f32.mrb[0].mxu0
        %1502 = vmatprep.mubr.f32.mxu0 0.0
        %v1503 = vand.u32 %v236, 4294901760
        %1504 = vmatmul.mubr.f32.gmra.mrb[0].mxu0 %v1503
        %v1505 = vpop.f32.mrb[0].mxu0
        %v1506 = vadd.f32 %v1329, %v1505
        %v1507 = vpop.f32.mrb[0].mxu0
        %1508 = vmatprep.mubr.f32.mxu0 0.0
        %v1509 = vand.u32 %v237, 4294901760
        %1510 = vmatmul.mubr.f32.gmra.mrb[0].mxu0 %v1509
        %v1511 = vpop.f32.mrb[0].mxu0
        %v1512 = vadd.f32 %v1335, %v1511
        %v1513 = vpop.f32.mrb[0].mxu0
        %1514 = vmatprep.mubr.f32.mxu0 0.0
        %v1515 = vand.u32 %v238, 4294901760
        %1516 = vmatmul.mubr.f32.gmra.mrb[0].mxu0 %v1515
        %v1517 = vpop.f32.mrb[0].mxu0
        %v1518 = vadd.f32 %v1341, %v1517
        %v1519 = vpop.f32.mrb[0].mxu0
        %1520 = vmatprep.mubr.f32.mxu0 0.0
        %v1521 = vand.u32 %v239, 4294901760
        %1522 = vmatmul.mubr.f32.gmra.mrb[0].mxu0 %v1521
        %v1523 = vpop.f32.mrb[0].mxu0
        %v1524 = vadd.f32 %v1347, %v1523
        %v1525 = vpop.f32.mrb[0].mxu0
        %1526 = vmatprep.mubr.f32.mxu0 0.0
        %v1527 = vand.u32 %v240, 4294901760
        %1528 = vmatmul.mubr.f32.gmra.mrb[0].mxu0 %v1527
        %v1529 = vpop.f32.mrb[0].mxu0
        %v1530 = vadd.f32 %v1353, %v1529
        %v1531 = vpop.f32.mrb[0].mxu0
        %1532 = vmatprep.mubr.f32.mxu0 0.0
        %v1533 = vand.u32 %v241, 4294901760
        %1534 = vmatmul.mubr.f32.gmra.mrb[0].mxu0 %v1533
        %v1535 = vpop.f32.mrb[0].mxu0
        %v1536 = vadd.f32 %v1359, %v1535
        %v1537 = vpop.f32.mrb[0].mxu0
        %1538 = vmatprep.mubr.f32.mxu0 0.0
        %v1539 = vand.u32 %v242, 4294901760
        %1540 = vmatmul.mubr.f32.gmra.mrb[0].mxu0 %v1539
        %v1541 = vpop.f32.mrb[0].mxu0
        %v1542 = vadd.f32 %v1365, %v1541
        %v1543 = vpop.f32.mrb[0].mxu0
        %1544 = vdwg.mxu0
        %1545 = vst [vmem:[%s137] sm:$0xff] %v1452
        %1546 = vst [vmem:[%s137 + $0x8] sm:$0xff] %v1458
        %1547 = vst [vmem:[%s137 + $0x10] sm:$0xff] %v1464
        %1548 = vst [vmem:[%s137 + $0x18] sm:$0xff] %v1470
        %1549 = vst [vmem:[%s137 + $0x20] sm:$0xff] %v1476
        %1550 = vst [vmem:[%s137 + $0x28] sm:$0xff] %v1482
        %1551 = vst [vmem:[%s137 + $0x30] sm:$0xff] %v1488
        %1552 = vst [vmem:[%s137 + $0x38] sm:$0xff] %v1494
        %1553 = vst [vmem:[%s137 + $0x40] sm:$0xff] %v1500
        %1554 = vst [vmem:[%s137 + $0x48] sm:$0xff] %v1506
        %1555 = vst [vmem:[%s137 + $0x50] sm:$0xff] %v1512
        %1556 = vst [vmem:[%s137 + $0x58] sm:$0xff] %v1518
        %1557 = vst [vmem:[%s137 + $0x60] sm:$0xff] %v1524
        %1558 = vst [vmem:[%s137 + $0x68] sm:$0xff] %v1530
        %1559 = vst [vmem:[%s137 + $0x70] sm:$0xff] %v1536
        %1560 = vst [vmem:[%s137 + $0x78] sm:$0xff] %v1542
        %s1561 = sand.u32 %s71, 1
        %s1562 = scalar_lea.sflag [#allocation3], %s1561
        %s1563 = sand.u32 %s71, 1
        %s1564 = smul.addr %s1563, 128
        %s1565 = scalar_lea.vmem [#allocation2], %s1564
        // Predicated region
        $region29: #{tpu_custom_call.1} parent=27 // pred_check
          %p1566 = pneg %p81
        $region30: #{tpu_custom_call.1} parent=27 // pred_check_branch
          %1568 = sbr.rel (%p1566) target = $region32
        $region31: #{tpu_custom_call.1} parent=27 // pred_region
          %s1569 = smul.u32 16, %s16
          %s1571 = ssub.s32 2048, 2048
          %1572 = vsyncadd %s1562, %s1571
          %s1573 = smul.addr %s1569, 128
          %s1574 = scalar_lea.hbm %s2, %s1573
          %s1575 = sshll.u32 %s1565, 4
          %s1576 = int_to_ptr.vmem [resolvable:$true] %s1575
          %1581 = dma.vmem_to_hbm [thread:$0]  %s1576, 2048, %s1574, %s1562, 128, 128, 8
        $region32: #{tpu_custom_call.1} parent=27 // pred_fallthru
          _
      $region28: #{tpu_custom_call.1} parent=5 // pred_fallthru
        _
      %p1582 = scmp.le.s32.totalorder 2, %s11
      // Predicated region
      $region33: #{tpu_custom_call.1} parent=5 // pred_check
        %p1583 = pneg %p1582
      $region34: #{tpu_custom_call.1} parent=5 // pred_check_branch
        %1585 = sbr.rel (%p1583) target = $region36
      $region35: #{tpu_custom_call.1} parent=5 // pred_region
        %s1586 = ssub.s32 %s11, 2
        // Predicated region
        $region37: #{tpu_custom_call.1} parent=35 // pred_check
          %p1587 = pneg %p87
        $region38: #{tpu_custom_call.1} parent=35 // pred_check_branch
          %1589 = sbr.rel (%p1587) target = $region40
        $region39: #{tpu_custom_call.1} parent=35 // pred_region
          %s1590 = sand.u32 %s72, 1
          %s1591 = scalar_lea.sflag [#allocation3], %s1590
          %s1592 = sand.u32 %s72, 1
          %s1593 = smul.addr %s1592, 128
          %s1594 = scalar_lea.vmem [#allocation2], %s1593
          %1595 = dma.done %s1591, 2048
        $region40: #{tpu_custom_call.1} parent=35 // pred_fallthru
          _
      $region36: #{tpu_custom_call.1} parent=5 // pred_fallthru
        _
    $region6: #{tpu_custom_call.1} parent=1 // loop_footer
      %s15 = sadd.s32 1, %s11
    $region7: #{tpu_custom_call.1} parent=1 // loop_footer_branch
      %10 = sbr.rel target = $region3
    $region8: #{tpu_custom_call.1} parent=1 // loop_exit
      _
    %1596 = vsyncpa [#allocation3], 1
    %s1597 = scalar_lea.sflag [#allocation3], 1
    %1598 = vsyncpa %s1597, 1

// kernel: tpu_custom_call.1
$region0: #{tpu_custom_call.1}
  #allocation0 [shape = 'u32[]', space=smem, size = 0x4, offset = 0x4, fixed_abs, tag = 'smem constant byte address 0x4 - core index']
  #allocation1 [shape = 'u32[144,128]{1,0:T(1,128)}', space=vmem, size = 0x12000, scoped, tag = 'internal scratch']
  %s0 = inlined_call_operand.vmem [shape: s32[256,1], index: 0, kind: input, shape index: {}]
  %s1 = inlined_call_operand.vmem [shape: f32[128,128], index: 1, kind: input, shape index: {}]
  %s2 = inlined_call_operand.hbm [shape: f32[256,128], index: 2, kind: output, shape index: {}]
  %s3 = sld [smem:[#allocation0]]
  $region41: #{tpu_custom_call.1} parent=0
    _
  %s5 = ssub.s32 1, %s3
  %s6 = scalar_select 0, %s5, %s3
  $region1: #{tpu_custom_call.1} parent=0
    #allocation2 [shape = 'u8[131072]{0}', space=vmem, size = 0x20000, scoped, tag = 'output window, operand 0']
    #allocation3 [shape = 's32[2]{0}', space=sflag, size = 0x8, scoped, tag = 'scoped memory for tpu_custom_call.1']
    %7 = vsyncpa [#allocation3], 0
    %s8 = scalar_lea.sflag [#allocation3], 1
    %9 = vsyncpa %s8, 0
    loop: start=0, step=1, limit=4
    $region2: #{tpu_custom_call.1} parent=1 // loop_pre_header
      _
    $region3: #{tpu_custom_call.1} parent=1 // loop_header
      %s11 = sphi 0, %s15
      %p12 = scmp.ge.s32.totalorder %s11, 4
      %s21 = sphi 0, %s23
      %s24 = sphi 0, %s21
      %s25 = sphi 0, %s24
      %s41 = sphi 0, %s25
      %s45 = sphi 0, %s45
      %s47 = sphi 0, %s45
      %s48 = sphi 0, %s47
      %s62 = sphi 0, %s48
      %s68 = sphi 0, %s70
      %s71 = sphi 0, %s68
      %s72 = sphi 0, %s71
      %s88 = sphi 0, %s72
    $region4: #{tpu_custom_call.1} parent=1 // loop_header_branch
      %14 = sbr.rel (%p12) target = $region8
    $region5: #{tpu_custom_call.1} parent=1 // loop_body
      %s16 = ssub.s32 %s11, 1
      %s17 = ssub.s32 %s11, 2
      %s18 = sadd.s32 %s11, 1
      %s19 = ssub.s32 %s11, %s18
      %p20 = scmp.eq.s32.totalorder %s19, 0
      %s22 = sadd.s32 %s21, 1
      %s23 = scalar_select %p20, %s21, %s22
      %p26 = pneg %p20
      %p27 = scmp.eq.s32.totalorder %s11, 1
      %p28 = por %p26, %p27
      %p29 = scmp.ne.s32.totalorder %s21, %s24
      %p30 = scmp.eq.s32.totalorder %s11, 0
      %p31 = por %p29, %p30
      %p32 = scmp.ne.s32.totalorder %s21, %s24
      %p33 = scmp.eq.s32.totalorder %s16, 1
      %p34 = por %p32, %p33
      %p35 = scmp.ne.s32.totalorder %s24, %s25
      %p36 = scmp.eq.s32.totalorder %s16, 0
      %p37 = por %p35, %p36
      %p38 = scmp.ne.s32.totalorder %s24, %s25
      %p39 = scmp.eq.s32.totalorder %s17, 1
      %p40 = por %p38, %p39
      %p42 = scmp.ne.s32.totalorder %s25, %s41
      %p43 = scmp.eq.s32.totalorder %s17, 0
      %p44 = por %p42, %p43
      %s46 = sadd.s32 %s45, 1
      %p49 = scmp.eq.s32.totalorder %s11, 1
      %p50 = scmp.ne.s32.totalorder %s45, %s47
      %p51 = scmp.eq.s32.totalorder %s11, 0
      %p52 = por %p50, %p51
      %p53 = scmp.ne.s32.totalorder %s45, %s47
      %p54 = scmp.eq.s32.totalorder %s16, 1
      %p55 = por %p53, %p54
      %p56 = scmp.ne.s32.totalorder %s47, %s48
      %p57 = scmp.eq.s32.totalorder %s16, 0
      %p58 = por %p56, %p57
      %p59 = scmp.ne.s32.totalorder %s47, %s48
      %p60 = scmp.eq.s32.totalorder %s17, 1
      %p61 = por %p59, %p60
      %p63 = scmp.ne.s32.totalorder %s48, %s62
      %p64 = scmp.eq.s32.totalorder %s17, 0
      %p65 = por %p63, %p64
      %s66 = ssub.s32 %s11, %s18
      %p67 = scmp.eq.s32.totalorder %s66, 0
      %s69 = sadd.s32 %s68, 1
      %s70 = scalar_select %p67, %s68, %s69
      %p73 = pneg %p67
      %p74 = scmp.eq.s32.totalorder %s11, 1
      %p75 = por %p73, %p74
      %p76 = scmp.ne.s32.totalorder %s68, %s71
      %p77 = scmp.eq.s32.totalorder %s11, 0
      %p78 = por %p76, %p77
      %p79 = scmp.ne.s32.totalorder %s68, %s71
      %p80 = scmp.eq.s32.totalorder %s16, 1
      %p81 = por %p79, %p80
      %p82 = scmp.ne.s32.totalorder %s71, %s72
      %p83 = scmp.eq.s32.totalorder %s16, 0
      %p84 = por %p82, %p83
      %p85 = scmp.ne.s32.totalorder %s71, %s72
      %p86 = scmp.eq.s32.totalorder %s17, 1
      %p87 = por %p85, %p86
      %p89 = scmp.ne.s32.totalorder %s72, %s88
      %p90 = scmp.eq.s32.totalorder %s17, 0
      %p91 = por %p89, %p90
      %p92 = scmp.le.s32.totalorder 1, %s11
      %p93 = scmp.lt.s32.totalorder %s11, 3
      %p94 = pnand %p92, %p93
      %p95 = pneg %p94
      // Predicated region
      $region9: #{tpu_custom_call.1} parent=5 // pred_check
        _
      $region10: #{tpu_custom_call.1} parent=5 // pred_check_branch
        %97 = sbr.rel (%p94) target = $region12
      $region11: #{tpu_custom_call.1} parent=5 // pred_region
        %s98 = ssub.s32 %s11, 1
        // Predicated region
        $region13: #{tpu_custom_call.1} parent=11 // pred_check
          %p99 = pneg %p58
        $region14: #{tpu_custom_call.1} parent=11 // pred_check_branch
          %101 = sbr.rel (%p99) target = $region16
        $region15: #{tpu_custom_call.1} parent=11 // pred_region
          _
        $region16: #{tpu_custom_call.1} parent=11 // pred_fallthru
          _
      $region12: #{tpu_custom_call.1} parent=5 // pred_fallthru
        _
      %p102 = scmp.lt.s32.totalorder %s11, 2
      // Predicated region
      $region17: #{tpu_custom_call.1} parent=5 // pred_check
        %p103 = pneg %p102
      $region18: #{tpu_custom_call.1} parent=5 // pred_check_branch
        %105 = sbr.rel (%p103) target = $region20
      $region19: #{tpu_custom_call.1} parent=5 // pred_region
        // Predicated region
        $region21: #{tpu_custom_call.1} parent=19 // pred_check
          %p106 = pneg %p31
        $region22: #{tpu_custom_call.1} parent=19 // pred_check_branch
          %108 = sbr.rel (%p106) target = $region24
        $region23: #{tpu_custom_call.1} parent=19 // pred_region
          %s109 = smul.u32 16, %s11
          %p110 = scmp.lt.s32.totalorder %s109, 31
          %s111 = scalar_select %p110, %s109, 31
          %s112 = smul.addr %s111, 8
          %s113 = scalar_lea.vmem %s0, %s112
          %s114 = smul.u32 16, %s11
        $region24: #{tpu_custom_call.1} parent=19 // pred_fallthru
          _
      $region20: #{tpu_custom_call.1} parent=5 // pred_fallthru
        _
      %p115 = scmp.le.s32.totalorder 1, %s11
      %p116 = scmp.lt.s32.totalorder %s11, 3
      %p117 = pnand %p115, %p116
      %p118 = pneg %p117
      // Predicated region
      $region25: #{tpu_custom_call.1} parent=5 // pred_check
        _
      $region26: #{tpu_custom_call.1} parent=5 // pred_check_branch
        %120 = sbr.rel (%p117) target = $region28
      $region27: #{tpu_custom_call.1} parent=5 // pred_region
        %s121 = ssub.s32 %s11, 1
        %s122 = smul.u32 16, %s16
        %p123 = scmp.lt.s32.totalorder %s122, 31
        %s124 = scalar_select %p123, %s122, 31
        %s125 = smul.addr %s124, 8
        %s126 = scalar_lea.vmem %s0, %s125
        %p127 = pneg %p37
        %p128 = pneg %p34
        %p129 = pneg %p58
        %p130 = pneg %p55
        %p131 = pneg %p84
        %p132 = pneg %p81
        %s133 = sand.u32 %s71, 1
        %s134 = scalar_lea.sflag [#allocation3], %s133
        %s135 = sand.u32 %s71, 1
        %s136 = smul.addr %s135, 128
        %s137 = scalar_lea.vmem [#allocation2], %s136
        %s138 = smul.u32 16, %s16
        %p139 = scmp.lt.s32.totalorder %s138, 31
        %s140 = scalar_select %p139, %s138, 31
        %s141 = smul.addr %s140, 8
        %s142 = scalar_lea.vmem %s0, %s141
        %s143 = smul.u32 16, %s16
        %s144 = smul.u32 16, %s16
        %v145 = vld [vmem:[%s142] sm:$0xff]
        %v146 = vld [vmem:[%s142 + $0x8] sm:$0xff]
        %v147 = vld [vmem:[%s142 + $0x10] sm:$0xff]
        %v148 = vld [vmem:[%s142 + $0x18] sm:$0xff]
        %v149 = vld [vmem:[%s142 + $0x20] sm:$0xff]
        %v150 = vld [vmem:[%s142 + $0x28] sm:$0xff]
        %v151 = vld [vmem:[%s142 + $0x30] sm:$0xff]
        %v152 = vld [vmem:[%s142 + $0x38] sm:$0xff]
        %v153 = vld [vmem:[%s142 + $0x40] sm:$0xff]
        %v154 = vld [vmem:[%s142 + $0x48] sm:$0xff]
        %v155 = vld [vmem:[%s142 + $0x50] sm:$0xff]
        %v156 = vld [vmem:[%s142 + $0x58] sm:$0xff]
        %v157 = vld [vmem:[%s142 + $0x60] sm:$0xff]
        %v158 = vld [vmem:[%s142 + $0x68] sm:$0xff]
        %v159 = vld [vmem:[%s142 + $0x70] sm:$0xff]
        %v160 = vld [vmem:[%s142 + $0x78] sm:$0xff]
        %v161 = vlaneseq
        %v162 = vand.u32 %v161, 127
        %163 = vset.pattern.permute.xlu0 0
        %164 = vperm.xlu0 %163, %v145
        %v165 = vpop.permute.xlu0 %164
        %166 = vset.pattern.permute.xlu0 0
        %167 = vperm.xlu0 %166, %v146
        %v168 = vpop.permute.xlu0 %167
        %169 = vset.pattern.permute.xlu0 0
        %170 = vperm.xlu0 %169, %v147
        %v171 = vpop.permute.xlu0 %170
        %172 = vset.pattern.permute.xlu0 0
        %173 = vperm.xlu0 %172, %v148
        %v174 = vpop.permute.xlu0 %173
        %175 = vset.pattern.permute.xlu0 0
        %176 = vperm.xlu0 %175, %v149
        %v177 = vpop.permute.xlu0 %176
        %178 = vset.pattern.permute.xlu0 0
        %179 = vperm.xlu0 %178, %v150
        %v180 = vpop.permute.xlu0 %179
        %181 = vset.pattern.permute.xlu0 0
        %182 = vperm.xlu0 %181, %v151
        %v183 = vpop.permute.xlu0 %182
        %184 = vset.pattern.permute.xlu0 0
        %185 = vperm.xlu0 %184, %v152
        %v186 = vpop.permute.xlu0 %185
        %187 = vset.pattern.permute.xlu0 0
        %188 = vperm.xlu0 %187, %v153
        %v189 = vpop.permute.xlu0 %188
        %190 = vset.pattern.permute.xlu0 0
        %191 = vperm.xlu0 %190, %v154
        %v192 = vpop.permute.xlu0 %191
        %193 = vset.pattern.permute.xlu0 0
        %194 = vperm.xlu0 %193, %v155
        %v195 = vpop.permute.xlu0 %194
        %196 = vset.pattern.permute.xlu0 0
        %197 = vperm.xlu0 %196, %v156
        %v198 = vpop.permute.xlu0 %197
        %199 = vset.pattern.permute.xlu0 0
        %200 = vperm.xlu0 %199, %v157
        %v201 = vpop.permute.xlu0 %200
        %202 = vset.pattern.permute.xlu0 0
        %203 = vperm.xlu0 %202, %v158
        %v204 = vpop.permute.xlu0 %203
        %205 = vset.pattern.permute.xlu0 0
        %206 = vperm.xlu0 %205, %v159
        %v207 = vpop.permute.xlu0 %206
        %208 = vset.pattern.permute.xlu0 0
        %209 = vperm.xlu0 %208, %v160
        %v210 = vpop.permute.xlu0 %209
        %vm211 = vcmp.eq.s32.totalorder %v162, %v165
        %vm212 = vcmp.eq.s32.totalorder %v162, %v168
        %vm213 = vcmp.eq.s32.totalorder %v162, %v171
        %vm214 = vcmp.eq.s32.totalorder %v162, %v174
        %vm215 = vcmp.eq.s32.totalorder %v162, %v177
        %vm216 = vcmp.eq.s32.totalorder %v162, %v180
        %vm217 = vcmp.eq.s32.totalorder %v162, %v183
        %vm218 = vcmp.eq.s32.totalorder %v162, %v186
        %vm219 = vcmp.eq.s32.totalorder %v162, %v189
        %vm220 = vcmp.eq.s32.totalorder %v162, %v192
        %vm221 = vcmp.eq.s32.totalorder %v162, %v195
        %vm222 = vcmp.eq.s32.totalorder %v162, %v198
        %vm223 = vcmp.eq.s32.totalorder %v162, %v201
        %vm224 = vcmp.eq.s32.totalorder %v162, %v204
        %vm225 = vcmp.eq.s32.totalorder %v162, %v207
        %vm226 = vcmp.eq.s32.totalorder %v162, %v210
        %v227 = vsel %vm211, 11.313708, 0.0
        %v228 = vsel %vm212, 11.313708, 0.0
        %v229 = vsel %vm213, 11.313708, 0.0
        %v230 = vsel %vm214, 11.313708, 0.0
        %v231 = vsel %vm215, 11.313708, 0.0
        %v232 = vsel %vm216, 11.313708, 0.0
        %v233 = vsel %vm217, 11.313708, 0.0
        %v234 = vsel %vm218, 11.313708, 0.0
        %v235 = vsel %vm219, 11.313708, 0.0
        %v236 = vsel %vm220, 11.313708, 0.0
        %v237 = vsel %vm221, 11.313708, 0.0
        %v238 = vsel %vm222, 11.313708, 0.0
        %v239 = vsel %vm223, 11.313708, 0.0
        %v240 = vsel %vm224, 11.313708, 0.0
        %v241 = vsel %vm225, 11.313708, 0.0
        %v242 = vsel %vm226, 11.313708, 0.0
        %v243 = vld [vmem:[%s1] sm:$0xff]
        %v244 = vld [vmem:[%s1 + $0x8] sm:$0xff]
        %v245 = vld [vmem:[%s1 + $0x10] sm:$0xff]
        %v246 = vld [vmem:[%s1 + $0x18] sm:$0xff]
        %v247 = vld [vmem:[%s1 + $0x20] sm:$0xff]
        %v248 = vld [vmem:[%s1 + $0x28] sm:$0xff]
        %v249 = vld [vmem:[%s1 + $0x30] sm:$0xff]
        %v250 = vld [vmem:[%s1 + $0x38] sm:$0xff]
        %v251 = vld [vmem:[%s1 + $0x40] sm:$0xff]
        %v252 = vld [vmem:[%s1 + $0x48] sm:$0xff]
        %v253 = vld [vmem:[%s1 + $0x50] sm:$0xff]
        %v254 = vld [vmem:[%s1 + $0x58] sm:$0xff]
        %v255 = vld [vmem:[%s1 + $0x60] sm:$0xff]
        %v256 = vld [vmem:[%s1 + $0x68] sm:$0xff]
        %v257 = vld [vmem:[%s1 + $0x70] sm:$0xff]
        %v258 = vld [vmem:[%s1 + $0x78] sm:$0xff]
        %259 = vmatprep.subr.mxu0 0.0
        %v260 = vand.u32 %v243, 4294901760
        %261 = vmatpush1.msra.mxu0 %v260
        %262 = vmatprep.subr.mxu0 0.0
        %v263 = vand.u32 %v244, 4294901760
        %264 = vmatpush1.msra.mxu0 %v263
        %265 = vmatprep.subr.mxu0 0.0
        %v266 = vand.u32 %v245, 4294901760
        %267 = vmatpush1.msra.mxu0 %v266
        %268 = vmatprep.subr.mxu0 0.0
        %v269 = vand.u32 %v246, 4294901760
        %270 = vmatpush1.msra.mxu0 %v269
        %271 = vmatprep.subr.mxu0 0.0
        %v272 = vand.u32 %v247, 4294901760
        %273 = vmatpush1.msra.mxu0 %v272
        %274 = vmatprep.subr.mxu0 0.0
        %v275 = vand.u32 %v248, 4294901760
        %276 = vmatpush1.msra.mxu0 %v275
        %277 = vmatprep.subr.mxu0 0.0
        %v278 = vand.u32 %v249, 4294901760
        %279 = vmatpush1.msra.mxu0 %v278
        %280 = vmatprep.subr.mxu0 0.0
        %v281 = vand.u32 %v250, 4294901760
        %282 = vmatpush1.msra.mxu0 %v281
        %283 = vmatprep.subr.mxu0 0.0
        %v284 = vand.u32 %v251, 4294901760
        %285 = vmatpush1.msra.mxu0 %v284
        %286 = vmatprep.subr.mxu0 0.0
        %v287 = vand.u32 %v252, 4294901760
        %288 = vmatpush1.msra.mxu0 %v287
        %289 = vmatprep.subr.mxu0 0.0
        %v290 = vand.u32 %v253, 4294901760
        %291 = vmatpush1.msra.mxu0 %v290
        %292 = vmatprep.subr.mxu0 0.0
        %v293 = vand.u32 %v254, 4294901760
        %294 = vmatpush1.msra.mxu0 %v293
        %295 = vmatprep.subr.mxu0 0.0
        %v296 = vand.u32 %v255, 4294901760
        %297 = vmatpush1.msra.mxu0 %v296
        %298 = vmatprep.subr.mxu0 0.0
        %v299 = vand.u32 %v256, 4294901760
        %300 = vmatpush1.msra.mxu0 %v299
        %301 = vmatprep.subr.mxu0 0.0
        %v302 = vand.u32 %v257, 4294901760
        %303 = vmatpush1.msra.mxu0 %v302
        %304 = vmatprep.subr.mxu0 0.0
        %v305 = vand.u32 %v258, 4294901760
        %306 = vmatpush1.msra.mxu0 %v305
        %307 = vmatprep.subr.mxu0 0.0
        %308 = vmatpush1.msra.mxu0 0.0
        %309 = vmatprep.subr.mxu0 0.0
        %310 = vmatpush1.msra.mxu0 0.0
        %311 = vmatprep.subr.mxu0 0.0
        %312 = vmatpush1.msra.mxu0 0.0
        %313 = vmatprep.subr.mxu0 0.0
        %314 = vmatpush1.msra.mxu0 0.0
        %315 = vmatprep.subr.mxu0 0.0
        %316 = vmatpush1.msra.mxu0 0.0
        %317 = vmatprep.subr.mxu0 0.0
        %318 = vmatpush1.msra.mxu0 0.0
        %319 = vmatprep.subr.mxu0 0.0
        %320 = vmatpush1.msra.mxu0 0.0
        %321 = vmatprep.subr.mxu0 0.0
        %322 = vmatpush1.msra.mxu0 0.0
        %323 = vmatprep.subr.mxu0 0.0
        %324 = vmatpush1.msra.mxu0 0.0
        %325 = vmatprep.subr.mxu0 0.0
        %326 = vmatpush1.msra.mxu0 0.0
        %327 = vmatprep.subr.mxu0 0.0
        %328 = vmatpush1.msra.mxu0 0.0
        %329 = vmatprep.subr.mxu0 0.0
        %330 = vmatpush1.msra.mxu0 0.0
        %331 = vmatprep.subr.mxu0 0.0
        %332 = vmatpush1.msra.mxu0 0.0
        %333 = vmatprep.subr.mxu0 0.0
        %334 = vmatpush1.msra.mxu0 0.0
        %335 = vmatprep.subr.mxu0 0.0
        %336 = vmatpush1.msra.mxu0 0.0
        %337 = vmatprep.subr.mxu0 0.0
        %338 = vmatpush1.msra.mxu0 0.0
        %339 = vmatprep.mubr.f32.mxu0 0.0
        %v340 = vand.u32 %v227, 4294901760
        %v341 = vsub.f32 %v227, %v340
        %v342 = vand.u32 %v341, 4294901760
        %v343 = vsub.f32 %v341, %v342
        %v344 = vand.u32 %v343, 4294901760
        %345 = vmatmul.mubr.f32.gmra.mrb[0].mxu0 %v344
        %v346 = vpop.f32.mrb[0].mxu0
        %v347 = vadd.f32 0.0, %v346
        %v348 = vpop.f32.mrb[0].mxu0
        %349 = vmatprep.mubr.f32.mxu0 0.0
        %v350 = vand.u32 %v228, 4294901760
        %v351 = vsub.f32 %v228, %v350
        %v352 = vand.u32 %v351, 4294901760
        %v353 = vsub.f32 %v351, %v352
        %v354 = vand.u32 %v353, 4294901760
        %355 = vmatmul.mubr.f32.gmra.mrb[0].mxu0 %v354
        %v356 = vpop.f32.mrb[0].mxu0
        %v357 = vadd.f32 0.0, %v356
        %v358 = vpop.f32.mrb[0].mxu0
        %359 = vmatprep.mubr.f32.mxu0 0.0
        %v360 = vand.u32 %v229, 4294901760
        %v361 = vsub.f32 %v229, %v360
        %v362 = vand.u32 %v361, 4294901760
        %v363 = vsub.f32 %v361, %v362
        %v364 = vand.u32 %v363, 4294901760
        %365 = vmatmul.mubr.f32.gmra.mrb[0].mxu0 %v364
        %v366 = vpop.f32.mrb[0].mxu0
        %v367 = vadd.f32 0.0, %v366
        %v368 = vpop.f32.mrb[0].mxu0
        %369 = vmatprep.mubr.f32.mxu0 0.0
        %v370 = vand.u32 %v230, 4294901760
        %v371 = vsub.f32 %v230, %v370
        %v372 = vand.u32 %v371, 4294901760
        %v373 = vsub.f32 %v371, %v372
        %v374 = vand.u32 %v373, 4294901760
        %375 = vmatmul.mubr.f32.gmra.mrb[0].mxu0 %v374
        %v376 = vpop.f32.mrb[0].mxu0
        %v377 = vadd.f32 0.0, %v376
        %v378 = vpop.f32.mrb[0].mxu0
        %379 = vmatprep.mubr.f32.mxu0 0.0
        %v380 = vand.u32 %v231, 4294901760
        %v381 = vsub.f32 %v231, %v380
        %v382 = vand.u32 %v381, 4294901760
        %v383 = vsub.f32 %v381, %v382
        %v384 = vand.u32 %v383, 4294901760
        %385 = vmatmul.mubr.f32.gmra.mrb[0].mxu0 %v384
        %v386 = vpop.f32.mrb[0].mxu0
        %v387 = vadd.f32 0.0, %v386
        %v388 = vpop.f32.mrb[0].mxu0
        %389 = vmatprep.mubr.f32.mxu0 0.0
        %v390 = vand.u32 %v232, 4294901760
        %v391 = vsub.f32 %v232, %v390
        %v392 = vand.u32 %v391, 4294901760
        %v393 = vsub.f32 %v391, %v392
        %v394 = vand.u32 %v393, 4294901760
        %395 = vmatmul.mubr.f32.gmra.mrb[0].mxu0 %v394
        %v396 = vpop.f32.mrb[0].mxu0
        %v397 = vadd.f32 0.0, %v396
        %v398 = vpop.f32.mrb[0].mxu0
        %399 = vmatprep.mubr.f32.mxu0 0.0
        %v400 = vand.u32 %v233, 4294901760
        %v401 = vsub.f32 %v233, %v400
        %v402 = vand.u32 %v401, 4294901760
        %v403 = vsub.f32 %v401, %v402
        %v404 = vand.u32 %v403, 4294901760
        %405 = vmatmul.mubr.f32.gmra.mrb[0].mxu0 %v404
        %v406 = vpop.f32.mrb[0].mxu0
        %v407 = vadd.f32 0.0, %v406
        %v408 = vpop.f32.mrb[0].mxu0
        %409 = vmatprep.mubr.f32.mxu0 0.0
        %v410 = vand.u32 %v234, 4294901760
        %v411 = vsub.f32 %v234, %v410
        %v412 = vand.u32 %v411, 4294901760
        %v413 = vsub.f32 %v411, %v412
        %v414 = vand.u32 %v413, 4294901760
        %415 = vmatmul.mubr.f32.gmra.mrb[0].mxu0 %v414
        %v416 = vpop.f32.mrb[0].mxu0
        %v417 = vadd.f32 0.0, %v416
        %v418 = vpop.f32.mrb[0].mxu0
        %419 = vmatprep.mubr.f32.mxu0 0.0
        %v420 = vand.u32 %v235, 4294901760
        %v421 = vsub.f32 %v235, %v420
        %v422 = vand.u32 %v421, 4294901760
        %v423 = vsub.f32 %v421, %v422
        %v424 = vand.u32 %v423, 4294901760
        %425 = vmatmul.mubr.f32.gmra.mrb[0].mxu0 %v424
        %v426 = vpop.f32.mrb[0].mxu0
        %v427 = vadd.f32 0.0, %v426
        %v428 = vpop.f32.mrb[0].mxu0
        %429 = vmatprep.mubr.f32.mxu0 0.0
        %v430 = vand.u32 %v236, 4294901760
        %v431 = vsub.f32 %v236, %v430
        %v432 = vand.u32 %v431, 4294901760
        %v433 = vsub.f32 %v431, %v432
        %v434 = vand.u32 %v433, 4294901760
        %435 = vmatmul.mubr.f32.gmra.mrb[0].mxu0 %v434
        %v436 = vpop.f32.mrb[0].mxu0
        %v437 = vadd.f32 0.0, %v436
        %v438 = vpop.f32.mrb[0].mxu0
        %439 = vmatprep.mubr.f32.mxu0 0.0
        %v440 = vand.u32 %v237, 4294901760
        %v441 = vsub.f32 %v237, %v440
        %v442 = vand.u32 %v441, 4294901760
        %v443 = vsub.f32 %v441, %v442
        %v444 = vand.u32 %v443, 4294901760
        %445 = vmatmul.mubr.f32.gmra.mrb[0].mxu0 %v444
        %v446 = vpop.f32.mrb[0].mxu0
        %v447 = vadd.f32 0.0, %v446
        %v448 = vpop.f32.mrb[0].mxu0
        %449 = vmatprep.mubr.f32.mxu0 0.0
        %v450 = vand.u32 %v238, 4294901760
        %v451 = vsub.f32 %v238, %v450
        %v452 = vand.u32 %v451, 4294901760
        %v453 = vsub.f32 %v451, %v452
        %v454 = vand.u32 %v453, 4294901760
        %455 = vmatmul.mubr.f32.gmra.mrb[0].mxu0 %v454
        %v456 = vpop.f32.mrb[0].mxu0
        %v457 = vadd.f32 0.0, %v456
        %v458 = vpop.f32.mrb[0].mxu0
        %459 = vmatprep.mubr.f32.mxu0 0.0
        %v460 = vand.u32 %v239, 4294901760
        %v461 = vsub.f32 %v239, %v460
        %v462 = vand.u32 %v461, 4294901760
        %v463 = vsub.f32 %v461, %v462
        %v464 = vand.u32 %v463, 4294901760
        %465 = vmatmul.mubr.f32.gmra.mrb[0].mxu0 %v464
        %v466 = vpop.f32.mrb[0].mxu0
        %v467 = vadd.f32 0.0, %v466
        %v468 = vpop.f32.mrb[0].mxu0
        %469 = vmatprep.mubr.f32.mxu0 0.0
        %v470 = vand.u32 %v240, 4294901760
        %v471 = vsub.f32 %v240, %v470
        %v472 = vand.u32 %v471, 4294901760
        %v473 = vsub.f32 %v471, %v472
        %v474 = vand.u32 %v473, 4294901760
        %475 = vmatmul.mubr.f32.gmra.mrb[0].mxu0 %v474
        %v476 = vpop.f32.mrb[0].mxu0
        %v477 = vadd.f32 0.0, %v476
        %v478 = vpop.f32.mrb[0].mxu0
        %479 = vmatprep.mubr.f32.mxu0 0.0
        %v480 = vand.u32 %v241, 4294901760
        %v481 = vsub.f32 %v241, %v480
        %v482 = vand.u32 %v481, 4294901760
        %v483 = vsub.f32 %v481, %v482
        %v484 = vand.u32 %v483, 4294901760
        %485 = vmatmul.mubr.f32.gmra.mrb[0].mxu0 %v484
        %v486 = vpop.f32.mrb[0].mxu0
        %v487 = vadd.f32 0.0, %v486
        %v488 = vpop.f32.mrb[0].mxu0
        %489 = vmatprep.mubr.f32.mxu0 0.0
        %v490 = vand.u32 %v242, 4294901760
        %v491 = vsub.f32 %v242, %v490
        %v492 = vand.u32 %v491, 4294901760
        %v493 = vsub.f32 %v491, %v492
        %v494 = vand.u32 %v493, 4294901760
        %495 = vmatmul.mubr.f32.gmra.mrb[0].mxu0 %v494
        %v496 = vpop.f32.mrb[0].mxu0
        %v497 = vadd.f32 0.0, %v496
        %v498 = vpop.f32.mrb[0].mxu0
        %499 = vdwg.mxu0
        %500 = vmatprep.subr.mxu0 0.0
        %v501 = vand.u32 %v243, 4294901760
        %v502 = vsub.f32 %v243, %v501
        %v503 = vand.u32 %v502, 4294901760
        %v504 = vsub.f32 %v502, %v503
        %v505 = vand.u32 %v504, 4294901760
        %506 = vmatpush1.msra.mxu0 %v505
        %507 = vmatprep.subr.mxu0 0.0
        %v508 = vand.u32 %v244, 4294901760
        %v509 = vsub.f32 %v244, %v508
        %v510 = vand.u32 %v509, 4294901760
        %v511 = vsub.f32 %v509, %v510
        %v512 = vand.u32 %v511, 4294901760
        %513 = vmatpush1.msra.mxu0 %v512
        %514 = vmatprep.subr.mxu0 0.0
        %v515 = vand.u32 %v245, 4294901760
        %v516 = vsub.f32 %v245, %v515
        %v517 = vand.u32 %v516, 4294901760
        %v518 = vsub.f32 %v516, %v517
        %v519 = vand.u32 %v518, 4294901760
        %520 = vmatpush1.msra.mxu0 %v519
        %521 = vmatprep.subr.mxu0 0.0
        %v522 = vand.u32 %v246, 4294901760
        %v523 = vsub.f32 %v246, %v522
        %v524 = vand.u32 %v523, 4294901760
        %v525 = vsub.f32 %v523, %v524
        %v526 = vand.u32 %v525, 4294901760
        %527 = vmatpush1.msra.mxu0 %v526
        %528 = vmatprep.subr.mxu0 0.0
        %v529 = vand.u32 %v247, 4294901760
        %v530 = vsub.f32 %v247, %v529
        %v531 = vand.u32 %v530, 4294901760
        %v532 = vsub.f32 %v530, %v531
        %v533 = vand.u32 %v532, 4294901760
        %534 = vmatpush1.msra.mxu0 %v533
        %535 = vmatprep.subr.mxu0 0.0
        %v536 = vand.u32 %v248, 4294901760
        %v537 = vsub.f32 %v248, %v536
        %v538 = vand.u32 %v537, 4294901760
        %v539 = vsub.f32 %v537, %v538
        %v540 = vand.u32 %v539, 4294901760
        %541 = vmatpush1.msra.mxu0 %v540
        %542 = vmatprep.subr.mxu0 0.0
        %v543 = vand.u32 %v249, 4294901760
        %v544 = vsub.f32 %v249, %v543
        %v545 = vand.u32 %v544, 4294901760
        %v546 = vsub.f32 %v544, %v545
        %v547 = vand.u32 %v546, 4294901760
        %548 = vmatpush1.msra.mxu0 %v547
        %549 = vmatprep.subr.mxu0 0.0
        %v550 = vand.u32 %v250, 4294901760
        %v551 = vsub.f32 %v250, %v550
        %v552 = vand.u32 %v551, 4294901760
        %v553 = vsub.f32 %v551, %v552
        %v554 = vand.u32 %v553, 4294901760
        %555 = vmatpush1.msra.mxu0 %v554
        %556 = vmatprep.subr.mxu0 0.0
        %v557 = vand.u32 %v251, 4294901760
        %v558 = vsub.f32 %v251, %v557
        %v559 = vand.u32 %v558, 4294901760
        %v560 = vsub.f32 %v558, %v559
        %v561 = vand.u32 %v560, 4294901760
        %562 = vmatpush1.msra.mxu0 %v561
        %563 = vmatprep.subr.mxu0 0.0
        %v564 = vand.u32 %v252, 4294901760
        %v565 = vsub.f32 %v252, %v564
        %v566 = vand.u32 %v565, 4294901760
        %v567 = vsub.f32 %v565, %v566
        %v568 = vand.u32 %v567, 4294901760
        %569 = vmatpush1.msra.mxu0 %v568
        %570 = vmatprep.subr.mxu0 0.0
        %v571 = vand.u32 %v253, 4294901760
        %v572 = vsub.f32 %v253, %v571
        %v573 = vand.u32 %v572, 4294901760
        %v574 = vsub.f32 %v572, %v573
        %v575 = vand.u32 %v574, 4294901760
        %576 = vmatpush1.msra.mxu0 %v575
        %577 = vmatprep.subr.mxu0 0.0
        %v578 = vand.u32 %v254, 4294901760
        %v579 = vsub.f32 %v254, %v578
        %v580 = vand.u32 %v579, 4294901760
        %v581 = vsub.f32 %v579, %v580
        %v582 = vand.u32 %v581, 4294901760
        %583 = vmatpush1.msra.mxu0 %v582
        %584 = vmatprep.subr.mxu0 0.0
        %v585 = vand.u32 %v255, 4294901760
        %v586 = vsub.f32 %v255, %v585
        %v587 = vand.u32 %v586, 4294901760
        %v588 = vsub.f32 %v586, %v587
        %v589 = vand.u32 %v588, 4294901760
        %590 = vmatpush1.msra.mxu0 %v589
        %591 = vmatprep.subr.mxu0 0.0
        %v592 = vand.u32 %v256, 4294901760
        %v593 = vsub.f32 %v256, %v592
        %v594 = vand.u32 %v593, 4294901760
        %v595 = vsub.f32 %v593, %v594
        %v596 = vand.u32 %v595, 4294901760
        %597 = vmatpush1.msra.mxu0 %v596
        %598 = vmatprep.subr.mxu0 0.0
        %v599 = vand.u32 %v257, 4294901760
        %v600 = vsub.f32 %v257, %v599
        %v601 = vand.u32 %v600, 4294901760
        %v602 = vsub.f32 %v600, %v601
        %v603 = vand.u32 %v602, 4294901760
        %604 = vmatpush1.msra.mxu0 %v603
        %605 = vmatprep.subr.mxu0 0.0
        %v606 = vand.u32 %v258, 4294901760
        %v607 = vsub.f32 %v258, %v606
        %v608 = vand.u32 %v607, 4294901760
        %v609 = vsub.f32 %v607, %v608
        %v610 = vand.u32 %v609, 4294901760
        %611 = vmatpush1.msra.mxu0 %v610
        %612 = vmatprep.subr.mxu0 0.0
        %613 = vmatpush1.msra.mxu0 0.0
        %614 = vmatprep.subr.mxu0 0.0
        %615 = vmatpush1.msra.mxu0 0.0
        %616 = vmatprep.subr.mxu0 0.0
        %617 = vmatpush1.msra.mxu0 0.0
        %618 = vmatprep.subr.mxu0 0.0
        %619 = vmatpush1.msra.mxu0 0.0
        %620 = vmatprep.subr.mxu0 0.0
        %621 = vmatpush1.msra.mxu0 0.0
        %622 = vmatprep.subr.mxu0 0.0
        %623 = vmatpush1.msra.mxu0 0.0
        %624 = vmatprep.subr.mxu0 0.0
        %625 = vmatpush1.msra.mxu0 0.0
        %626 = vmatprep.subr.mxu0 0.0
        %627 = vmatpush1.msra.mxu0 0.0
        %628 = vmatprep.subr.mxu0 0.0
        %629 = vmatpush1.msra.mxu0 0.0
        %630 = vmatprep.subr.mxu0 0.0
        %631 = vmatpush1.msra.mxu0 0.0
        %632 = vmatprep.subr.mxu0 0.0
        %633 = vmatpush1.msra.mxu0 0.0
        %634 = vmatprep.subr.mxu0 0.0
        %635 = vmatpush1.msra.mxu0 0.0
        %636 = vmatprep.subr.mxu0 0.0
        %637 = vmatpush1.msra.mxu0 0.0
        %638 = vmatprep.subr.mxu0 0.0
        %639 = vmatpush1.msra.mxu0 0.0
        %640 = vmatprep.subr.mxu0 0.0
        %641 = vmatpush1.msra.mxu0 0.0
        %642 = vmatprep.subr.mxu0 0.0
        %643 = vmatpush1.msra.mxu0 0.0
        %644 = vmatprep.mubr.f32.mxu0 0.0
        %v645 = vand.u32 %v227, 4294901760
        %646 = vmatmul.mubr.f32.gmra.mrb[0].mxu0 %v645
        %v647 = vpop.f32.mrb[0].mxu0
        %v648 = vadd.f32 %v347, %v647
        %v649 = vpop.f32.mrb[0].mxu0
        %650 = vmatprep.mubr.f32.mxu0 0.0
        %v651 = vand.u32 %v228, 4294901760
        %652 = vmatmul.mubr.f32.gmra.mrb[0].mxu0 %v651
        %v653 = vpop.f32.mrb[0].mxu0
        %v654 = vadd.f32 %v357, %v653
        %v655 = vpop.f32.mrb[0].mxu0
        %656 = vmatprep.mubr.f32.mxu0 0.0
        %v657 = vand.u32 %v229, 4294901760
        %658 = vmatmul.mubr.f32.gmra.mrb[0].mxu0 %v657
        %v659 = vpop.f32.mrb[0].mxu0
        %v660 = vadd.f32 %v367, %v659
        %v661 = vpop.f32.mrb[0].mxu0
        %662 = vmatprep.mubr.f32.mxu0 0.0
        %v663 = vand.u32 %v230, 4294901760
        %664 = vmatmul.mubr.f32.gmra.mrb[0].mxu0 %v663
        %v665 = vpop.f32.mrb[0].mxu0
        %v666 = vadd.f32 %v377, %v665
        %v667 = vpop.f32.mrb[0].mxu0
        %668 = vmatprep.mubr.f32.mxu0 0.0
        %v669 = vand.u32 %v231, 4294901760
        %670 = vmatmul.mubr.f32.gmra.mrb[0].mxu0 %v669
        %v671 = vpop.f32.mrb[0].mxu0
        %v672 = vadd.f32 %v387, %v671
        %v673 = vpop.f32.mrb[0].mxu0
        %674 = vmatprep.mubr.f32.mxu0 0.0
        %v675 = vand.u32 %v232, 4294901760
        %676 = vmatmul.mubr.f32.gmra.mrb[0].mxu0 %v675
        %v677 = vpop.f32.mrb[0].mxu0
        %v678 = vadd.f32 %v397, %v677
        %v679 = vpop.f32.mrb[0].mxu0
        %680 = vmatprep.mubr.f32.mxu0 0.0
        %v681 = vand.u32 %v233, 4294901760
        %682 = vmatmul.mubr.f32.gmra.mrb[0].mxu0 %v681
        %v683 = vpop.f32.mrb[0].mxu0
        %v684 = vadd.f32 %v407, %v683
        %v685 = vpop.f32.mrb[0].mxu0
        %686 = vmatprep.mubr.f32.mxu0 0.0
        %v687 = vand.u32 %v234, 4294901760
        %688 = vmatmul.mubr.f32.gmra.mrb[0].mxu0 %v687
        %v689 = vpop.f32.mrb[0].mxu0
        %v690 = vadd.f32 %v417, %v689
        %v691 = vpop.f32.mrb[0].mxu0
        %692 = vmatprep.mubr.f32.mxu0 0.0
        %v693 = vand.u32 %v235, 4294901760
        %694 = vmatmul.mubr.f32.gmra.mrb[0].mxu0 %v693
        %v695 = vpop.f32.mrb[0].mxu0
        %v696 = vadd.f32 %v427, %v695
        %v697 = vpop.f32.mrb[0].mxu0
        %698 = vmatprep.mubr.f32.mxu0 0.0
        %v699 = vand.u32 %v236, 4294901760
        %700 = vmatmul.mubr.f32.gmra.mrb[0].mxu0 %v699
        %v701 = vpop.f32.mrb[0].mxu0
        %v702 = vadd.f32 %v437, %v701
        %v703 = vpop.f32.mrb[0].mxu0
        %704 = vmatprep.mubr.f32.mxu0 0.0
        %v705 = vand.u32 %v237, 4294901760
        %706 = vmatmul.mubr.f32.gmra.mrb[0].mxu0 %v705
        %v707 = vpop.f32.mrb[0].mxu0
        %v708 = vadd.f32 %v447, %v707
        %v709 = vpop.f32.mrb[0].mxu0
        %710 = vmatprep.mubr.f32.mxu0 0.0
        %v711 = vand.u32 %v238, 4294901760
        %712 = vmatmul.mubr.f32.gmra.mrb[0].mxu0 %v711
        %v713 = vpop.f32.mrb[0].mxu0
        %v714 = vadd.f32 %v457, %v713
        %v715 = vpop.f32.mrb[0].mxu0
        %716 = vmatprep.mubr.f32.mxu0 0.0
        %v717 = vand.u32 %v239, 4294901760
        %718 = vmatmul.mubr.f32.gmra.mrb[0].mxu0 %v717
        %v719 = vpop.f32.mrb[0].mxu0
        %v720 = vadd.f32 %v467, %v719
        %v721 = vpop.f32.mrb[0].mxu0
        %722 = vmatprep.mubr.f32.mxu0 0.0
        %v723 = vand.u32 %v240, 4294901760
        %724 = vmatmul.mubr.f32.gmra.mrb[0].mxu0 %v723
        %v725 = vpop.f32.mrb[0].mxu0
        %v726 = vadd.f32 %v477, %v725
        %v727 = vpop.f32.mrb[0].mxu0
        %728 = vmatprep.mubr.f32.mxu0 0.0
        %v729 = vand.u32 %v241, 4294901760
        %730 = vmatmul.mubr.f32.gmra.mrb[0].mxu0 %v729
        %v731 = vpop.f32.mrb[0].mxu0
        %v732 = vadd.f32 %v487, %v731
        %v733 = vpop.f32.mrb[0].mxu0
        %734 = vmatprep.mubr.f32.mxu0 0.0
        %v735 = vand.u32 %v242, 4294901760
        %736 = vmatmul.mubr.f32.gmra.mrb[0].mxu0 %v735
        %v737 = vpop.f32.mrb[0].mxu0
        %v738 = vadd.f32 %v497, %v737
        %v739 = vpop.f32.mrb[0].mxu0
        %740 = vdwg.mxu0
        %741 = vmatprep.subr.mxu0 0.0
        %v742 = vand.u32 %v243, 4294901760
        %v743 = vsub.f32 %v243, %v742
        %744 = vmatpush1.msra.mxu0 %v743
        %745 = vmatprep.subr.mxu0 0.0
        %v746 = vand.u32 %v244, 4294901760
        %v747 = vsub.f32 %v244, %v746
        %748 = vmatpush1.msra.mxu0 %v747
        %749 = vmatprep.subr.mxu0 0.0
        %v750 = vand.u32 %v245, 4294901760
        %v751 = vsub.f32 %v245, %v750
        %752 = vmatpush1.msra.mxu0 %v751
        %753 = vmatprep.subr.mxu0 0.0
        %v754 = vand.u32 %v246, 4294901760
        %v755 = vsub.f32 %v246, %v754
        %756 = vmatpush1.msra.mxu0 %v755
        %757 = vmatprep.subr.mxu0 0.0
        %v758 = vand.u32 %v247, 4294901760
        %v759 = vsub.f32 %v247, %v758
        %760 = vmatpush1.msra.mxu0 %v759
        %761 = vmatprep.subr.mxu0 0.0
        %v762 = vand.u32 %v248, 4294901760
        %v763 = vsub.f32 %v248, %v762
        %764 = vmatpush1.msra.mxu0 %v763
        %765 = vmatprep.subr.mxu0 0.0
        %v766 = vand.u32 %v249, 4294901760
        %v767 = vsub.f32 %v249, %v766
        %768 = vmatpush1.msra.mxu0 %v767
        %769 = vmatprep.subr.mxu0 0.0
        %v770 = vand.u32 %v250, 4294901760
        %v771 = vsub.f32 %v250, %v770
        %772 = vmatpush1.msra.mxu0 %v771
        %773 = vmatprep.subr.mxu0 0.0
        %v774 = vand.u32 %v251, 4294901760
        %v775 = vsub.f32 %v251, %v774
        %776 = vmatpush1.msra.mxu0 %v775
        %777 = vmatprep.subr.mxu0 0.0
        %v778 = vand.u32 %v252, 4294901760
        %v779 = vsub.f32 %v252, %v778
        %780 = vmatpush1.msra.mxu0 %v779
        %781 = vmatprep.subr.mxu0 0.0
        %v782 = vand.u32 %v253, 4294901760
        %v783 = vsub.f32 %v253, %v782
        %784 = vmatpush1.msra.mxu0 %v783
        %785 = vmatprep.subr.mxu0 0.0
        %v786 = vand.u32 %v254, 4294901760
        %v787 = vsub.f32 %v254, %v786
        %788 = vmatpush1.msra.mxu0 %v787
        %789 = vmatprep.subr.mxu0 0.0
        %v790 = vand.u32 %v255, 4294901760
        %v791 = vsub.f32 %v255, %v790
        %792 = vmatpush1.msra.mxu0 %v791
        %793 = vmatprep.subr.mxu0 0.0
        %v794 = vand.u32 %v256, 4294901760
        %v795 = vsub.f32 %v256, %v794
        %796 = vmatpush1.msra.mxu0 %v795
        %797 = vmatprep.subr.mxu0 0.0
        %v798 = vand.u32 %v257, 4294901760
        %v799 = vsub.f32 %v257, %v798
        %800 = vmatpush1.msra.mxu0 %v799
        %801 = vmatprep.subr.mxu0 0.0
        %v802 = vand.u32 %v258, 4294901760
        %v803 = vsub.f32 %v258, %v802
        %804 = vmatpush1.msra.mxu0 %v803
        %805 = vmatprep.subr.mxu0 0.0
        %806 = vmatpush1.msra.mxu0 0.0
        %807 = vmatprep.subr.mxu0 0.0
        %808 = vmatpush1.msra.mxu0 0.0
        %809 = vmatprep.subr.mxu0 0.0
        %810 = vmatpush1.msra.mxu0 0.0
        %811 = vmatprep.subr.mxu0 0.0
        %812 = vmatpush1.msra.mxu0 0.0
        %813 = vmatprep.subr.mxu0 0.0
        %814 = vmatpush1.msra.mxu0 0.0
        %815 = vmatprep.subr.mxu0 0.0
        %816 = vmatpush1.msra.mxu0 0.0
        %817 = vmatprep.subr.mxu0 0.0
        %818 = vmatpush1.msra.mxu0 0.0
        %819 = vmatprep.subr.mxu0 0.0
        %820 = vmatpush1.msra.mxu0 0.0
        %821 = vmatprep.subr.mxu0 0.0
        %822 = vmatpush1.msra.mxu0 0.0
        %823 = vmatprep.subr.mxu0 0.0
        %824 = vmatpush1.msra.mxu0 0.0
        %825 = vmatprep.subr.mxu0 0.0
        %826 = vmatpush1.msra.mxu0 0.0
        %827 = vmatprep.subr.mxu0 0.0
        %828 = vmatpush1.msra.mxu0 0.0
        %829 = vmatprep.subr.mxu0 0.0
        %830 = vmatpush1.msra.mxu0 0.0
        %831 = vmatprep.subr.mxu0 0.0
        %832 = vmatpush1.msra.mxu0 0.0
        %833 = vmatprep.subr.mxu0 0.0
        %834 = vmatpush1.msra.mxu0 0.0
        %835 = vmatprep.subr.mxu0 0.0
        %836 = vmatpush1.msra.mxu0 0.0
        %837 = vmatprep.mubr.f32.mxu0 0.0
        %v838 = vand.u32 %v227, 4294901760
        %v839 = vsub.f32 %v227, %v838
        %840 = vmatmul.mubr.f32.gmra.mrb[0].mxu0 %v839
        %v841 = vpop.f32.mrb[0].mxu0
        %v842 = vadd.f32 %v648, %v841
        %v843 = vpop.f32.mrb[0].mxu0
        %844 = vmatprep.mubr.f32.mxu0 0.0
        %v845 = vand.u32 %v228, 4294901760
        %v846 = vsub.f32 %v228, %v845
        %847 = vmatmul.mubr.f32.gmra.mrb[0].mxu0 %v846
        %v848 = vpop.f32.mrb[0].mxu0
        %v849 = vadd.f32 %v654, %v848
        %v850 = vpop.f32.mrb[0].mxu0
        %851 = vmatprep.mubr.f32.mxu0 0.0
        %v852 = vand.u32 %v229, 4294901760
        %v853 = vsub.f32 %v229, %v852
        %854 = vmatmul.mubr.f32.gmra.mrb[0].mxu0 %v853
        %v855 = vpop.f32.mrb[0].mxu0
        %v856 = vadd.f32 %v660, %v855
        %v857 = vpop.f32.mrb[0].mxu0
        %858 = vmatprep.mubr.f32.mxu0 0.0
        %v859 = vand.u32 %v230, 4294901760
        %v860 = vsub.f32 %v230, %v859
        %861 = vmatmul.mubr.f32.gmra.mrb[0].mxu0 %v860
        %v862 = vpop.f32.mrb[0].mxu0
        %v863 = vadd.f32 %v666, %v862
        %v864 = vpop.f32.mrb[0].mxu0
        %865 = vmatprep.mubr.f32.mxu0 0.0
        %v866 = vand.u32 %v231, 4294901760
        %v867 = vsub.f32 %v231, %v866
        %868 = vmatmul.mubr.f32.gmra.mrb[0].mxu0 %v867
        %v869 = vpop.f32.mrb[0].mxu0
        %v870 = vadd.f32 %v672, %v869
        %v871 = vpop.f32.mrb[0].mxu0
        %872 = vmatprep.mubr.f32.mxu0 0.0
        %v873 = vand.u32 %v232, 4294901760
        %v874 = vsub.f32 %v232, %v873
        %875 = vmatmul.mubr.f32.gmra.mrb[0].mxu0 %v874
        %v876 = vpop.f32.mrb[0].mxu0
        %v877 = vadd.f32 %v678, %v876
        %v878 = vpop.f32.mrb[0].mxu0
        %879 = vmatprep.mubr.f32.mxu0 0.0
        %v880 = vand.u32 %v233, 4294901760
        %v881 = vsub.f32 %v233, %v880
        %882 = vmatmul.mubr.f32.gmra.mrb[0].mxu0 %v881
        %v883 = vpop.f32.mrb[0].mxu0
        %v884 = vadd.f32 %v684, %v883
        %v885 = vpop.f32.mrb[0].mxu0
        %886 = vmatprep.mubr.f32.mxu0 0.0
        %v887 = vand.u32 %v234, 4294901760
        %v888 = vsub.f32 %v234, %v887
        %889 = vmatmul.mubr.f32.gmra.mrb[0].mxu0 %v888
        %v890 = vpop.f32.mrb[0].mxu0
        %v891 = vadd.f32 %v690, %v890
        %v892 = vpop.f32.mrb[0].mxu0
        %893 = vmatprep.mubr.f32.mxu0 0.0
        %v894 = vand.u32 %v235, 4294901760
        %v895 = vsub.f32 %v235, %v894
        %896 = vmatmul.mubr.f32.gmra.mrb[0].mxu0 %v895
        %v897 = vpop.f32.mrb[0].mxu0
        %v898 = vadd.f32 %v696, %v897
        %v899 = vpop.f32.mrb[0].mxu0
        %900 = vmatprep.mubr.f32.mxu0 0.0
        %v901 = vand.u32 %v236, 4294901760
        %v902 = vsub.f32 %v236, %v901
        %903 = vmatmul.mubr.f32.gmra.mrb[0].mxu0 %v902
        %v904 = vpop.f32.mrb[0].mxu0
        %v905 = vadd.f32 %v702, %v904
        %v906 = vpop.f32.mrb[0].mxu0
        %907 = vmatprep.mubr.f32.mxu0 0.0
        %v908 = vand.u32 %v237, 4294901760
        %v909 = vsub.f32 %v237, %v908
        %910 = vmatmul.mubr.f32.gmra.mrb[0].mxu0 %v909
        %v911 = vpop.f32.mrb[0].mxu0
        %v912 = vadd.f32 %v708, %v911
        %v913 = vpop.f32.mrb[0].mxu0
        %914 = vmatprep.mubr.f32.mxu0 0.0
        %v915 = vand.u32 %v238, 4294901760
        %v916 = vsub.f32 %v238, %v915
        %917 = vmatmul.mubr.f32.gmra.mrb[0].mxu0 %v916
        %v918 = vpop.f32.mrb[0].mxu0
        %v919 = vadd.f32 %v714, %v918
        %v920 = vpop.f32.mrb[0].mxu0
        %921 = vmatprep.mubr.f32.mxu0 0.0
        %v922 = vand.u32 %v239, 4294901760
        %v923 = vsub.f32 %v239, %v922
        %924 = vmatmul.mubr.f32.gmra.mrb[0].mxu0 %v923
        %v925 = vpop.f32.mrb[0].mxu0
        %v926 = vadd.f32 %v720, %v925
        %v927 = vpop.f32.mrb[0].mxu0
        %928 = vmatprep.mubr.f32.mxu0 0.0
        %v929 = vand.u32 %v240, 4294901760
        %v930 = vsub.f32 %v240, %v929
        %931 = vmatmul.mubr.f32.gmra.mrb[0].mxu0 %v930
        %v932 = vpop.f32.mrb[0].mxu0
        %v933 = vadd.f32 %v726, %v932
        %v934 = vpop.f32.mrb[0].mxu0
        %935 = vmatprep.mubr.f32.mxu0 0.0
        %v936 = vand.u32 %v241, 4294901760
        %v937 = vsub.f32 %v241, %v936
        %938 = vmatmul.mubr.f32.gmra.mrb[0].mxu0 %v937
        %v939 = vpop.f32.mrb[0].mxu0
        %v940 = vadd.f32 %v732, %v939
        %v941 = vpop.f32.mrb[0].mxu0
        %942 = vmatprep.mubr.f32.mxu0 0.0
        %v943 = vand.u32 %v242, 4294901760
        %v944 = vsub.f32 %v242, %v943
        %945 = vmatmul.mubr.f32.gmra.mrb[0].mxu0 %v944
        %v946 = vpop.f32.mrb[0].mxu0
        %v947 = vadd.f32 %v738, %v946
        %v948 = vpop.f32.mrb[0].mxu0
        %949 = vdwg.mxu0
        %950 = vmatprep.subr.mxu0 0.0
        %v951 = vand.u32 %v243, 4294901760
        %952 = vmatpush1.msra.mxu0 %v951
        %953 = vmatprep.subr.mxu0 0.0
        %v954 = vand.u32 %v244, 4294901760
        %955 = vmatpush1.msra.mxu0 %v954
        %956 = vmatprep.subr.mxu0 0.0
        %v957 = vand.u32 %v245, 4294901760
        %958 = vmatpush1.msra.mxu0 %v957
        %959 = vmatprep.subr.mxu0 0.0
        %v960 = vand.u32 %v246, 4294901760
        %961 = vmatpush1.msra.mxu0 %v960
        %962 = vmatprep.subr.mxu0 0.0
        %v963 = vand.u32 %v247, 4294901760
        %964 = vmatpush1.msra.mxu0 %v963
        %965 = vmatprep.subr.mxu0 0.0
        %v966 = vand.u32 %v248, 4294901760
        %967 = vmatpush1.msra.mxu0 %v966
        %968 = vmatprep.subr.mxu0 0.0
        %v969 = vand.u32 %v249, 4294901760
        %970 = vmatpush1.msra.mxu0 %v969
        %971 = vmatprep.subr.mxu0 0.0
        %v972 = vand.u32 %v250, 4294901760
        %973 = vmatpush1.msra.mxu0 %v972
        %974 = vmatprep.subr.mxu0 0.0
        %v975 = vand.u32 %v251, 4294901760
        %976 = vmatpush1.msra.mxu0 %v975
        %977 = vmatprep.subr.mxu0 0.0
        %v978 = vand.u32 %v252, 4294901760
        %979 = vmatpush1.msra.mxu0 %v978
        %980 = vmatprep.subr.mxu0 0.0
        %v981 = vand.u32 %v253, 4294901760
        %982 = vmatpush1.msra.mxu0 %v981
        %983 = vmatprep.subr.mxu0 0.0
        %v984 = vand.u32 %v254, 4294901760
        %985 = vmatpush1.msra.mxu0 %v984
        %986 = vmatprep.subr.mxu0 0.0
        %v987 = vand.u32 %v255, 4294901760
        %988 = vmatpush1.msra.mxu0 %v987
        %989 = vmatprep.subr.mxu0 0.0
        %v990 = vand.u32 %v256, 4294901760
        %991 = vmatpush1.msra.mxu0 %v990
        %992 = vmatprep.subr.mxu0 0.0
        %v993 = vand.u32 %v257, 4294901760
        %994 = vmatpush1.msra.mxu0 %v993
        %995 = vmatprep.subr.mxu0 0.0
        %v996 = vand.u32 %v258, 4294901760
        %997 = vmatpush1.msra.mxu0 %v996
        %998 = vmatprep.subr.mxu0 0.0
        %999 = vmatpush1.msra.mxu0 0.0
        %1000 = vmatprep.subr.mxu0 0.0
        %1001 = vmatpush1.msra.mxu0 0.0
        %1002 = vmatprep.subr.mxu0 0.0
        %1003 = vmatpush1.msra.mxu0 0.0
        %1004 = vmatprep.subr.mxu0 0.0
        %1005 = vmatpush1.msra.mxu0 0.0
        %1006 = vmatprep.subr.mxu0 0.0
        %1007 = vmatpush1.msra.mxu0 0.0
        %1008 = vmatprep.subr.mxu0 0.0
        %1009 = vmatpush1.msra.mxu0 0.0
        %1010 = vmatprep.subr.mxu0 0.0
        %1011 = vmatpush1.msra.mxu0 0.0
        %1012 = vmatprep.subr.mxu0 0.0
        %1013 = vmatpush1.msra.mxu0 0.0
        %1014 = vmatprep.subr.mxu0 0.0
        %1015 = vmatpush1.msra.mxu0 0.0
        %1016 = vmatprep.subr.mxu0 0.0
        %1017 = vmatpush1.msra.mxu0 0.0
        %1018 = vmatprep.subr.mxu0 0.0
        %1019 = vmatpush1.msra.mxu0 0.0
        %1020 = vmatprep.subr.mxu0 0.0
        %1021 = vmatpush1.msra.mxu0 0.0
        %1022 = vmatprep.subr.mxu0 0.0
        %1023 = vmatpush1.msra.mxu0 0.0
        %1024 = vmatprep.subr.mxu0 0.0
        %1025 = vmatpush1.msra.mxu0 0.0
        %1026 = vmatprep.subr.mxu0 0.0
        %1027 = vmatpush1.msra.mxu0 0.0
        %1028 = vmatprep.subr.mxu0 0.0
        %1029 = vmatpush1.msra.mxu0 0.0
        %1030 = vmatprep.mubr.f32.mxu0 0.0
        %v1031 = vand.u32 %v227, 4294901760
        %v1032 = vsub.f32 %v227, %v1031
        %v1033 = vand.u32 %v1032, 4294901760
        %1034 = vmatmul.mubr.f32.gmra.mrb[0].mxu0 %v1033
        %v1035 = vpop.f32.mrb[0].mxu0
        %v1036 = vadd.f32 %v842, %v1035
        %v1037 = vpop.f32.mrb[0].mxu0
        %1038 = vmatprep.mubr.f32.mxu0 0.0
        %v1039 = vand.u32 %v228, 4294901760
        %v1040 = vsub.f32 %v228, %v1039
        %v1041 = vand.u32 %v1040, 4294901760
        %1042 = vmatmul.mubr.f32.gmra.mrb[0].mxu0 %v1041
        %v1043 = vpop.f32.mrb[0].mxu0
        %v1044 = vadd.f32 %v849, %v1043
        %v1045 = vpop.f32.mrb[0].mxu0
        %1046 = vmatprep.mubr.f32.mxu0 0.0
        %v1047 = vand.u32 %v229, 4294901760
        %v1048 = vsub.f32 %v229, %v1047
        %v1049 = vand.u32 %v1048, 4294901760
        %1050 = vmatmul.mubr.f32.gmra.mrb[0].mxu0 %v1049
        %v1051 = vpop.f32.mrb[0].mxu0
        %v1052 = vadd.f32 %v856, %v1051
        %v1053 = vpop.f32.mrb[0].mxu0
        %1054 = vmatprep.mubr.f32.mxu0 0.0
        %v1055 = vand.u32 %v230, 4294901760
        %v1056 = vsub.f32 %v230, %v1055
        %v1057 = vand.u32 %v1056, 4294901760
        %1058 = vmatmul.mubr.f32.gmra.mrb[0].mxu0 %v1057
        %v1059 = vpop.f32.mrb[0].mxu0
        %v1060 = vadd.f32 %v863, %v1059
        %v1061 = vpop.f32.mrb[0].mxu0
        %1062 = vmatprep.mubr.f32.mxu0 0.0
        %v1063 = vand.u32 %v231, 4294901760
        %v1064 = vsub.f32 %v231, %v1063
        %v1065 = vand.u32 %v1064, 4294901760
        %1066 = vmatmul.mubr.f32.gmra.mrb[0].mxu0 %v1065
        %v1067 = vpop.f32.mrb[0].mxu0
        %v1068 = vadd.f32 %v870, %v1067
        %v1069 = vpop.f32.mrb[0].mxu0
        %1070 = vmatprep.mubr.f32.mxu0 0.0
        %v1071 = vand.u32 %v232, 4294901760
        %v1072 = vsub.f32 %v232, %v1071
        %v1073 = vand.u32 %v1072, 4294901760
        %1074 = vmatmul.mubr.f32.gmra.mrb[0].mxu0 %v1073
        %v1075 = vpop.f32.mrb[0].mxu0
        %v1076 = vadd.f32 %v877, %v1075
        %v1077 = vpop.f32.mrb[0].mxu0
        %1078 = vmatprep.mubr.f32.mxu0 0.0
        %v1079 = vand.u32 %v233, 4294901760
        %v1080 = vsub.f32 %v233, %v1079
        %v1081 = vand.u32 %v1080, 4294901760
        %1082 = vmatmul.mubr.f32.gmra.mrb[0].mxu0 %v1081
        %v1083 = vpop.f32.mrb[0].mxu0
        %v1084 = vadd.f32 %v884, %v1083
        %v1085 = vpop.f32.mrb[0].mxu0
        %1086 = vmatprep.mubr.f32.mxu0 0.0
        %v1087 = vand.u32 %v234, 4294901760
        %v1088 = vsub.f32 %v234, %v1087
        %v1089 = vand.u32 %v1088, 4294901760
        %1090 = vmatmul.mubr.f32.gmra.mrb[0].mxu0 %v1089
        %v1091 = vpop.f32.mrb[0].mxu0
        %v1092 = vadd.f32 %v891, %v1091
        %v1093 = vpop.f32.mrb[0].mxu0
        %1094 = vmatprep.mubr.f32.mxu0 0.0
        %v1095 = vand.u32 %v235, 4294901760
        %v1096 = vsub.f32 %v235, %v1095
        %v1097 = vand.u32 %v1096, 4294901760
        %1098 = vmatmul.mubr.f32.gmra.mrb[0].mxu0 %v1097
        %v1099 = vpop.f32.mrb[0].mxu0
        %v1100 = vadd.f32 %v898, %v1099
        %v1101 = vpop.f32.mrb[0].mxu0
        %1102 = vmatprep.mubr.f32.mxu0 0.0
        %v1103 = vand.u32 %v236, 4294901760
        %v1104 = vsub.f32 %v236, %v1103
        %v1105 = vand.u32 %v1104, 4294901760
        %1106 = vmatmul.mubr.f32.gmra.mrb[0].mxu0 %v1105
        %v1107 = vpop.f32.mrb[0].mxu0
        %v1108 = vadd.f32 %v905, %v1107
        %v1109 = vpop.f32.mrb[0].mxu0
        %1110 = vmatprep.mubr.f32.mxu0 0.0
        %v1111 = vand.u32 %v237, 4294901760
        %v1112 = vsub.f32 %v237, %v1111
        %v1113 = vand.u32 %v1112, 4294901760
        %1114 = vmatmul.mubr.f32.gmra.mrb[0].mxu0 %v1113
        %v1115 = vpop.f32.mrb[0].mxu0
        %v1116 = vadd.f32 %v912, %v1115
        %v1117 = vpop.f32.mrb[0].mxu0
        %1118 = vmatprep.mubr.f32.mxu0 0.0
        %v1119 = vand.u32 %v238, 4294901760
        %v1120 = vsub.f32 %v238, %v1119
        %v1121 = vand.u32 %v1120, 4294901760
        %1122 = vmatmul.mubr.f32.gmra.mrb[0].mxu0 %v1121
        %v1123 = vpop.f32.mrb[0].mxu0
        %v1124 = vadd.f32 %v919, %v1123
        %v1125 = vpop.f32.mrb[0].mxu0
        %1126 = vmatprep.mubr.f32.mxu0 0.0
        %v1127 = vand.u32 %v239, 4294901760
        %v1128 = vsub.f32 %v239, %v1127
        %v1129 = vand.u32 %v1128, 4294901760
        %1130 = vmatmul.mubr.f32.gmra.mrb[0].mxu0 %v1129
        %v1131 = vpop.f32.mrb[0].mxu0
        %v1132 = vadd.f32 %v926, %v1131
        %v1133 = vpop.f32.mrb[0].mxu0
        %1134 = vmatprep.mubr.f32.mxu0 0.0
        %v1135 = vand.u32 %v240, 4294901760
        %v1136 = vsub.f32 %v240, %v1135
        %v1137 = vand.u32 %v1136, 4294901760
        %1138 = vmatmul.mubr.f32.gmra.mrb[0].mxu0 %v1137
        %v1139 = vpop.f32.mrb[0].mxu0
        %v1140 = vadd.f32 %v933, %v1139
        %v1141 = vpop.f32.mrb[0].mxu0
        %1142 = vmatprep.mubr.f32.mxu0 0.0
        %v1143 = vand.u32 %v241, 4294901760
        %v1144 = vsub.f32 %v241, %v1143
        %v1145 = vand.u32 %v1144, 4294901760
        %1146 = vmatmul.mubr.f32.gmra.mrb[0].mxu0 %v1145
        %v1147 = vpop.f32.mrb[0].mxu0
        %v1148 = vadd.f32 %v940, %v1147
        %v1149 = vpop.f32.mrb[0].mxu0
        %1150 = vmatprep.mubr.f32.mxu0 0.0
        %v1151 = vand.u32 %v242, 4294901760
        %v1152 = vsub.f32 %v242, %v1151
        %v1153 = vand.u32 %v1152, 4294901760
        %1154 = vmatmul.mubr.f32.gmra.mrb[0].mxu0 %v1153
        %v1155 = vpop.f32.mrb[0].mxu0
        %v1156 = vadd.f32 %v947, %v1155
        %v1157 = vpop.f32.mrb[0].mxu0
        %1158 = vdwg.mxu0
        %1159 = vmatprep.subr.mxu0 0.0
        %v1160 = vand.u32 %v243, 4294901760
        %v1161 = vsub.f32 %v243, %v1160
        %v1162 = vand.u32 %v1161, 4294901760
        %1163 = vmatpush1.msra.mxu0 %v1162
        %1164 = vmatprep.subr.mxu0 0.0
        %v1165 = vand.u32 %v244, 4294901760
        %v1166 = vsub.f32 %v244, %v1165
        %v1167 = vand.u32 %v1166, 4294901760
        %1168 = vmatpush1.msra.mxu0 %v1167
        %1169 = vmatprep.subr.mxu0 0.0
        %v1170 = vand.u32 %v245, 4294901760
        %v1171 = vsub.f32 %v245, %v1170
        %v1172 = vand.u32 %v1171, 4294901760
        %1173 = vmatpush1.msra.mxu0 %v1172
        %1174 = vmatprep.subr.mxu0 0.0
        %v1175 = vand.u32 %v246, 4294901760
        %v1176 = vsub.f32 %v246, %v1175
        %v1177 = vand.u32 %v1176, 4294901760
        %1178 = vmatpush1.msra.mxu0 %v1177
        %1179 = vmatprep.subr.mxu0 0.0
        %v1180 = vand.u32 %v247, 4294901760
        %v1181 = vsub.f32 %v247, %v1180
        %v1182 = vand.u32 %v1181, 4294901760
        %1183 = vmatpush1.msra.mxu0 %v1182
        %1184 = vmatprep.subr.mxu0 0.0
        %v1185 = vand.u32 %v248, 4294901760
        %v1186 = vsub.f32 %v248, %v1185
        %v1187 = vand.u32 %v1186, 4294901760
        %1188 = vmatpush1.msra.mxu0 %v1187
        %1189 = vmatprep.subr.mxu0 0.0
        %v1190 = vand.u32 %v249, 4294901760
        %v1191 = vsub.f32 %v249, %v1190
        %v1192 = vand.u32 %v1191, 4294901760
        %1193 = vmatpush1.msra.mxu0 %v1192
        %1194 = vmatprep.subr.mxu0 0.0
        %v1195 = vand.u32 %v250, 4294901760
        %v1196 = vsub.f32 %v250, %v1195
        %v1197 = vand.u32 %v1196, 4294901760
        %1198 = vmatpush1.msra.mxu0 %v1197
        %1199 = vmatprep.subr.mxu0 0.0
        %v1200 = vand.u32 %v251, 4294901760
        %v1201 = vsub.f32 %v251, %v1200
        %v1202 = vand.u32 %v1201, 4294901760
        %1203 = vmatpush1.msra.mxu0 %v1202
        %1204 = vmatprep.subr.mxu0 0.0
        %v1205 = vand.u32 %v252, 4294901760
        %v1206 = vsub.f32 %v252, %v1205
        %v1207 = vand.u32 %v1206, 4294901760
        %1208 = vmatpush1.msra.mxu0 %v1207
        %1209 = vmatprep.subr.mxu0 0.0
        %v1210 = vand.u32 %v253, 4294901760
        %v1211 = vsub.f32 %v253, %v1210
        %v1212 = vand.u32 %v1211, 4294901760
        %1213 = vmatpush1.msra.mxu0 %v1212
        %1214 = vmatprep.subr.mxu0 0.0
        %v1215 = vand.u32 %v254, 4294901760
        %v1216 = vsub.f32 %v254, %v1215
        %v1217 = vand.u32 %v1216, 4294901760
        %1218 = vmatpush1.msra.mxu0 %v1217
        %1219 = vmatprep.subr.mxu0 0.0
        %v1220 = vand.u32 %v255, 4294901760
        %v1221 = vsub.f32 %v255, %v1220
        %v1222 = vand.u32 %v1221, 4294901760
        %1223 = vmatpush1.msra.mxu0 %v1222
        %1224 = vmatprep.subr.mxu0 0.0
        %v1225 = vand.u32 %v256, 4294901760
        %v1226 = vsub.f32 %v256, %v1225
        %v1227 = vand.u32 %v1226, 4294901760
        %1228 = vmatpush1.msra.mxu0 %v1227
        %1229 = vmatprep.subr.mxu0 0.0
        %v1230 = vand.u32 %v257, 4294901760
        %v1231 = vsub.f32 %v257, %v1230
        %v1232 = vand.u32 %v1231, 4294901760
        %1233 = vmatpush1.msra.mxu0 %v1232
        %1234 = vmatprep.subr.mxu0 0.0
        %v1235 = vand.u32 %v258, 4294901760
        %v1236 = vsub.f32 %v258, %v1235
        %v1237 = vand.u32 %v1236, 4294901760
        %1238 = vmatpush1.msra.mxu0 %v1237
        %1239 = vmatprep.subr.mxu0 0.0
        %1240 = vmatpush1.msra.mxu0 0.0
        %1241 = vmatprep.subr.mxu0 0.0
        %1242 = vmatpush1.msra.mxu0 0.0
        %1243 = vmatprep.subr.mxu0 0.0
        %1244 = vmatpush1.msra.mxu0 0.0
        %1245 = vmatprep.subr.mxu0 0.0
        %1246 = vmatpush1.msra.mxu0 0.0
        %1247 = vmatprep.subr.mxu0 0.0
        %1248 = vmatpush1.msra.mxu0 0.0
        %1249 = vmatprep.subr.mxu0 0.0
        %1250 = vmatpush1.msra.mxu0 0.0
        %1251 = vmatprep.subr.mxu0 0.0
        %1252 = vmatpush1.msra.mxu0 0.0
        %1253 = vmatprep.subr.mxu0 0.0
        %1254 = vmatpush1.msra.mxu0 0.0
        %1255 = vmatprep.subr.mxu0 0.0
        %1256 = vmatpush1.msra.mxu0 0.0
        %1257 = vmatprep.subr.mxu0 0.0
        %1258 = vmatpush1.msra.mxu0 0.0
        %1259 = vmatprep.subr.mxu0 0.0
        %1260 = vmatpush1.msra.mxu0 0.0
        %1261 = vmatprep.subr.mxu0 0.0
        %1262 = vmatpush1.msra.mxu0 0.0
        %1263 = vmatprep.subr.mxu0 0.0
        %1264 = vmatpush1.msra.mxu0 0.0
        %1265 = vmatprep.subr.mxu0 0.0
        %1266 = vmatpush1.msra.mxu0 0.0
        %1267 = vmatprep.subr.mxu0 0.0
        %1268 = vmatpush1.msra.mxu0 0.0
        %1269 = vmatprep.subr.mxu0 0.0
        %1270 = vmatpush1.msra.mxu0 0.0
        %1271 = vmatprep.mubr.f32.mxu0 0.0
        %v1272 = vand.u32 %v227, 4294901760
        %1273 = vmatmul.mubr.f32.gmra.mrb[0].mxu0 %v1272
        %v1274 = vpop.f32.mrb[0].mxu0
        %v1275 = vadd.f32 %v1036, %v1274
        %v1276 = vpop.f32.mrb[0].mxu0
        %1277 = vmatprep.mubr.f32.mxu0 0.0
        %v1278 = vand.u32 %v228, 4294901760
        %1279 = vmatmul.mubr.f32.gmra.mrb[0].mxu0 %v1278
        %v1280 = vpop.f32.mrb[0].mxu0
        %v1281 = vadd.f32 %v1044, %v1280
        %v1282 = vpop.f32.mrb[0].mxu0
        %1283 = vmatprep.mubr.f32.mxu0 0.0
        %v1284 = vand.u32 %v229, 4294901760
        %1285 = vmatmul.mubr.f32.gmra.mrb[0].mxu0 %v1284
        %v1286 = vpop.f32.mrb[0].mxu0
        %v1287 = vadd.f32 %v1052, %v1286
        %v1288 = vpop.f32.mrb[0].mxu0
        %1289 = vmatprep.mubr.f32.mxu0 0.0
        %v1290 = vand.u32 %v230, 4294901760
        %1291 = vmatmul.mubr.f32.gmra.mrb[0].mxu0 %v1290
        %v1292 = vpop.f32.mrb[0].mxu0
        %v1293 = vadd.f32 %v1060, %v1292
        %v1294 = vpop.f32.mrb[0].mxu0
        %1295 = vmatprep.mubr.f32.mxu0 0.0
        %v1296 = vand.u32 %v231, 4294901760
        %1297 = vmatmul.mubr.f32.gmra.mrb[0].mxu0 %v1296
        %v1298 = vpop.f32.mrb[0].mxu0
        %v1299 = vadd.f32 %v1068, %v1298
        %v1300 = vpop.f32.mrb[0].mxu0
        %1301 = vmatprep.mubr.f32.mxu0 0.0
        %v1302 = vand.u32 %v232, 4294901760
        %1303 = vmatmul.mubr.f32.gmra.mrb[0].mxu0 %v1302
        %v1304 = vpop.f32.mrb[0].mxu0
        %v1305 = vadd.f32 %v1076, %v1304
        %v1306 = vpop.f32.mrb[0].mxu0
        %1307 = vmatprep.mubr.f32.mxu0 0.0
        %v1308 = vand.u32 %v233, 4294901760
        %1309 = vmatmul.mubr.f32.gmra.mrb[0].mxu0 %v1308
        %v1310 = vpop.f32.mrb[0].mxu0
        %v1311 = vadd.f32 %v1084, %v1310
        %v1312 = vpop.f32.mrb[0].mxu0
        %1313 = vmatprep.mubr.f32.mxu0 0.0
        %v1314 = vand.u32 %v234, 4294901760
        %1315 = vmatmul.mubr.f32.gmra.mrb[0].mxu0 %v1314
        %v1316 = vpop.f32.mrb[0].mxu0
        %v1317 = vadd.f32 %v1092, %v1316
        %v1318 = vpop.f32.mrb[0].mxu0
        %1319 = vmatprep.mubr.f32.mxu0 0.0
        %v1320 = vand.u32 %v235, 4294901760
        %1321 = vmatmul.mubr.f32.gmra.mrb[0].mxu0 %v1320
        %v1322 = vpop.f32.mrb[0].mxu0
        %v1323 = vadd.f32 %v1100, %v1322
        %v1324 = vpop.f32.mrb[0].mxu0
        %1325 = vmatprep.mubr.f32.mxu0 0.0
        %v1326 = vand.u32 %v236, 4294901760
        %1327 = vmatmul.mubr.f32.gmra.mrb[0].mxu0 %v1326
        %v1328 = vpop.f32.mrb[0].mxu0
        %v1329 = vadd.f32 %v1108, %v1328
        %v1330 = vpop.f32.mrb[0].mxu0
        %1331 = vmatprep.mubr.f32.mxu0 0.0
        %v1332 = vand.u32 %v237, 4294901760
        %1333 = vmatmul.mubr.f32.gmra.mrb[0].mxu0 %v1332
        %v1334 = vpop.f32.mrb[0].mxu0
        %v1335 = vadd.f32 %v1116, %v1334
        %v1336 = vpop.f32.mrb[0].mxu0
        %1337 = vmatprep.mubr.f32.mxu0 0.0
        %v1338 = vand.u32 %v238, 4294901760
        %1339 = vmatmul.mubr.f32.gmra.mrb[0].mxu0 %v1338
        %v1340 = vpop.f32.mrb[0].mxu0
        %v1341 = vadd.f32 %v1124, %v1340
        %v1342 = vpop.f32.mrb[0].mxu0
        %1343 = vmatprep.mubr.f32.mxu0 0.0
        %v1344 = vand.u32 %v239, 4294901760
        %1345 = vmatmul.mubr.f32.gmra.mrb[0].mxu0 %v1344
        %v1346 = vpop.f32.mrb[0].mxu0
        %v1347 = vadd.f32 %v1132, %v1346
        %v1348 = vpop.f32.mrb[0].mxu0
        %1349 = vmatprep.mubr.f32.mxu0 0.0
        %v1350 = vand.u32 %v240, 4294901760
        %1351 = vmatmul.mubr.f32.gmra.mrb[0].mxu0 %v1350
        %v1352 = vpop.f32.mrb[0].mxu0
        %v1353 = vadd.f32 %v1140, %v1352
        %v1354 = vpop.f32.mrb[0].mxu0
        %1355 = vmatprep.mubr.f32.mxu0 0.0
        %v1356 = vand.u32 %v241, 4294901760
        %1357 = vmatmul.mubr.f32.gmra.mrb[0].mxu0 %v1356
        %v1358 = vpop.f32.mrb[0].mxu0
        %v1359 = vadd.f32 %v1148, %v1358
        %v1360 = vpop.f32.mrb[0].mxu0
        %1361 = vmatprep.mubr.f32.mxu0 0.0
        %v1362 = vand.u32 %v242, 4294901760
        %1363 = vmatmul.mubr.f32.gmra.mrb[0].mxu0 %v1362
        %v1364 = vpop.f32.mrb[0].mxu0
        %v1365 = vadd.f32 %v1156, %v1364
        %v1366 = vpop.f32.mrb[0].mxu0
        %1367 = vdwg.mxu0
        %1368 = vmatprep.subr.mxu0 0.0
        %v1369 = vand.u32 %v243, 4294901760
        %1370 = vmatpush1.msra.mxu0 %v1369
        %1371 = vmatprep.subr.mxu0 0.0
        %v1372 = vand.u32 %v244, 4294901760
        %1373 = vmatpush1.msra.mxu0 %v1372
        %1374 = vmatprep.subr.mxu0 0.0
        %v1375 = vand.u32 %v245, 4294901760
        %1376 = vmatpush1.msra.mxu0 %v1375
        %1377 = vmatprep.subr.mxu0 0.0
        %v1378 = vand.u32 %v246, 4294901760
        %1379 = vmatpush1.msra.mxu0 %v1378
        %1380 = vmatprep.subr.mxu0 0.0
        %v1381 = vand.u32 %v247, 4294901760
        %1382 = vmatpush1.msra.mxu0 %v1381
        %1383 = vmatprep.subr.mxu0 0.0
        %v1384 = vand.u32 %v248, 4294901760
        %1385 = vmatpush1.msra.mxu0 %v1384
        %1386 = vmatprep.subr.mxu0 0.0
        %v1387 = vand.u32 %v249, 4294901760
        %1388 = vmatpush1.msra.mxu0 %v1387
        %1389 = vmatprep.subr.mxu0 0.0
        %v1390 = vand.u32 %v250, 4294901760
        %1391 = vmatpush1.msra.mxu0 %v1390
        %1392 = vmatprep.subr.mxu0 0.0
        %v1393 = vand.u32 %v251, 4294901760
        %1394 = vmatpush1.msra.mxu0 %v1393
        %1395 = vmatprep.subr.mxu0 0.0
        %v1396 = vand.u32 %v252, 4294901760
        %1397 = vmatpush1.msra.mxu0 %v1396
        %1398 = vmatprep.subr.mxu0 0.0
        %v1399 = vand.u32 %v253, 4294901760
        %1400 = vmatpush1.msra.mxu0 %v1399
        %1401 = vmatprep.subr.mxu0 0.0
        %v1402 = vand.u32 %v254, 4294901760
        %1403 = vmatpush1.msra.mxu0 %v1402
        %1404 = vmatprep.subr.mxu0 0.0
        %v1405 = vand.u32 %v255, 4294901760
        %1406 = vmatpush1.msra.mxu0 %v1405
        %1407 = vmatprep.subr.mxu0 0.0
        %v1408 = vand.u32 %v256, 4294901760
        %1409 = vmatpush1.msra.mxu0 %v1408
        %1410 = vmatprep.subr.mxu0 0.0
        %v1411 = vand.u32 %v257, 4294901760
        %1412 = vmatpush1.msra.mxu0 %v1411
        %1413 = vmatprep.subr.mxu0 0.0
        %v1414 = vand.u32 %v258, 4294901760
        %1415 = vmatpush1.msra.mxu0 %v1414
        %1416 = vmatprep.subr.mxu0 0.0
        %1417 = vmatpush1.msra.mxu0 0.0
        %1418 = vmatprep.subr.mxu0 0.0
        %1419 = vmatpush1.msra.mxu0 0.0
        %1420 = vmatprep.subr.mxu0 0.0
        %1421 = vmatpush1.msra.mxu0 0.0
        %1422 = vmatprep.subr.mxu0 0.0
        %1423 = vmatpush1.msra.mxu0 0.0
        %1424 = vmatprep.subr.mxu0 0.0
        %1425 = vmatpush1.msra.mxu0 0.0
        %1426 = vmatprep.subr.mxu0 0.0
        %1427 = vmatpush1.msra.mxu0 0.0
        %1428 = vmatprep.subr.mxu0 0.0
        %1429 = vmatpush1.msra.mxu0 0.0
        %1430 = vmatprep.subr.mxu0 0.0
        %1431 = vmatpush1.msra.mxu0 0.0
        %1432 = vmatprep.subr.mxu0 0.0
        %1433 = vmatpush1.msra.mxu0 0.0
        %1434 = vmatprep.subr.mxu0 0.0
        %1435 = vmatpush1.msra.mxu0 0.0
        %1436 = vmatprep.subr.mxu0 0.0
        %1437 = vmatpush1.msra.mxu0 0.0
        %1438 = vmatprep.subr.mxu0 0.0
        %1439 = vmatpush1.msra.mxu0 0.0
        %1440 = vmatprep.subr.mxu0 0.0
        %1441 = vmatpush1.msra.mxu0 0.0
        %1442 = vmatprep.subr.mxu0 0.0
        %1443 = vmatpush1.msra.mxu0 0.0
        %1444 = vmatprep.subr.mxu0 0.0
        %1445 = vmatpush1.msra.mxu0 0.0
        %1446 = vmatprep.subr.mxu0 0.0
        %1447 = vmatpush1.msra.mxu0 0.0
        %1448 = vmatprep.mubr.f32.mxu0 0.0
        %v1449 = vand.u32 %v227, 4294901760
        %1450 = vmatmul.mubr.f32.gmra.mrb[0].mxu0 %v1449
        %v1451 = vpop.f32.mrb[0].mxu0
        %v1452 = vadd.f32 %v1275, %v1451
        %v1453 = vpop.f32.mrb[0].mxu0
        %1454 = vmatprep.mubr.f32.mxu0 0.0
        %v1455 = vand.u32 %v228, 4294901760
        %1456 = vmatmul.mubr.f32.gmra.mrb[0].mxu0 %v1455
        %v1457 = vpop.f32.mrb[0].mxu0
        %v1458 = vadd.f32 %v1281, %v1457
        %v1459 = vpop.f32.mrb[0].mxu0
        %1460 = vmatprep.mubr.f32.mxu0 0.0
        %v1461 = vand.u32 %v229, 4294901760
        %1462 = vmatmul.mubr.f32.gmra.mrb[0].mxu0 %v1461
        %v1463 = vpop.f32.mrb[0].mxu0
        %v1464 = vadd.f32 %v1287, %v1463
        %v1465 = vpop.f32.mrb[0].mxu0
        %1466 = vmatprep.mubr.f32.mxu0 0.0
        %v1467 = vand.u32 %v230, 4294901760
        %1468 = vmatmul.mubr.f32.gmra.mrb[0].mxu0 %v1467
        %v1469 = vpop.f32.mrb[0].mxu0
        %v1470 = vadd.f32 %v1293, %v1469
        %v1471 = vpop.f32.mrb[0].mxu0
        %1472 = vmatprep.mubr.f32.mxu0 0.0
        %v1473 = vand.u32 %v231, 4294901760
        %1474 = vmatmul.mubr.f32.gmra.mrb[0].mxu0 %v1473
        %v1475 = vpop.f32.mrb[0].mxu0
        %v1476 = vadd.f32 %v1299, %v1475
        %v1477 = vpop.f32.mrb[0].mxu0
        %1478 = vmatprep.mubr.f32.mxu0 0.0
        %v1479 = vand.u32 %v232, 4294901760
        %1480 = vmatmul.mubr.f32.gmra.mrb[0].mxu0 %v1479
        %v1481 = vpop.f32.mrb[0].mxu0
        %v1482 = vadd.f32 %v1305, %v1481
        %v1483 = vpop.f32.mrb[0].mxu0
        %1484 = vmatprep.mubr.f32.mxu0 0.0
        %v1485 = vand.u32 %v233, 4294901760
        %1486 = vmatmul.mubr.f32.gmra.mrb[0].mxu0 %v1485
        %v1487 = vpop.f32.mrb[0].mxu0
        %v1488 = vadd.f32 %v1311, %v1487
        %v1489 = vpop.f32.mrb[0].mxu0
        %1490 = vmatprep.mubr.f32.mxu0 0.0
        %v1491 = vand.u32 %v234, 4294901760
        %1492 = vmatmul.mubr.f32.gmra.mrb[0].mxu0 %v1491
        %v1493 = vpop.f32.mrb[0].mxu0
        %v1494 = vadd.f32 %v1317, %v1493
        %v1495 = vpop.f32.mrb[0].mxu0
        %1496 = vmatprep.mubr.f32.mxu0 0.0
        %v1497 = vand.u32 %v235, 4294901760
        %1498 = vmatmul.mubr.f32.gmra.mrb[0].mxu0 %v1497
        %v1499 = vpop.f32.mrb[0].mxu0
        %v1500 = vadd.f32 %v1323, %v1499
        %v1501 = vpop.f32.mrb[0].mxu0
        %1502 = vmatprep.mubr.f32.mxu0 0.0
        %v1503 = vand.u32 %v236, 4294901760
        %1504 = vmatmul.mubr.f32.gmra.mrb[0].mxu0 %v1503
        %v1505 = vpop.f32.mrb[0].mxu0
        %v1506 = vadd.f32 %v1329, %v1505
        %v1507 = vpop.f32.mrb[0].mxu0
        %1508 = vmatprep.mubr.f32.mxu0 0.0
        %v1509 = vand.u32 %v237, 4294901760
        %1510 = vmatmul.mubr.f32.gmra.mrb[0].mxu0 %v1509
        %v1511 = vpop.f32.mrb[0].mxu0
        %v1512 = vadd.f32 %v1335, %v1511
        %v1513 = vpop.f32.mrb[0].mxu0
        %1514 = vmatprep.mubr.f32.mxu0 0.0
        %v1515 = vand.u32 %v238, 4294901760
        %1516 = vmatmul.mubr.f32.gmra.mrb[0].mxu0 %v1515
        %v1517 = vpop.f32.mrb[0].mxu0
        %v1518 = vadd.f32 %v1341, %v1517
        %v1519 = vpop.f32.mrb[0].mxu0
        %1520 = vmatprep.mubr.f32.mxu0 0.0
        %v1521 = vand.u32 %v239, 4294901760
        %1522 = vmatmul.mubr.f32.gmra.mrb[0].mxu0 %v1521
        %v1523 = vpop.f32.mrb[0].mxu0
        %v1524 = vadd.f32 %v1347, %v1523
        %v1525 = vpop.f32.mrb[0].mxu0
        %1526 = vmatprep.mubr.f32.mxu0 0.0
        %v1527 = vand.u32 %v240, 4294901760
        %1528 = vmatmul.mubr.f32.gmra.mrb[0].mxu0 %v1527
        %v1529 = vpop.f32.mrb[0].mxu0
        %v1530 = vadd.f32 %v1353, %v1529
        %v1531 = vpop.f32.mrb[0].mxu0
        %1532 = vmatprep.mubr.f32.mxu0 0.0
        %v1533 = vand.u32 %v241, 4294901760
        %1534 = vmatmul.mubr.f32.gmra.mrb[0].mxu0 %v1533
        %v1535 = vpop.f32.mrb[0].mxu0
        %v1536 = vadd.f32 %v1359, %v1535
        %v1537 = vpop.f32.mrb[0].mxu0
        %1538 = vmatprep.mubr.f32.mxu0 0.0
        %v1539 = vand.u32 %v242, 4294901760
        %1540 = vmatmul.mubr.f32.gmra.mrb[0].mxu0 %v1539
        %v1541 = vpop.f32.mrb[0].mxu0
        %v1542 = vadd.f32 %v1365, %v1541
        %v1543 = vpop.f32.mrb[0].mxu0
        %1544 = vdwg.mxu0
        %1545 = vst [vmem:[%s137] sm:$0xff] %v1452
        %1546 = vst [vmem:[%s137 + $0x8] sm:$0xff] %v1458
        %1547 = vst [vmem:[%s137 + $0x10] sm:$0xff] %v1464
        %1548 = vst [vmem:[%s137 + $0x18] sm:$0xff] %v1470
        %1549 = vst [vmem:[%s137 + $0x20] sm:$0xff] %v1476
        %1550 = vst [vmem:[%s137 + $0x28] sm:$0xff] %v1482
        %1551 = vst [vmem:[%s137 + $0x30] sm:$0xff] %v1488
        %1552 = vst [vmem:[%s137 + $0x38] sm:$0xff] %v1494
        %1553 = vst [vmem:[%s137 + $0x40] sm:$0xff] %v1500
        %1554 = vst [vmem:[%s137 + $0x48] sm:$0xff] %v1506
        %1555 = vst [vmem:[%s137 + $0x50] sm:$0xff] %v1512
        %1556 = vst [vmem:[%s137 + $0x58] sm:$0xff] %v1518
        %1557 = vst [vmem:[%s137 + $0x60] sm:$0xff] %v1524
        %1558 = vst [vmem:[%s137 + $0x68] sm:$0xff] %v1530
        %1559 = vst [vmem:[%s137 + $0x70] sm:$0xff] %v1536
        %1560 = vst [vmem:[%s137 + $0x78] sm:$0xff] %v1542
        %s1561 = sand.u32 %s71, 1
        %s1562 = scalar_lea.sflag [#allocation3], %s1561
        %s1563 = sand.u32 %s71, 1
        %s1564 = smul.addr %s1563, 128
        %s1565 = scalar_lea.vmem [#allocation2], %s1564
        // Predicated region
        $region29: #{tpu_custom_call.1} parent=27 // pred_check
          %p1566 = pneg %p81
        $region30: #{tpu_custom_call.1} parent=27 // pred_check_branch
          %1568 = sbr.rel (%p1566) target = $region32
        $region31: #{tpu_custom_call.1} parent=27 // pred_region
          %s1569 = smul.u32 16, %s16
          %s1571 = ssub.s32 2048, 2048
          %1572 = vsyncadd %s1562, %s1571
          %s1573 = smul.addr %s1569, 128
          %s1574 = scalar_lea.hbm %s2, %s1573
          %s1575 = sshll.u32 %s1565, 4
          %s1576 = int_to_ptr.vmem [resolvable:$true] %s1575
          %1581 = dma.vmem_to_hbm [thread:$0]  %s1576, 2048, %s1574, %s1562, 128, 128, 8
        $region32: #{tpu_custom_call.1} parent=27 // pred_fallthru
          _
      $region28: #{tpu_custom_call.1} parent=5 // pred_fallthru
        _
      %p1582 = scmp.le.s32.totalorder 2, %s11
      // Predicated region
      $region33: #{tpu_custom_call.1} parent=5 // pred_check
        %p1583 = pneg %p1582
      $region34: #{tpu_custom_call.1} parent=5 // pred_check_branch
        %1585 = sbr.rel (%p1583) target = $region36
      $region35: #{tpu_custom_call.1} parent=5 // pred_region
        %s1586 = ssub.s32 %s11, 2
        // Predicated region
        $region37: #{tpu_custom_call.1} parent=35 // pred_check
          %p1587 = pneg %p87
        $region38: #{tpu_custom_call.1} parent=35 // pred_check_branch
          %1589 = sbr.rel (%p1587) target = $region40
        $region39: #{tpu_custom_call.1} parent=35 // pred_region
          %s1590 = sand.u32 %s72, 1
          %s1591 = scalar_lea.sflag [#allocation3], %s1590
          %s1592 = sand.u32 %s72, 1
          %s1593 = smul.addr %s1592, 128
          %s1594 = scalar_lea.vmem [#allocation2], %s1593
          %1595 = dma.done %s1591, 2048
        $region40: #{tpu_custom_call.1} parent=35 // pred_fallthru
          _
      $region36: #{tpu_custom_call.1} parent=5 // pred_fallthru
        _
    $region6: #{tpu_custom_call.1} parent=1 // loop_footer
      %s15 = sadd.s32 1, %s11
    $region7: #{tpu_custom_call.1} parent=1 // loop_footer_branch
      %10 = sbr.rel target = $region3
    $region8: #{tpu_custom_call.1} parent=1 // loop_exit
      _
    %1596 = vsyncpa [#allocation3], 1
    %s1597 = scalar_lea.sflag [#allocation3], 1
    %1598 = vsyncpa %s1597, 1

</llo_original>
